<compile_context>
chip_gen: v7x
topology: tpu7x:2x2x1
jax: 0.10.0
libtpu: 0.0.40
codegen_flags: <defaults>
</compile_context>

<pallas_src>
import functools

import numpy as np

import jax
import jax.numpy as jnp
from jax.experimental import pallas as pl
from jax.experimental.pallas import tpu as pltpu


# ----------------------------------------------------------------------------
# Host-side, one-time parameter repacking for the folded (H, W*C) layout
# ----------------------------------------------------------------------------
def _fold_conv3x3(w, W_img):
    """HWIO (3,3,C,C) conv weight -> (3, W*C, W*C) block-banded matrices.

    M[kh][wi*C + ci, wo*C + co] = w[kh, wi-wo+1, ci, co] for |wi-wo| <= 1,
    so `shifted_rows(x) @ M[kh]` performs the kh-th row of the 3x3 conv with
    'same' zero padding along W baked into the band structure.
    """
    wn = np.asarray(w, np.float32)
    C = wn.shape[2]
    WC = W_img * C
    M = np.zeros((3, WC, WC), np.float32)
    for kw in range(3):
        dw = kw - 1
        for wo in range(W_img):
            wi = wo + dw
            if 0 <= wi < W_img:
                M[:, wi * C:(wi + 1) * C, wo * C:(wo + 1) * C] = wn[:, kw]
    return M


def fold_params(params, W_img):
    """Repack ResidualGroup params so all per-channel math runs lane-dense."""
    blocks = params["blocks"]
    conv_ws, conv_bs = [], []
    for p in blocks:
        conv_ws += [p["w_a"], p["w_b"]]
        conv_bs += [p["b_a"], p["b_b"]]
    conv_ws.append(params["w_tail"])
    conv_bs.append(params["b_tail"])

    mw = np.concatenate([_fold_conv3x3(w, W_img) for w in conv_ws], axis=0)
    bias = np.stack([np.tile(np.asarray(b, np.float32), (1, W_img))
                     for b in conv_bs])
    caw1 = np.stack([np.tile(np.asarray(p["ca_w1"], np.float32), (W_img, 1))
                     for p in blocks])
    cab1 = np.stack([np.asarray(p["ca_b1"], np.float32) for p in blocks])
    caw2 = np.stack([np.tile(np.asarray(p["ca_w2"], np.float32), (1, W_img))
                     for p in blocks])
    cab2 = np.stack([np.tile(np.asarray(p["ca_b2"], np.float32), (1, W_img))
                     for p in blocks])
    return {
        "mw": jnp.asarray(mw),       # (3 * n_convs, W*C, W*C)
        "bias": jnp.asarray(bias),   # (n_convs, 1, W*C)
        "caw1": jnp.asarray(caw1),   # (nb, W*C, Cr)
        "cab1": jnp.asarray(cab1),   # (nb, 1, Cr)
        "caw2": jnp.asarray(caw2),   # (nb, Cr, W*C)
        "cab2": jnp.asarray(cab2),   # (nb, 1, W*C)
    }


# ----------------------------------------------------------------------------
# Fused ResidualGroup kernel (one grid step = one image, fully VMEM-resident)
# ----------------------------------------------------------------------------
def _residual_group_kernel(x_ref, mw_ref, bias_ref, caw1_ref, cab1_ref,
                           caw2_ref, cab2_ref, o_ref, *, H, W, nb):
    f32 = jnp.float32
    x0 = x_ref[0].astype(f32)                         # (H, W*C) group input
    inv_hw = 1.0 / float(H * W)

    # +/-1 row shift matrices (zero padded) built from iotas; the H shift runs
    # on the (otherwise idle) MXU so no cross-sublane relayouts are emitted.
    ri = jax.lax.broadcasted_iota(jnp.int32, (H, H), 0)
    ci = jax.lax.broadcasted_iota(jnp.int32, (H, H), 1)
    shift_dn = (ci == ri - 1).astype(f32)             # (Dn @ a)[h] = a[h-1]
    shift_up = (ci == ri + 1).astype(f32)             # (Du @ a)[h] = a[h+1]

    def conv3x3(a, idx):
        """'same' 3x3 conv in folded layout: 3 block-banded MXU matmuls."""
        a_dn = jnp.dot(shift_dn, a, preferred_element_type=f32)
        a_up = jnp.dot(shift_up, a, preferred_element_type=f32)
        acc = jnp.dot(a_dn, mw_ref[3 * idx + 0], preferred_element_type=f32)
        acc = acc + jnp.dot(a, mw_ref[3 * idx + 1], preferred_element_type=f32)
        acc = acc + jnp.dot(a_up, mw_ref[3 * idx + 2], preferred_element_type=f32)
        return acc + bias_ref[idx]                    # bias broadcast over H

    res = x0
    for b in range(nb):                               # RCAB blocks
        t = jnp.maximum(conv3x3(res, 2 * b), 0.0)     # conv -> ReLU
        t = conv3x3(t, 2 * b + 1)                     # conv
        # Channel attention: global avg pool -> 1x1 -> ReLU -> 1x1 -> sigmoid.
        pooled = jnp.sum(t, axis=0, keepdims=True) * inv_hw            # (1, W*C)
        z = jnp.dot(pooled, caw1_ref[b], preferred_element_type=f32) + cab1_ref[b]
        z = jnp.maximum(z, 0.0)                                        # (1, Cr)
        s = jnp.dot(z, caw2_ref[b], preferred_element_type=f32) + cab2_ref[b]
        scale = jax.nn.sigmoid(s)                                      # (1, W*C)
        res = t * scale + res                                          # CA gate + RCAB skip
    out = conv3x3(res, 2 * nb) + x0                                    # tail conv + group skip
    o_ref[0] = out.astype(o_ref.dtype)


def residual_group_forward(x, fp):
    """x: (N, H, W, C) NHWC float32; fp: folded params from fold_params."""
    N, H, W, C = x.shape
    WC = W * C
    nb = fp["caw1"].shape[0]
    xf = x.reshape(N, H, WC)                          # lane-dense (256 lanes)

    kernel = functools.partial(_residual_group_kernel, H=H, W=W, nb=nb)
    out = pl.pallas_call(
        kernel,
        out_shape=jax.ShapeDtypeStruct((N, H, WC), x.dtype),
        grid=(N,),
        in_specs=[
            pl.BlockSpec((1, H, WC), lambda n: (n, 0, 0)),
            pl.BlockSpec(fp["mw"].shape, lambda n: (0, 0, 0)),
            pl.BlockSpec(fp["bias"].shape, lambda n: (0, 0, 0)),
            pl.BlockSpec(fp["caw1"].shape, lambda n: (0, 0, 0)),
            pl.BlockSpec(fp["cab1"].shape, lambda n: (0, 0, 0)),
            pl.BlockSpec(fp["caw2"].shape, lambda n: (0, 0, 0)),
            pl.BlockSpec(fp["cab2"].shape, lambda n: (0, 0, 0)),
        ],
        out_specs=pl.BlockSpec((1, H, WC), lambda n: (n, 0, 0)),
        compiler_params=pltpu.CompilerParams(
            dimension_semantics=("parallel",)),       # feeds v7x's 2 TCs (N=2)
    )(xf, fp["mw"], fp["bias"], fp["caw1"], fp["cab1"], fp["caw2"], fp["cab2"])
    return out.reshape(N, H, W, C)


# ----------------------------------------------------------------------------
# Deterministic parameter init (PyTorch-Conv2d-style uniform bounds)
# ----------------------------------------------------------------------------
def _uinit(key, shape, fan_in):
    bound = 1.0 / (fan_in ** 0.5)
    return jax.random.uniform(key, shape, jnp.float32, -bound, bound)


def init_params(key, C, Cr, n_resblocks):
    n_keys = n_resblocks * 8 + 2
    keys = list(jax.random.split(key, n_keys))
    k_iter = iter(keys)
    blocks = []
    for _ in range(n_resblocks):
        blocks.append({
            "w_a": _uinit(next(k_iter), (3, 3, C, C), 9 * C),
            "b_a": _uinit(next(k_iter), (1, C), 9 * C),
            "w_b": _uinit(next(k_iter), (3, 3, C, C), 9 * C),
            "b_b": _uinit(next(k_iter), (1, C), 9 * C),
            "ca_w1": _uinit(next(k_iter), (C, Cr), C),
            "ca_b1": _uinit(next(k_iter), (1, Cr), C),
            "ca_w2": _uinit(next(k_iter), (Cr, C), Cr),
            "ca_b2": _uinit(next(k_iter), (1, C), Cr),
        })
    return {
        "blocks": blocks,
        "w_tail": _uinit(next(k_iter), (3, 3, C, C), 9 * C),
        "b_tail": _uinit(next(k_iter), (1, C), 9 * C),
    }


# ----------------------------------------------------------------------------
# Pure-JAX reference (numerical verification against the original math)
# ----------------------------------------------------------------------------
def _conv_ref(x, w, b):
    y = jax.lax.conv_general_dilated(
        x, w, window_strides=(1, 1), padding="SAME",
        dimension_numbers=("NHWC", "HWIO", "NHWC"))
    return y + b.reshape(1, 1, 1, -1)


def _ca_ref(r, w1, b1, w2, b2):
    y = jnp.mean(r, axis=(1, 2))                       # (N, C)
    h = jnp.maximum(y @ w1 + b1.reshape(1, -1), 0.0)
    s = jax.nn.sigmoid(h @ w2 + b2.reshape(1, -1))
    return r * s[:, None, None, :]


def _rcab_ref(x, p):
    h = jnp.maximum(_conv_ref(x, p["w_a"], p["b_a"]), 0.0)
    h = _conv_ref(h, p["w_b"], p["b_b"])
    return _ca_ref(h, p["ca_w1"], p["ca_b1"], p["ca_w2"], p["ca_b2"]) + x


def residual_group_ref(x, params):
    res = x
    for p in params["blocks"]:
        res = _rcab_ref(res, p)
    return _conv_ref(res, params["w_tail"], params["b_tail"]) + x


# ----------------------------------------------------------------------------
if __name__ == "__main__":
    # n_feat=16, reduction=4, kernel_size=3, n_resblocks=2, batch=2, spatial=16.
    N, C, H, W = 2, 16, 16, 16
    reduction = 4
    n_resblocks = 2

    key = jax.random.PRNGKey(0)
    kx, kp = jax.random.split(key)
    x = jax.random.normal(kx, (N, H, W, C), jnp.float32)   # NHWC
    params = init_params(kp, C, C // reduction, n_resblocks)
    fparams = fold_params(params, W)                       # one-time repack

    fwd = jax.jit(residual_group_forward)
    out = jax.block_until_ready(fwd(x, fparams))

    ref = residual_group_ref(x, params)
    assert out.shape == (N, H, W, C)
    max_err = float(jnp.max(jnp.abs(out - ref)))
    assert jnp.allclose(out, ref, rtol=1e-4, atol=1e-4), max_err

    print("KERNEL_OK")
</pallas_src>

<mosaic_0001>
module attributes {stable_mosaic.version = 11 : i64} {
  func.func @_residual_group_kernel(%arg0: i32, %arg1: memref<1x16x256xf32, #tpu.memory_space<vmem>>, %arg2: memref<15x256x256xf32, #tpu.memory_space<vmem>>, %arg3: memref<5x1x256xf32, #tpu.memory_space<vmem>>, %arg4: memref<2x256x4xf32, #tpu.memory_space<vmem>>, %arg5: memref<2x1x4xf32, #tpu.memory_space<vmem>>, %arg6: memref<2x4x256xf32, #tpu.memory_space<vmem>>, %arg7: memref<2x1x256xf32, #tpu.memory_space<vmem>>, %arg8: memref<1x16x256xf32, #tpu.memory_space<vmem>>) attributes {dimension_semantics = [#tpu.dimension_semantics<parallel>], iteration_bounds = array<i64: 2>, scalar_prefetch = 0 : i64, scratch_operands = 0 : i64, tpu.core_type = #tpu.core_type<tc>, window_params = [{transform_indices = @transform_0, window_bounds = array<i64: 1, 16, 256>}, {pipeline_mode = #tpu.pipeline_mode<synchronous>, transform_indices = @transform_1, window_bounds = array<i64: 15, 256, 256>}, {pipeline_mode = #tpu.pipeline_mode<synchronous>, transform_indices = @transform_2, window_bounds = array<i64: 5, 1, 256>}, {pipeline_mode = #tpu.pipeline_mode<synchronous>, transform_indices = @transform_3, window_bounds = array<i64: 2, 256, 4>}, {pipeline_mode = #tpu.pipeline_mode<synchronous>, transform_indices = @transform_4, window_bounds = array<i64: 2, 1, 4>}, {pipeline_mode = #tpu.pipeline_mode<synchronous>, transform_indices = @transform_5, window_bounds = array<i64: 2, 4, 256>}, {pipeline_mode = #tpu.pipeline_mode<synchronous>, transform_indices = @transform_6, window_bounds = array<i64: 2, 1, 256>}, {transform_indices = @transform_7, window_bounds = array<i64: 1, 16, 256>}]} {
    %c0 = arith.constant 0 : index
    %c0_0 = arith.constant 0 : index
    %c0_1 = arith.constant 0 : index
    %0 = vector.load %arg1[%c0, %c0_0, %c0_1] : memref<1x16x256xf32, #tpu.memory_space<vmem>>, vector<1x16x256xf32>
    %1 = vector.shape_cast %0 : vector<1x16x256xf32> to vector<16x256xf32>
    %2 = tpu.iota {dimensions = array<i32: 0>} : vector<16x16xi32>
    %3 = tpu.iota {dimensions = array<i32: 1>} : vector<16x16xi32>
    %c1_i32 = arith.constant 1 : i32
    %4 = vector.broadcast %c1_i32 : i32 to vector<16x16xi32>
    %5 = arith.subi %2, %4 : vector<16x16xi32>
    %6 = arith.cmpi eq, %3, %5 : vector<16x16xi32>
    %7 = arith.extui %6 : vector<16x16xi1> to vector<16x16xi32>
    %8 = arith.sitofp %7 : vector<16x16xi32> to vector<16x16xf32>
    %c1_i32_2 = arith.constant 1 : i32
    %9 = vector.broadcast %c1_i32_2 : i32 to vector<16x16xi32>
    %10 = arith.addi %2, %9 : vector<16x16xi32>
    %11 = arith.cmpi eq, %3, %10 : vector<16x16xi32>
    %12 = arith.extui %11 : vector<16x16xi1> to vector<16x16xi32>
    %13 = arith.sitofp %12 : vector<16x16xi32> to vector<16x16xf32>
    %cst = arith.constant dense<0.000000e+00> : vector<16x256xf32>
    %14 = tpu.matmul %8, %1, %cst {dimension_numbers = #tpu.dot_dimension_numbers<[1], [0], [0], [1], [0, 0, 1, 1], [], []>} : vector<16x16xf32>, vector<16x256xf32>, vector<16x256xf32> -> vector<16x256xf32>
    %cst_3 = arith.constant dense<0.000000e+00> : vector<16x256xf32>
    %15 = tpu.matmul %13, %1, %cst_3 {dimension_numbers = #tpu.dot_dimension_numbers<[1], [0], [0], [1], [0, 0, 1, 1], [], []>} : vector<16x16xf32>, vector<16x256xf32>, vector<16x256xf32> -> vector<16x256xf32>
    %c0_4 = arith.constant 0 : index
    %c0_5 = arith.constant 0 : index
    %c0_6 = arith.constant 0 : index
    %16 = vector.load %arg2[%c0_4, %c0_5, %c0_6] : memref<15x256x256xf32, #tpu.memory_space<vmem>>, vector<1x256x256xf32>
    %17 = vector.shape_cast %16 : vector<1x256x256xf32> to vector<256x256xf32>
    %cst_7 = arith.constant dense<0.000000e+00> : vector<16x256xf32>
    %18 = tpu.matmul %14, %17, %cst_7 {dimension_numbers = #tpu.dot_dimension_numbers<[1], [0], [0], [1], [0, 0, 1, 1], [], []>} : vector<16x256xf32>, vector<256x256xf32>, vector<16x256xf32> -> vector<16x256xf32>
    %c1 = arith.constant 1 : index
    %c0_8 = arith.constant 0 : index
    %c0_9 = arith.constant 0 : index
    %19 = vector.load %arg2[%c1, %c0_8, %c0_9] : memref<15x256x256xf32, #tpu.memory_space<vmem>>, vector<1x256x256xf32>
    %20 = vector.shape_cast %19 : vector<1x256x256xf32> to vector<256x256xf32>
    %cst_10 = arith.constant dense<0.000000e+00> : vector<16x256xf32>
    %21 = tpu.matmul %1, %20, %cst_10 {dimension_numbers = #tpu.dot_dimension_numbers<[1], [0], [0], [1], [0, 0, 1, 1], [], []>} : vector<16x256xf32>, vector<256x256xf32>, vector<16x256xf32> -> vector<16x256xf32>
    %22 = arith.addf %18, %21 : vector<16x256xf32>
    %c2 = arith.constant 2 : index
    %c0_11 = arith.constant 0 : index
    %c0_12 = arith.constant 0 : index
    %23 = vector.load %arg2[%c2, %c0_11, %c0_12] : memref<15x256x256xf32, #tpu.memory_space<vmem>>, vector<1x256x256xf32>
    %24 = vector.shape_cast %23 : vector<1x256x256xf32> to vector<256x256xf32>
    %cst_13 = arith.constant dense<0.000000e+00> : vector<16x256xf32>
    %25 = tpu.matmul %15, %24, %cst_13 {dimension_numbers = #tpu.dot_dimension_numbers<[1], [0], [0], [1], [0, 0, 1, 1], [], []>} : vector<16x256xf32>, vector<256x256xf32>, vector<16x256xf32> -> vector<16x256xf32>
    %26 = arith.addf %22, %25 : vector<16x256xf32>
    %c0_14 = arith.constant 0 : index
    %c0_15 = arith.constant 0 : index
    %c0_16 = arith.constant 0 : index
    %27 = vector.load %arg3[%c0_14, %c0_15, %c0_16] : memref<5x1x256xf32, #tpu.memory_space<vmem>>, vector<1x1x256xf32>
    %28 = vector.shape_cast %27 : vector<1x1x256xf32> to vector<1x256xf32>
    %29 = vector.broadcast %28 : vector<1x256xf32> to vector<16x256xf32>
    %30 = arith.addf %26, %29 : vector<16x256xf32>
    %cst_17 = arith.constant 0.000000e+00 : f32
    %31 = vector.broadcast %cst_17 : f32 to vector<16x256xf32>
    %32 = arith.maximumf %30, %31 : vector<16x256xf32>
    %cst_18 = arith.constant dense<0.000000e+00> : vector<16x256xf32>
    %33 = tpu.matmul %8, %32, %cst_18 {dimension_numbers = #tpu.dot_dimension_numbers<[1], [0], [0], [1], [0, 0, 1, 1], [], []>} : vector<16x16xf32>, vector<16x256xf32>, vector<16x256xf32> -> vector<16x256xf32>
    %cst_19 = arith.constant dense<0.000000e+00> : vector<16x256xf32>
    %34 = tpu.matmul %13, %32, %cst_19 {dimension_numbers = #tpu.dot_dimension_numbers<[1], [0], [0], [1], [0, 0, 1, 1], [], []>} : vector<16x16xf32>, vector<16x256xf32>, vector<16x256xf32> -> vector<16x256xf32>
    %c3 = arith.constant 3 : index
    %c0_20 = arith.constant 0 : index
    %c0_21 = arith.constant 0 : index
    %35 = vector.load %arg2[%c3, %c0_20, %c0_21] : memref<15x256x256xf32, #tpu.memory_space<vmem>>, vector<1x256x256xf32>
    %36 = vector.shape_cast %35 : vector<1x256x256xf32> to vector<256x256xf32>
    %cst_22 = arith.constant dense<0.000000e+00> : vector<16x256xf32>
    %37 = tpu.matmul %33, %36, %cst_22 {dimension_numbers = #tpu.dot_dimension_numbers<[1], [0], [0], [1], [0, 0, 1, 1], [], []>} : vector<16x256xf32>, vector<256x256xf32>, vector<16x256xf32> -> vector<16x256xf32>
    %c4 = arith.constant 4 : index
    %c0_23 = arith.constant 0 : index
    %c0_24 = arith.constant 0 : index
    %38 = vector.load %arg2[%c4, %c0_23, %c0_24] : memref<15x256x256xf32, #tpu.memory_space<vmem>>, vector<1x256x256xf32>
    %39 = vector.shape_cast %38 : vector<1x256x256xf32> to vector<256x256xf32>
    %cst_25 = arith.constant dense<0.000000e+00> : vector<16x256xf32>
    %40 = tpu.matmul %32, %39, %cst_25 {dimension_numbers = #tpu.dot_dimension_numbers<[1], [0], [0], [1], [0, 0, 1, 1], [], []>} : vector<16x256xf32>, vector<256x256xf32>, vector<16x256xf32> -> vector<16x256xf32>
    %41 = arith.addf %37, %40 : vector<16x256xf32>
    %c5 = arith.constant 5 : index
    %c0_26 = arith.constant 0 : index
    %c0_27 = arith.constant 0 : index
    %42 = vector.load %arg2[%c5, %c0_26, %c0_27] : memref<15x256x256xf32, #tpu.memory_space<vmem>>, vector<1x256x256xf32>
    %43 = vector.shape_cast %42 : vector<1x256x256xf32> to vector<256x256xf32>
    %cst_28 = arith.constant dense<0.000000e+00> : vector<16x256xf32>
    %44 = tpu.matmul %34, %43, %cst_28 {dimension_numbers = #tpu.dot_dimension_numbers<[1], [0], [0], [1], [0, 0, 1, 1], [], []>} : vector<16x256xf32>, vector<256x256xf32>, vector<16x256xf32> -> vector<16x256xf32>
    %45 = arith.addf %41, %44 : vector<16x256xf32>
    %c1_29 = arith.constant 1 : index
    %c0_30 = arith.constant 0 : index
    %c0_31 = arith.constant 0 : index
    %46 = vector.load %arg3[%c1_29, %c0_30, %c0_31] : memref<5x1x256xf32, #tpu.memory_space<vmem>>, vector<1x1x256xf32>
    %47 = vector.shape_cast %46 : vector<1x1x256xf32> to vector<1x256xf32>
    %48 = vector.broadcast %47 : vector<1x256xf32> to vector<16x256xf32>
    %49 = arith.addf %45, %48 : vector<16x256xf32>
    %cst_32 = arith.constant dense<0.000000e+00> : vector<256xf32>
    %50 = vector.multi_reduction <add>, %49, %cst_32 [0] : vector<16x256xf32> to vector<256xf32>
    %51 = vector.shape_cast %50 : vector<256xf32> to vector<1x256xf32>
    %cst_33 = arith.constant 3.906250e-03 : f32
    %52 = vector.broadcast %cst_33 : f32 to vector<1x256xf32>
    %53 = arith.mulf %51, %52 : vector<1x256xf32>
    %c0_34 = arith.constant 0 : index
    %c0_35 = arith.constant 0 : index
    %c0_36 = arith.constant 0 : index
    %54 = vector.load %arg4[%c0_34, %c0_35, %c0_36] : memref<2x256x4xf32, #tpu.memory_space<vmem>>, vector<1x256x4xf32>
    %55 = vector.shape_cast %54 : vector<1x256x4xf32> to vector<256x4xf32>
    %cst_37 = arith.constant dense<0.000000e+00> : vector<1x4xf32>
    %56 = tpu.matmul %53, %55, %cst_37 {dimension_numbers = #tpu.dot_dimension_numbers<[1], [0], [0], [1], [0, 0, 1, 1], [], []>} : vector<1x256xf32>, vector<256x4xf32>, vector<1x4xf32> -> vector<1x4xf32>
    %c0_38 = arith.constant 0 : index
    %c0_39 = arith.constant 0 : index
    %c0_40 = arith.constant 0 : index
    %57 = vector.load %arg5[%c0_38, %c0_39, %c0_40] : memref<2x1x4xf32, #tpu.memory_space<vmem>>, vector<1x1x4xf32>
    %58 = vector.shape_cast %57 : vector<1x1x4xf32> to vector<1x4xf32>
    %59 = arith.addf %56, %58 : vector<1x4xf32>
    %cst_41 = arith.constant 0.000000e+00 : f32
    %60 = vector.broadcast %cst_41 : f32 to vector<1x4xf32>
    %61 = arith.maximumf %59, %60 : vector<1x4xf32>
    %c0_42 = arith.constant 0 : index
    %c0_43 = arith.constant 0 : index
    %c0_44 = arith.constant 0 : index
    %62 = vector.load %arg6[%c0_42, %c0_43, %c0_44] : memref<2x4x256xf32, #tpu.memory_space<vmem>>, vector<1x4x256xf32>
    %63 = vector.shape_cast %62 : vector<1x4x256xf32> to vector<4x256xf32>
    %cst_45 = arith.constant dense<0.000000e+00> : vector<1x256xf32>
    %64 = tpu.matmul %61, %63, %cst_45 {dimension_numbers = #tpu.dot_dimension_numbers<[1], [0], [0], [1], [0, 0, 1, 1], [], []>} : vector<1x4xf32>, vector<4x256xf32>, vector<1x256xf32> -> vector<1x256xf32>
    %c0_46 = arith.constant 0 : index
    %c0_47 = arith.constant 0 : index
    %c0_48 = arith.constant 0 : index
    %65 = vector.load %arg7[%c0_46, %c0_47, %c0_48] : memref<2x1x256xf32, #tpu.memory_space<vmem>>, vector<1x1x256xf32>
    %66 = vector.shape_cast %65 : vector<1x1x256xf32> to vector<1x256xf32>
    %67 = arith.addf %64, %66 : vector<1x256xf32>
    %68 = arith.negf %67 : vector<1x256xf32>
    %69 = math.exp %68 : vector<1x256xf32>
    %cst_49 = arith.constant 1.000000e+00 : f32
    %70 = vector.broadcast %cst_49 : f32 to vector<1x256xf32>
    %71 = arith.addf %70, %69 : vector<1x256xf32>
    %72 = arith.divf %70, %71 : vector<1x256xf32>
    %73 = vector.broadcast %72 : vector<1x256xf32> to vector<16x256xf32>
    %74 = arith.mulf %49, %73 : vector<16x256xf32>
    %75 = arith.addf %74, %1 : vector<16x256xf32>
    %cst_50 = arith.constant dense<0.000000e+00> : vector<16x256xf32>
    %76 = tpu.matmul %8, %75, %cst_50 {dimension_numbers = #tpu.dot_dimension_numbers<[1], [0], [0], [1], [0, 0, 1, 1], [], []>} : vector<16x16xf32>, vector<16x256xf32>, vector<16x256xf32> -> vector<16x256xf32>
    %cst_51 = arith.constant dense<0.000000e+00> : vector<16x256xf32>
    %77 = tpu.matmul %13, %75, %cst_51 {dimension_numbers = #tpu.dot_dimension_numbers<[1], [0], [0], [1], [0, 0, 1, 1], [], []>} : vector<16x16xf32>, vector<16x256xf32>, vector<16x256xf32> -> vector<16x256xf32>
    %c6 = arith.constant 6 : index
    %c0_52 = arith.constant 0 : index
    %c0_53 = arith.constant 0 : index
    %78 = vector.load %arg2[%c6, %c0_52, %c0_53] : memref<15x256x256xf32, #tpu.memory_space<vmem>>, vector<1x256x256xf32>
    %79 = vector.shape_cast %78 : vector<1x256x256xf32> to vector<256x256xf32>
    %cst_54 = arith.constant dense<0.000000e+00> : vector<16x256xf32>
    %80 = tpu.matmul %76, %79, %cst_54 {dimension_numbers = #tpu.dot_dimension_numbers<[1], [0], [0], [1], [0, 0, 1, 1], [], []>} : vector<16x256xf32>, vector<256x256xf32>, vector<16x256xf32> -> vector<16x256xf32>
    %c7 = arith.constant 7 : index
    %c0_55 = arith.constant 0 : index
    %c0_56 = arith.constant 0 : index
    %81 = vector.load %arg2[%c7, %c0_55, %c0_56] : memref<15x256x256xf32, #tpu.memory_space<vmem>>, vector<1x256x256xf32>
    %82 = vector.shape_cast %81 : vector<1x256x256xf32> to vector<256x256xf32>
    %cst_57 = arith.constant dense<0.000000e+00> : vector<16x256xf32>
    %83 = tpu.matmul %75, %82, %cst_57 {dimension_numbers = #tpu.dot_dimension_numbers<[1], [0], [0], [1], [0, 0, 1, 1], [], []>} : vector<16x256xf32>, vector<256x256xf32>, vector<16x256xf32> -> vector<16x256xf32>
    %84 = arith.addf %80, %83 : vector<16x256xf32>
    %c8 = arith.constant 8 : index
    %c0_58 = arith.constant 0 : index
    %c0_59 = arith.constant 0 : index
    %85 = vector.load %arg2[%c8, %c0_58, %c0_59] : memref<15x256x256xf32, #tpu.memory_space<vmem>>, vector<1x256x256xf32>
    %86 = vector.shape_cast %85 : vector<1x256x256xf32> to vector<256x256xf32>
    %cst_60 = arith.constant dense<0.000000e+00> : vector<16x256xf32>
    %87 = tpu.matmul %77, %86, %cst_60 {dimension_numbers = #tpu.dot_dimension_numbers<[1], [0], [0], [1], [0, 0, 1, 1], [], []>} : vector<16x256xf32>, vector<256x256xf32>, vector<16x256xf32> -> vector<16x256xf32>
    %88 = arith.addf %84, %87 : vector<16x256xf32>
    %c2_61 = arith.constant 2 : index
    %c0_62 = arith.constant 0 : index
    %c0_63 = arith.constant 0 : index
    %89 = vector.load %arg3[%c2_61, %c0_62, %c0_63] : memref<5x1x256xf32, #tpu.memory_space<vmem>>, vector<1x1x256xf32>
    %90 = vector.shape_cast %89 : vector<1x1x256xf32> to vector<1x256xf32>
    %91 = vector.broadcast %90 : vector<1x256xf32> to vector<16x256xf32>
    %92 = arith.addf %88, %91 : vector<16x256xf32>
    %cst_64 = arith.constant 0.000000e+00 : f32
    %93 = vector.broadcast %cst_64 : f32 to vector<16x256xf32>
    %94 = arith.maximumf %92, %93 : vector<16x256xf32>
    %cst_65 = arith.constant dense<0.000000e+00> : vector<16x256xf32>
    %95 = tpu.matmul %8, %94, %cst_65 {dimension_numbers = #tpu.dot_dimension_numbers<[1], [0], [0], [1], [0, 0, 1, 1], [], []>} : vector<16x16xf32>, vector<16x256xf32>, vector<16x256xf32> -> vector<16x256xf32>
    %cst_66 = arith.constant dense<0.000000e+00> : vector<16x256xf32>
    %96 = tpu.matmul %13, %94, %cst_66 {dimension_numbers = #tpu.dot_dimension_numbers<[1], [0], [0], [1], [0, 0, 1, 1], [], []>} : vector<16x16xf32>, vector<16x256xf32>, vector<16x256xf32> -> vector<16x256xf32>
    %c9 = arith.constant 9 : index
    %c0_67 = arith.constant 0 : index
    %c0_68 = arith.constant 0 : index
    %97 = vector.load %arg2[%c9, %c0_67, %c0_68] : memref<15x256x256xf32, #tpu.memory_space<vmem>>, vector<1x256x256xf32>
    %98 = vector.shape_cast %97 : vector<1x256x256xf32> to vector<256x256xf32>
    %cst_69 = arith.constant dense<0.000000e+00> : vector<16x256xf32>
    %99 = tpu.matmul %95, %98, %cst_69 {dimension_numbers = #tpu.dot_dimension_numbers<[1], [0], [0], [1], [0, 0, 1, 1], [], []>} : vector<16x256xf32>, vector<256x256xf32>, vector<16x256xf32> -> vector<16x256xf32>
    %c10 = arith.constant 10 : index
    %c0_70 = arith.constant 0 : index
    %c0_71 = arith.constant 0 : index
    %100 = vector.load %arg2[%c10, %c0_70, %c0_71] : memref<15x256x256xf32, #tpu.memory_space<vmem>>, vector<1x256x256xf32>
    %101 = vector.shape_cast %100 : vector<1x256x256xf32> to vector<256x256xf32>
    %cst_72 = arith.constant dense<0.000000e+00> : vector<16x256xf32>
    %102 = tpu.matmul %94, %101, %cst_72 {dimension_numbers = #tpu.dot_dimension_numbers<[1], [0], [0], [1], [0, 0, 1, 1], [], []>} : vector<16x256xf32>, vector<256x256xf32>, vector<16x256xf32> -> vector<16x256xf32>
    %103 = arith.addf %99, %102 : vector<16x256xf32>
    %c11 = arith.constant 11 : index
    %c0_73 = arith.constant 0 : index
    %c0_74 = arith.constant 0 : index
    %104 = vector.load %arg2[%c11, %c0_73, %c0_74] : memref<15x256x256xf32, #tpu.memory_space<vmem>>, vector<1x256x256xf32>
    %105 = vector.shape_cast %104 : vector<1x256x256xf32> to vector<256x256xf32>
    %cst_75 = arith.constant dense<0.000000e+00> : vector<16x256xf32>
    %106 = tpu.matmul %96, %105, %cst_75 {dimension_numbers = #tpu.dot_dimension_numbers<[1], [0], [0], [1], [0, 0, 1, 1], [], []>} : vector<16x256xf32>, vector<256x256xf32>, vector<16x256xf32> -> vector<16x256xf32>
    %107 = arith.addf %103, %106 : vector<16x256xf32>
    %c3_76 = arith.constant 3 : index
    %c0_77 = arith.constant 0 : index
    %c0_78 = arith.constant 0 : index
    %108 = vector.load %arg3[%c3_76, %c0_77, %c0_78] : memref<5x1x256xf32, #tpu.memory_space<vmem>>, vector<1x1x256xf32>
    %109 = vector.shape_cast %108 : vector<1x1x256xf32> to vector<1x256xf32>
    %110 = vector.broadcast %109 : vector<1x256xf32> to vector<16x256xf32>
    %111 = arith.addf %107, %110 : vector<16x256xf32>
    %cst_79 = arith.constant dense<0.000000e+00> : vector<256xf32>
    %112 = vector.multi_reduction <add>, %111, %cst_79 [0] : vector<16x256xf32> to vector<256xf32>
    %113 = vector.shape_cast %112 : vector<256xf32> to vector<1x256xf32>
    %cst_80 = arith.constant 3.906250e-03 : f32
    %114 = vector.broadcast %cst_80 : f32 to vector<1x256xf32>
    %115 = arith.mulf %113, %114 : vector<1x256xf32>
    %c1_81 = arith.constant 1 : index
    %c0_82 = arith.constant 0 : index
    %c0_83 = arith.constant 0 : index
    %116 = vector.load %arg4[%c1_81, %c0_82, %c0_83] : memref<2x256x4xf32, #tpu.memory_space<vmem>>, vector<1x256x4xf32>
    %117 = vector.shape_cast %116 : vector<1x256x4xf32> to vector<256x4xf32>
    %cst_84 = arith.constant dense<0.000000e+00> : vector<1x4xf32>
    %118 = tpu.matmul %115, %117, %cst_84 {dimension_numbers = #tpu.dot_dimension_numbers<[1], [0], [0], [1], [0, 0, 1, 1], [], []>} : vector<1x256xf32>, vector<256x4xf32>, vector<1x4xf32> -> vector<1x4xf32>
    %c1_85 = arith.constant 1 : index
    %c0_86 = arith.constant 0 : index
    %c0_87 = arith.constant 0 : index
    %119 = vector.load %arg5[%c1_85, %c0_86, %c0_87] : memref<2x1x4xf32, #tpu.memory_space<vmem>>, vector<1x1x4xf32>
    %120 = vector.shape_cast %119 : vector<1x1x4xf32> to vector<1x4xf32>
    %121 = arith.addf %118, %120 : vector<1x4xf32>
    %cst_88 = arith.constant 0.000000e+00 : f32
    %122 = vector.broadcast %cst_88 : f32 to vector<1x4xf32>
    %123 = arith.maximumf %121, %122 : vector<1x4xf32>
    %c1_89 = arith.constant 1 : index
    %c0_90 = arith.constant 0 : index
    %c0_91 = arith.constant 0 : index
    %124 = vector.load %arg6[%c1_89, %c0_90, %c0_91] : memref<2x4x256xf32, #tpu.memory_space<vmem>>, vector<1x4x256xf32>
    %125 = vector.shape_cast %124 : vector<1x4x256xf32> to vector<4x256xf32>
    %cst_92 = arith.constant dense<0.000000e+00> : vector<1x256xf32>
    %126 = tpu.matmul %123, %125, %cst_92 {dimension_numbers = #tpu.dot_dimension_numbers<[1], [0], [0], [1], [0, 0, 1, 1], [], []>} : vector<1x4xf32>, vector<4x256xf32>, vector<1x256xf32> -> vector<1x256xf32>
    %c1_93 = arith.constant 1 : index
    %c0_94 = arith.constant 0 : index
    %c0_95 = arith.constant 0 : index
    %127 = vector.load %arg7[%c1_93, %c0_94, %c0_95] : memref<2x1x256xf32, #tpu.memory_space<vmem>>, vector<1x1x256xf32>
    %128 = vector.shape_cast %127 : vector<1x1x256xf32> to vector<1x256xf32>
    %129 = arith.addf %126, %128 : vector<1x256xf32>
    %130 = arith.negf %129 : vector<1x256xf32>
    %131 = math.exp %130 : vector<1x256xf32>
    %cst_96 = arith.constant 1.000000e+00 : f32
    %132 = vector.broadcast %cst_96 : f32 to vector<1x256xf32>
    %133 = arith.addf %132, %131 : vector<1x256xf32>
    %134 = arith.divf %132, %133 : vector<1x256xf32>
    %135 = vector.broadcast %134 : vector<1x256xf32> to vector<16x256xf32>
    %136 = arith.mulf %111, %135 : vector<16x256xf32>
    %137 = arith.addf %136, %75 : vector<16x256xf32>
    %cst_97 = arith.constant dense<0.000000e+00> : vector<16x256xf32>
    %138 = tpu.matmul %8, %137, %cst_97 {dimension_numbers = #tpu.dot_dimension_numbers<[1], [0], [0], [1], [0, 0, 1, 1], [], []>} : vector<16x16xf32>, vector<16x256xf32>, vector<16x256xf32> -> vector<16x256xf32>
    %cst_98 = arith.constant dense<0.000000e+00> : vector<16x256xf32>
    %139 = tpu.matmul %13, %137, %cst_98 {dimension_numbers = #tpu.dot_dimension_numbers<[1], [0], [0], [1], [0, 0, 1, 1], [], []>} : vector<16x16xf32>, vector<16x256xf32>, vector<16x256xf32> -> vector<16x256xf32>
    %c12 = arith.constant 12 : index
    %c0_99 = arith.constant 0 : index
    %c0_100 = arith.constant 0 : index
    %140 = vector.load %arg2[%c12, %c0_99, %c0_100] : memref<15x256x256xf32, #tpu.memory_space<vmem>>, vector<1x256x256xf32>
    %141 = vector.shape_cast %140 : vector<1x256x256xf32> to vector<256x256xf32>
    %cst_101 = arith.constant dense<0.000000e+00> : vector<16x256xf32>
    %142 = tpu.matmul %138, %141, %cst_101 {dimension_numbers = #tpu.dot_dimension_numbers<[1], [0], [0], [1], [0, 0, 1, 1], [], []>} : vector<16x256xf32>, vector<256x256xf32>, vector<16x256xf32> -> vector<16x256xf32>
    %c13 = arith.constant 13 : index
    %c0_102 = arith.constant 0 : index
    %c0_103 = arith.constant 0 : index
    %143 = vector.load %arg2[%c13, %c0_102, %c0_103] : memref<15x256x256xf32, #tpu.memory_space<vmem>>, vector<1x256x256xf32>
    %144 = vector.shape_cast %143 : vector<1x256x256xf32> to vector<256x256xf32>
    %cst_104 = arith.constant dense<0.000000e+00> : vector<16x256xf32>
    %145 = tpu.matmul %137, %144, %cst_104 {dimension_numbers = #tpu.dot_dimension_numbers<[1], [0], [0], [1], [0, 0, 1, 1], [], []>} : vector<16x256xf32>, vector<256x256xf32>, vector<16x256xf32> -> vector<16x256xf32>
    %146 = arith.addf %142, %145 : vector<16x256xf32>
    %c14 = arith.constant 14 : index
    %c0_105 = arith.constant 0 : index
    %c0_106 = arith.constant 0 : index
    %147 = vector.load %arg2[%c14, %c0_105, %c0_106] : memref<15x256x256xf32, #tpu.memory_space<vmem>>, vector<1x256x256xf32>
    %148 = vector.shape_cast %147 : vector<1x256x256xf32> to vector<256x256xf32>
    %cst_107 = arith.constant dense<0.000000e+00> : vector<16x256xf32>
    %149 = tpu.matmul %139, %148, %cst_107 {dimension_numbers = #tpu.dot_dimension_numbers<[1], [0], [0], [1], [0, 0, 1, 1], [], []>} : vector<16x256xf32>, vector<256x256xf32>, vector<16x256xf32> -> vector<16x256xf32>
    %150 = arith.addf %146, %149 : vector<16x256xf32>
    %c4_108 = arith.constant 4 : index
    %c0_109 = arith.constant 0 : index
    %c0_110 = arith.constant 0 : index
    %151 = vector.load %arg3[%c4_108, %c0_109, %c0_110] : memref<5x1x256xf32, #tpu.memory_space<vmem>>, vector<1x1x256xf32>
    %152 = vector.shape_cast %151 : vector<1x1x256xf32> to vector<1x256xf32>
    %153 = vector.broadcast %152 : vector<1x256xf32> to vector<16x256xf32>
    %154 = arith.addf %150, %153 : vector<16x256xf32>
    %155 = arith.addf %154, %1 : vector<16x256xf32>
    %c0_111 = arith.constant 0 : index
    %c0_112 = arith.constant 0 : index
    %c0_113 = arith.constant 0 : index
    %156 = vector.load %arg8[%c0_111, %c0_112, %c0_113] : memref<1x16x256xf32, #tpu.memory_space<vmem>>, vector<1x16x256xf32>
    %157 = vector.shape_cast %156 : vector<1x16x256xf32> to vector<16x256xf32>
    %158 = vector.shape_cast %155 : vector<16x256xf32> to vector<1x16x256xf32>
    tpu.vector_store %arg8[%c0_111, %c0_112, %c0_113], %158 {strides = array<i32>} : memref<1x16x256xf32, #tpu.memory_space<vmem>>, vector<1x16x256xf32>,
    return
  }
  func.func @transform_0(%arg0: i32) -> (i32, i32, i32) {
    %c0_i32 = arith.constant 0 : i32
    %c0_i32_0 = arith.constant 0 : i32
    %c0_i32_1 = arith.constant 0 : i32
    return %arg0, %c0_i32, %c0_i32_0 : i32, i32, i32
  }
  func.func @transform_1(%arg0: i32) -> (i32, i32, i32) {
    %c0_i32 = arith.constant 0 : i32
    %c0_i32_0 = arith.constant 0 : i32
    %c0_i32_1 = arith.constant 0 : i32
    %c0_i32_2 = arith.constant 0 : i32
    return %c0_i32, %c0_i32_0, %c0_i32_1 : i32, i32, i32
  }
  func.func @transform_2(%arg0: i32) -> (i32, i32, i32) {
    %c0_i32 = arith.constant 0 : i32
    %c0_i32_0 = arith.constant 0 : i32
    %c0_i32_1 = arith.constant 0 : i32
    %c0_i32_2 = arith.constant 0 : i32
    return %c0_i32, %c0_i32_0, %c0_i32_1 : i32, i32, i32
  }
  func.func @transform_3(%arg0: i32) -> (i32, i32, i32) {
    %c0_i32 = arith.constant 0 : i32
    %c0_i32_0 = arith.constant 0 : i32
    %c0_i32_1 = arith.constant 0 : i32
    %c0_i32_2 = arith.constant 0 : i32
    return %c0_i32, %c0_i32_0, %c0_i32_1 : i32, i32, i32
  }
  func.func @transform_4(%arg0: i32) -> (i32, i32, i32) {
    %c0_i32 = arith.constant 0 : i32
    %c0_i32_0 = arith.constant 0 : i32
    %c0_i32_1 = arith.constant 0 : i32
    %c0_i32_2 = arith.constant 0 : i32
    return %c0_i32, %c0_i32_0, %c0_i32_1 : i32, i32, i32
  }
  func.func @transform_5(%arg0: i32) -> (i32, i32, i32) {
    %c0_i32 = arith.constant 0 : i32
    %c0_i32_0 = arith.constant 0 : i32
    %c0_i32_1 = arith.constant 0 : i32
    %c0_i32_2 = arith.constant 0 : i32
    return %c0_i32, %c0_i32_0, %c0_i32_1 : i32, i32, i32
  }
  func.func @transform_6(%arg0: i32) -> (i32, i32, i32) {
    %c0_i32 = arith.constant 0 : i32
    %c0_i32_0 = arith.constant 0 : i32
    %c0_i32_1 = arith.constant 0 : i32
    %c0_i32_2 = arith.constant 0 : i32
    return %c0_i32, %c0_i32_0, %c0_i32_1 : i32, i32, i32
  }
  func.func @transform_7(%arg0: i32) -> (i32, i32, i32) {
    %c0_i32 = arith.constant 0 : i32
    %c0_i32_0 = arith.constant 0 : i32
    %c0_i32_1 = arith.constant 0 : i32
    return %arg0, %c0_i32, %c0_i32_0 : i32, i32, i32
  }
}

</mosaic_0001>

<llo_original>
// kernel: residual_group_forward.1
$region0: #{residual_group_forward.1}
  #allocation0 [shape = 'u32[]', space=smem, size = 0x4, offset = 0x4, fixed_abs, tag = 'smem constant byte address 0x4 - core index']
  #allocation1 [shape = 'u32[144,128]{1,0:T(1,128)}', space=vmem, size = 0x12000, scoped, tag = 'internal scratch']
  %s0 = inlined_call_operand.vmem [shape: f32[2,16,256], index: 0, kind: input, shape index: {}]
  %s1 = inlined_call_operand.hbm [shape: f32[15,256,256], index: 1, kind: input, shape index: {}]
  %s2 = inlined_call_operand.hbm [shape: f32[5,1,256], index: 2, kind: input, shape index: {}]
  %s3 = inlined_call_operand.vmem [shape: f32[2,256,4], index: 3, kind: input, shape index: {}]
  %s4 = inlined_call_operand.hbm [shape: f32[2,1,4], index: 4, kind: input, shape index: {}]
  %s5 = inlined_call_operand.hbm [shape: f32[2,4,256], index: 5, kind: input, shape index: {}]
  %s6 = inlined_call_operand.hbm [shape: f32[2,1,256], index: 6, kind: input, shape index: {}]
  %s7 = inlined_call_operand.vmem [shape: f32[2,16,256], index: 7, kind: output, shape index: {}]
  %s8 = sld [smem:[#allocation0]]
  $region81: #{residual_group_forward.1} parent=0
    _
  %s10 = ssub.s32 1, %s8
  %s11 = scalar_select 0, %s10, %s8
  $region1: #{residual_group_forward.1} parent=0
    #allocation2 [shape = 'u8[3932160]{0}', space=vmem, size = 0x3c0000, scoped, tag = 'input window, operand 1, single buffered']
    #allocation3 [shape = 's32[2]{0}', space=sflag, size = 0x8, scoped, tag = 'scoped memory for residual_group_forward.1']
    #allocation4 [shape = 'u8[5120]{0}', space=vmem, size = 0x1400, scoped, tag = 'input window, operand 2, single buffered']
    #allocation5 [shape = 's32[1]{0}', space=sflag, size = 0x4, scoped, tag = 'scoped memory for residual_group_forward.1']
    #allocation6 [shape = 'u8[1024]{0}', space=vmem, size = 0x400, scoped, tag = 'input window, operand 4, single buffered']
    #allocation7 [shape = 'u8[8192]{0}', space=vmem, size = 0x2000, scoped, tag = 'input window, operand 5, single buffered']
    #allocation8 [shape = 's32[1]{0}', space=sflag, size = 0x4, scoped, tag = 'scoped memory for residual_group_forward.1']
    #allocation9 [shape = 'u8[2048]{0}', space=vmem, size = 0x800, scoped, tag = 'input window, operand 6, single buffered']
    %12 = vsyncpa [#allocation3], 0
    %13 = vsyncpa [#allocation5], 0
    %14 = vsyncpa [#allocation8], 0
    loop: start=0, step=1, limit=4
    $region2: #{residual_group_forward.1} parent=1 // loop_pre_header
      _
    $region3: #{residual_group_forward.1} parent=1 // loop_header
      %s16 = sphi 0, %s20
      %p17 = scmp.ge.s32.totalorder %s16, 4
      %s26 = sphi 0, %s28
      %s29 = sphi 0, %s26
      %s30 = sphi 0, %s29
      %s46 = sphi 0, %s30
      %s50 = sphi 0, %s50
      %s52 = sphi 0, %s50
      %s53 = sphi 0, %s52
      %s67 = sphi 0, %s53
      %s71 = sphi 0, %s71
      %s73 = sphi 0, %s71
      %s74 = sphi 0, %s73
      %s88 = sphi 0, %s74
      %s92 = sphi 0, %s92
      %s94 = sphi 0, %s92
      %s95 = sphi 0, %s94
      %s109 = sphi 0, %s95
      %s113 = sphi 0, %s113
      %s115 = sphi 0, %s113
      %s116 = sphi 0, %s115
      %s130 = sphi 0, %s116
      %s134 = sphi 0, %s134
      %s136 = sphi 0, %s134
      %s137 = sphi 0, %s136
      %s151 = sphi 0, %s137
      %s155 = sphi 0, %s155
      %s157 = sphi 0, %s155
      %s158 = sphi 0, %s157
      %s172 = sphi 0, %s158
      %s178 = sphi 0, %s180
      %s181 = sphi 0, %s178
      %s182 = sphi 0, %s181
      %s198 = sphi 0, %s182
    $region4: #{residual_group_forward.1} parent=1 // loop_header_branch
      %19 = sbr.rel (%p17) target = $region8
    $region5: #{residual_group_forward.1} parent=1 // loop_body
      %s21 = ssub.s32 %s16, 1
      %s22 = ssub.s32 %s16, 2
      %s23 = sadd.s32 %s16, 1
      %s24 = ssub.s32 %s16, %s23
      %p25 = scmp.eq.s32.totalorder %s24, 0
      %s27 = sadd.s32 %s26, 1
      %s28 = scalar_select %p25, %s26, %s27
      %p31 = pneg %p25
      %p32 = scmp.eq.s32.totalorder %s16, 1
      %p33 = por %p31, %p32
      %p34 = scmp.ne.s32.totalorder %s26, %s29
      %p35 = scmp.eq.s32.totalorder %s16, 0
      %p36 = por %p34, %p35
      %p37 = scmp.ne.s32.totalorder %s26, %s29
      %p38 = scmp.eq.s32.totalorder %s21, 1
      %p39 = por %p37, %p38
      %p40 = scmp.ne.s32.totalorder %s29, %s30
      %p41 = scmp.eq.s32.totalorder %s21, 0
      %p42 = por %p40, %p41
      %p43 = scmp.ne.s32.totalorder %s29, %s30
      %p44 = scmp.eq.s32.totalorder %s22, 1
      %p45 = por %p43, %p44
      %p47 = scmp.ne.s32.totalorder %s30, %s46
      %p48 = scmp.eq.s32.totalorder %s22, 0
      %p49 = por %p47, %p48
      %s51 = sadd.s32 %s50, 1
      %p54 = scmp.eq.s32.totalorder %s16, 1
      %p55 = scmp.ne.s32.totalorder %s50, %s52
      %p56 = scmp.eq.s32.totalorder %s16, 0
      %p57 = por %p55, %p56
      %p58 = scmp.ne.s32.totalorder %s50, %s52
      %p59 = scmp.eq.s32.totalorder %s21, 1
      %p60 = por %p58, %p59
      %p61 = scmp.ne.s32.totalorder %s52, %s53
      %p62 = scmp.eq.s32.totalorder %s21, 0
      %p63 = por %p61, %p62
      %p64 = scmp.ne.s32.totalorder %s52, %s53
      %p65 = scmp.eq.s32.totalorder %s22, 1
      %p66 = por %p64, %p65
      %p68 = scmp.ne.s32.totalorder %s53, %s67
      %p69 = scmp.eq.s32.totalorder %s22, 0
      %p70 = por %p68, %p69
      %s72 = sadd.s32 %s71, 1
      %p75 = scmp.eq.s32.totalorder %s16, 1
      %p76 = scmp.ne.s32.totalorder %s71, %s73
      %p77 = scmp.eq.s32.totalorder %s16, 0
      %p78 = por %p76, %p77
      %p79 = scmp.ne.s32.totalorder %s71, %s73
      %p80 = scmp.eq.s32.totalorder %s21, 1
      %p81 = por %p79, %p80
      %p82 = scmp.ne.s32.totalorder %s73, %s74
      %p83 = scmp.eq.s32.totalorder %s21, 0
      %p84 = por %p82, %p83
      %p85 = scmp.ne.s32.totalorder %s73, %s74
      %p86 = scmp.eq.s32.totalorder %s22, 1
      %p87 = por %p85, %p86
      %p89 = scmp.ne.s32.totalorder %s74, %s88
      %p90 = scmp.eq.s32.totalorder %s22, 0
      %p91 = por %p89, %p90
      %s93 = sadd.s32 %s92, 1
      %p96 = scmp.eq.s32.totalorder %s16, 1
      %p97 = scmp.ne.s32.totalorder %s92, %s94
      %p98 = scmp.eq.s32.totalorder %s16, 0
      %p99 = por %p97, %p98
      %p100 = scmp.ne.s32.totalorder %s92, %s94
      %p101 = scmp.eq.s32.totalorder %s21, 1
      %p102 = por %p100, %p101
      %p103 = scmp.ne.s32.totalorder %s94, %s95
      %p104 = scmp.eq.s32.totalorder %s21, 0
      %p105 = por %p103, %p104
      %p106 = scmp.ne.s32.totalorder %s94, %s95
      %p107 = scmp.eq.s32.totalorder %s22, 1
      %p108 = por %p106, %p107
      %p110 = scmp.ne.s32.totalorder %s95, %s109
      %p111 = scmp.eq.s32.totalorder %s22, 0
      %p112 = por %p110, %p111
      %s114 = sadd.s32 %s113, 1
      %p117 = scmp.eq.s32.totalorder %s16, 1
      %p118 = scmp.ne.s32.totalorder %s113, %s115
      %p119 = scmp.eq.s32.totalorder %s16, 0
      %p120 = por %p118, %p119
      %p121 = scmp.ne.s32.totalorder %s113, %s115
      %p122 = scmp.eq.s32.totalorder %s21, 1
      %p123 = por %p121, %p122
      %p124 = scmp.ne.s32.totalorder %s115, %s116
      %p125 = scmp.eq.s32.totalorder %s21, 0
      %p126 = por %p124, %p125
      %p127 = scmp.ne.s32.totalorder %s115, %s116
      %p128 = scmp.eq.s32.totalorder %s22, 1
      %p129 = por %p127, %p128
      %p131 = scmp.ne.s32.totalorder %s116, %s130
      %p132 = scmp.eq.s32.totalorder %s22, 0
      %p133 = por %p131, %p132
      %s135 = sadd.s32 %s134, 1
      %p138 = scmp.eq.s32.totalorder %s16, 1
      %p139 = scmp.ne.s32.totalorder %s134, %s136
      %p140 = scmp.eq.s32.totalorder %s16, 0
      %p141 = por %p139, %p140
      %p142 = scmp.ne.s32.totalorder %s134, %s136
      %p143 = scmp.eq.s32.totalorder %s21, 1
      %p144 = por %p142, %p143
      %p145 = scmp.ne.s32.totalorder %s136, %s137
      %p146 = scmp.eq.s32.totalorder %s21, 0
      %p147 = por %p145, %p146
      %p148 = scmp.ne.s32.totalorder %s136, %s137
      %p149 = scmp.eq.s32.totalorder %s22, 1
      %p150 = por %p148, %p149
      %p152 = scmp.ne.s32.totalorder %s137, %s151
      %p153 = scmp.eq.s32.totalorder %s22, 0
      %p154 = por %p152, %p153
      %s156 = sadd.s32 %s155, 1
      %p159 = scmp.eq.s32.totalorder %s16, 1
      %p160 = scmp.ne.s32.totalorder %s155, %s157
      %p161 = scmp.eq.s32.totalorder %s16, 0
      %p162 = por %p160, %p161
      %p163 = scmp.ne.s32.totalorder %s155, %s157
      %p164 = scmp.eq.s32.totalorder %s21, 1
      %p165 = por %p163, %p164
      %p166 = scmp.ne.s32.totalorder %s157, %s158
      %p167 = scmp.eq.s32.totalorder %s21, 0
      %p168 = por %p166, %p167
      %p169 = scmp.ne.s32.totalorder %s157, %s158
      %p170 = scmp.eq.s32.totalorder %s22, 1
      %p171 = por %p169, %p170
      %p173 = scmp.ne.s32.totalorder %s158, %s172
      %p174 = scmp.eq.s32.totalorder %s22, 0
      %p175 = por %p173, %p174
      %s176 = ssub.s32 %s16, %s23
      %p177 = scmp.eq.s32.totalorder %s176, 0
      %s179 = sadd.s32 %s178, 1
      %s180 = scalar_select %p177, %s178, %s179
      %p183 = pneg %p177
      %p184 = scmp.eq.s32.totalorder %s16, 1
      %p185 = por %p183, %p184
      %p186 = scmp.ne.s32.totalorder %s178, %s181
      %p187 = scmp.eq.s32.totalorder %s16, 0
      %p188 = por %p186, %p187
      %p189 = scmp.ne.s32.totalorder %s178, %s181
      %p190 = scmp.eq.s32.totalorder %s21, 1
      %p191 = por %p189, %p190
      %p192 = scmp.ne.s32.totalorder %s181, %s182
      %p193 = scmp.eq.s32.totalorder %s21, 0
      %p194 = por %p192, %p193
      %p195 = scmp.ne.s32.totalorder %s181, %s182
      %p196 = scmp.eq.s32.totalorder %s22, 1
      %p197 = por %p195, %p196
      %p199 = scmp.ne.s32.totalorder %s182, %s198
      %p200 = scmp.eq.s32.totalorder %s22, 0
      %p201 = por %p199, %p200
      %p202 = scmp.le.s32.totalorder 1, %s16
      %p203 = scmp.lt.s32.totalorder %s16, 3
      %p204 = pnand %p202, %p203
      %p205 = pneg %p204
      // Predicated region
      $region9: #{residual_group_forward.1} parent=5 // pred_check
        _
      $region10: #{residual_group_forward.1} parent=5 // pred_check_branch
        %207 = sbr.rel (%p204) target = $region12
      $region11: #{residual_group_forward.1} parent=5 // pred_region
        %s208 = ssub.s32 %s16, 1
        // Predicated region
        $region13: #{residual_group_forward.1} parent=11 // pred_check
          %p209 = pneg %p63
        $region14: #{residual_group_forward.1} parent=11 // pred_check_branch
          %211 = sbr.rel (%p209) target = $region16
        $region15: #{residual_group_forward.1} parent=11 // pred_region
          %s213 = ssub.s32 122880, 122880
          %214 = vsyncadd [#allocation3], %s213
          %s215 = sshll.u32 [#allocation2], 4
          %s216 = int_to_ptr.vmem [resolvable:$true] %s215
          %221 = dma.hbm_to_vmem [thread:$0]  %s1, 122880, %s216, [#allocation3], 256, 256, 16
        $region16: #{residual_group_forward.1} parent=11 // pred_fallthru
          _
        // Predicated region
        $region17: #{residual_group_forward.1} parent=11 // pred_check
          %p222 = pneg %p84
        $region18: #{residual_group_forward.1} parent=11 // pred_check_branch
          %224 = sbr.rel (%p222) target = $region20
        $region19: #{residual_group_forward.1} parent=11 // pred_region
          %s226 = ssub.s32 160, 160
          %227 = vsyncadd [#allocation5], %s226
          %s228 = sshll.u32 [#allocation4], 4
          %s229 = int_to_ptr.vmem [resolvable:$true] %s228
          %234 = dma.hbm_to_vmem [thread:$0]  %s2, 160, %s229, [#allocation5], 32, 32, 2
        $region20: #{residual_group_forward.1} parent=11 // pred_fallthru
          _
        // Predicated region
        $region21: #{residual_group_forward.1} parent=11 // pred_check
          %p235 = pneg %p105
        $region22: #{residual_group_forward.1} parent=11 // pred_check_branch
          %237 = sbr.rel (%p235) target = $region24
        $region23: #{residual_group_forward.1} parent=11 // pred_region
          _
        $region24: #{residual_group_forward.1} parent=11 // pred_fallthru
          _
        // Predicated region
        $region25: #{residual_group_forward.1} parent=11 // pred_check
          %p238 = pneg %p126
        $region26: #{residual_group_forward.1} parent=11 // pred_check_branch
          %240 = sbr.rel (%p238) target = $region28
        $region27: #{residual_group_forward.1} parent=11 // pred_region
          %s242 = ssub.s32 32, 32
          %243 = vsyncadd [#allocation5], %s242
          %s244 = sshll.u32 [#allocation6], 4
          %s245 = int_to_ptr.vmem [resolvable:$true] %s244
          %250 = dma.hbm_to_vmem [thread:$0]  %s4, 32, %s245, [#allocation5], 16, 16, 1
        $region28: #{residual_group_forward.1} parent=11 // pred_fallthru
          _
        // Predicated region
        $region29: #{residual_group_forward.1} parent=11 // pred_check
          %p251 = pneg %p147
        $region30: #{residual_group_forward.1} parent=11 // pred_check_branch
          %253 = sbr.rel (%p251) target = $region32
        $region31: #{residual_group_forward.1} parent=11 // pred_region
          %s255 = ssub.s32 256, 256
          %256 = vsyncadd [#allocation8], %s255
          %s257 = sshll.u32 [#allocation7], 4
          %s258 = int_to_ptr.vmem [resolvable:$true] %s257
          %263 = dma.hbm_to_vmem [thread:$0]  %s5, 256, %s258, [#allocation8], 128, 128, 8
        $region32: #{residual_group_forward.1} parent=11 // pred_fallthru
          _
        // Predicated region
        $region33: #{residual_group_forward.1} parent=11 // pred_check
          %p264 = pneg %p168
        $region34: #{residual_group_forward.1} parent=11 // pred_check_branch
          %266 = sbr.rel (%p264) target = $region36
        $region35: #{residual_group_forward.1} parent=11 // pred_region
          %s268 = ssub.s32 64, 64
          %269 = vsyncadd [#allocation8], %s268
          %s270 = sshll.u32 [#allocation9], 4
          %s271 = int_to_ptr.vmem [resolvable:$true] %s270
          %276 = dma.hbm_to_vmem [thread:$0]  %s6, 64, %s271, [#allocation8], 32, 32, 2
        $region36: #{residual_group_forward.1} parent=11 // pred_fallthru
          _
      $region12: #{residual_group_forward.1} parent=5 // pred_fallthru
        _
      %p277 = scmp.lt.s32.totalorder %s16, 2
      // Predicated region
      $region37: #{residual_group_forward.1} parent=5 // pred_check
        %p278 = pneg %p277
      $region38: #{residual_group_forward.1} parent=5 // pred_check_branch
        %280 = sbr.rel (%p278) target = $region40
      $region39: #{residual_group_forward.1} parent=5 // pred_region
        // Predicated region
        $region41: #{residual_group_forward.1} parent=39 // pred_check
          %p281 = pneg %p36
        $region42: #{residual_group_forward.1} parent=39 // pred_check_branch
          %283 = sbr.rel (%p281) target = $region44
        $region43: #{residual_group_forward.1} parent=39 // pred_region
          %p284 = scmp.lt.s32.totalorder %s16, 1
          %s285 = scalar_select %p284, %s16, 1
          %s286 = smul.addr %s285, 4
          %s287 = smul.addr %s286, 8
          %s288 = scalar_lea.vmem %s0, %s287
        $region44: #{residual_group_forward.1} parent=39 // pred_fallthru
          _
      $region40: #{residual_group_forward.1} parent=5 // pred_fallthru
        _
      %p289 = scmp.le.s32.totalorder 1, %s16
      %p290 = scmp.lt.s32.totalorder %s16, 3
      %p291 = pnand %p289, %p290
      %p292 = pneg %p291
      // Predicated region
      $region45: #{residual_group_forward.1} parent=5 // pred_check
        _
      $region46: #{residual_group_forward.1} parent=5 // pred_check_branch
        %294 = sbr.rel (%p291) target = $region48
      $region47: #{residual_group_forward.1} parent=5 // pred_region
        %s295 = ssub.s32 %s16, 1
        // Predicated region
        $region49: #{residual_group_forward.1} parent=47 // pred_check
          %p296 = pneg %p63
        $region50: #{residual_group_forward.1} parent=47 // pred_check_branch
          %298 = sbr.rel (%p296) target = $region52
        $region51: #{residual_group_forward.1} parent=47 // pred_region
          %299 = dma.done [#allocation3], 122880
        $region52: #{residual_group_forward.1} parent=47 // pred_fallthru
          _
        // Predicated region
        $region53: #{residual_group_forward.1} parent=47 // pred_check
          %p300 = pneg %p84
        $region54: #{residual_group_forward.1} parent=47 // pred_check_branch
          %302 = sbr.rel (%p300) target = $region56
        $region55: #{residual_group_forward.1} parent=47 // pred_region
          %303 = dma.done [#allocation5], 160
        $region56: #{residual_group_forward.1} parent=47 // pred_fallthru
          _
        // Predicated region
        $region57: #{residual_group_forward.1} parent=47 // pred_check
          %p304 = pneg %p126
        $region58: #{residual_group_forward.1} parent=47 // pred_check_branch
          %306 = sbr.rel (%p304) target = $region60
        $region59: #{residual_group_forward.1} parent=47 // pred_region
          %307 = dma.done [#allocation5], 32
        $region60: #{residual_group_forward.1} parent=47 // pred_fallthru
          _
        // Predicated region
        $region61: #{residual_group_forward.1} parent=47 // pred_check
          %p308 = pneg %p147
        $region62: #{residual_group_forward.1} parent=47 // pred_check_branch
          %310 = sbr.rel (%p308) target = $region64
        $region63: #{residual_group_forward.1} parent=47 // pred_region
          %311 = dma.done [#allocation8], 256
        $region64: #{residual_group_forward.1} parent=47 // pred_fallthru
          _
        // Predicated region
        $region65: #{residual_group_forward.1} parent=47 // pred_check
          %p312 = pneg %p168
        $region66: #{residual_group_forward.1} parent=47 // pred_check_branch
          %314 = sbr.rel (%p312) target = $region68
        $region67: #{residual_group_forward.1} parent=47 // pred_region
          %315 = dma.done [#allocation8], 64
        $region68: #{residual_group_forward.1} parent=47 // pred_fallthru
          _
        %p316 = scmp.lt.s32.totalorder %s21, 1
        %s317 = scalar_select %p316, %s21, 1
        %s318 = smul.addr %s317, 4
        %s319 = smul.addr %s318, 8
        %s320 = scalar_lea.vmem %s0, %s319
        %p321 = pneg %p42
        %p322 = pneg %p39
        %p323 = pneg %p63
        %p324 = pneg %p60
        %p325 = pneg %p84
        %p326 = pneg %p81
        %p327 = pneg %p105
        %p328 = pneg %p102
        %p329 = pneg %p126
        %p330 = pneg %p123
        %p331 = pneg %p147
        %p332 = pneg %p144
        %p333 = pneg %p168
        %p334 = pneg %p165
        %p335 = pneg %p194
        %p336 = pneg %p191
        %p337 = scmp.lt.s32.totalorder %s21, 1
        %s338 = scalar_select %p337, %s21, 1
        %s339 = smul.addr %s338, 4
        %s340 = smul.addr %s339, 8
        %s341 = scalar_lea.vmem %s7, %s340
        %p342 = scmp.lt.s32.totalorder %s21, 1
        %s343 = scalar_select %p342, %s21, 1
        %s344 = smul.addr %s343, 4
        %s345 = smul.addr %s344, 8
        %s346 = scalar_lea.vmem %s0, %s345
        %p347 = scmp.lt.s32.totalorder %s21, 1
        %s348 = scalar_select %p347, %s21, 1
        %s349 = smul.addr %s348, 4
        %s350 = smul.addr %s349, 8
        %s351 = scalar_lea.vmem %s7, %s350
        %v352 = vld [vmem:[%s346] sm:$0xff]
        %v353 = vld [vmem:[%s346 + $0x8] sm:$0xff]
        %v354 = vld [vmem:[%s346 + $0x10] sm:$0xff]
        %v355 = vld [vmem:[%s346 + $0x18] sm:$0xff]
        %v356 = vlaneseq
        %v357 = vshrl.u32 %v356, 7
        %v358 = vadd.s32 %v357, 8
        %v359 = vlaneseq
        %v360 = vand.u32 %v359, 127
        %v361 = vsub.s32 %v357, 1
        %v362 = vsub.s32 %v358, 1
        %vm363 = vcmp.eq.s32.totalorder %v360, %v361
        %vm364 = vcmp.eq.s32.totalorder %v360, %v362
        %v365 = vsel %vm363, 1, 0
        %v366 = vsel %vm364, 1, 0
        %v367 = vcvt.s32.f32 %v365
        %v368 = vcvt.s32.f32 %v366
        %v369 = vadd.s32 %v357, 1
        %v370 = vadd.s32 %v358, 1
        %vm371 = vcmp.eq.s32.totalorder %v360, %v369
        %vm372 = vcmp.eq.s32.totalorder %v360, %v370
        %v373 = vsel %vm371, 1, 0
        %v374 = vsel %vm372, 1, 0
        %v375 = vcvt.s32.f32 %v373
        %v376 = vcvt.s32.f32 %v374
        %vm377 = vcmask 130048
        %v379 = vsel %vm377, %v367, 0
        %v382 = vsel %vm377, %v368, 0
        %384 = vmatprep.subr.mxu0 %v353
        %385 = vmatpush1.msra.mxu0 %v352
        %386 = vmatprep.subr.mxu0 %v355
        %387 = vmatpush1.msra.mxu0 %v354
        %388 = vmatprep.subr.mxu0 0.0
        %389 = vmatpush1.msra.mxu0 0.0
        %390 = vmatprep.subr.mxu0 0.0
        %391 = vmatpush1.msra.mxu0 0.0
        %392 = vmatprep.subr.mxu0 0.0
        %393 = vmatpush1.msra.mxu0 0.0
        %394 = vmatprep.subr.mxu0 0.0
        %395 = vmatpush1.msra.mxu0 0.0
        %396 = vmatprep.subr.mxu0 0.0
        %397 = vmatpush1.msra.mxu0 0.0
        %398 = vmatprep.subr.mxu0 0.0
        %399 = vmatpush1.msra.mxu0 0.0
        %400 = vmatprep.subr.mxu0 0.0
        %401 = vmatpush1.msra.mxu0 0.0
        %402 = vmatprep.subr.mxu0 0.0
        %403 = vmatpush1.msra.mxu0 0.0
        %404 = vmatprep.subr.mxu0 0.0
        %405 = vmatpush1.msra.mxu0 0.0
        %406 = vmatprep.subr.mxu0 0.0
        %407 = vmatpush1.msra.mxu0 0.0
        %408 = vmatprep.subr.mxu0 0.0
        %409 = vmatpush1.msra.mxu0 0.0
        %410 = vmatprep.subr.mxu0 0.0
        %411 = vmatpush1.msra.mxu0 0.0
        %412 = vmatprep.subr.mxu0 0.0
        %413 = vmatpush1.msra.mxu0 0.0
        %414 = vmatprep.subr.mxu0 0.0
        %415 = vmatpush1.msra.mxu0 0.0
        %416 = vmatprep.subr.mxu0 0.0
        %417 = vmatpush1.msra.mxu0 0.0
        %418 = vmatprep.subr.mxu0 0.0
        %419 = vmatpush1.msra.mxu0 0.0
        %420 = vmatprep.subr.mxu0 0.0
        %421 = vmatpush1.msra.mxu0 0.0
        %422 = vmatprep.subr.mxu0 0.0
        %423 = vmatpush1.msra.mxu0 0.0
        %424 = vmatprep.subr.mxu0 0.0
        %425 = vmatpush1.msra.mxu0 0.0
        %426 = vmatprep.subr.mxu0 0.0
        %427 = vmatpush1.msra.mxu0 0.0
        %428 = vmatprep.subr.mxu0 0.0
        %429 = vmatpush1.msra.mxu0 0.0
        %430 = vmatprep.subr.mxu0 0.0
        %431 = vmatpush1.msra.mxu0 0.0
        %432 = vmatprep.subr.mxu0 0.0
        %433 = vmatpush1.msra.mxu0 0.0
        %434 = vmatprep.subr.mxu0 0.0
        %435 = vmatpush1.msra.mxu0 0.0
        %436 = vmatprep.subr.mxu0 0.0
        %437 = vmatpush1.msra.mxu0 0.0
        %438 = vmatprep.subr.mxu0 0.0
        %439 = vmatpush1.msra.mxu0 0.0
        %440 = vmatprep.subr.mxu0 0.0
        %441 = vmatpush1.msra.mxu0 0.0
        %442 = vmatprep.subr.mxu0 0.0
        %443 = vmatpush1.msra.mxu0 0.0
        %444 = vmatprep.subr.mxu0 0.0
        %445 = vmatpush1.msra.mxu0 0.0
        %446 = vmatprep.subr.mxu0 0.0
        %447 = vmatpush1.msra.mxu0 0.0
        %448 = vmatprep.mubr.f32.mxu0 0.0
        %449 = vmatmul.mubr.f32.gmra.mrb[0].mxu0 %v379
        %v450 = vpop.f32.mrb[0].mxu0
        %v451 = vadd.f32 0.0, %v450
        %v452 = vpop.f32.mrb[0].mxu0
        %v453 = vadd.f32 0.0, %v452
        %454 = vmatprep.mubr.f32.mxu0 0.0
        %455 = vmatmul.mubr.f32.gmra.mrb[0].mxu0 %v382
        %v456 = vpop.f32.mrb[0].mxu0
        %v457 = vadd.f32 0.0, %v456
        %v458 = vpop.f32.mrb[0].mxu0
        %v459 = vadd.f32 0.0, %v458
        %460 = vdwg.mxu0
        %v462 = vsel %vm377, %v375, 0
        %v465 = vsel %vm377, %v376, 0
        %467 = vmatprep.subr.mxu0 %v353
        %468 = vmatpush1.msra.mxu0 %v352
        %469 = vmatprep.subr.mxu0 %v355
        %470 = vmatpush1.msra.mxu0 %v354
        %471 = vmatprep.subr.mxu0 0.0
        %472 = vmatpush1.msra.mxu0 0.0
        %473 = vmatprep.subr.mxu0 0.0
        %474 = vmatpush1.msra.mxu0 0.0
        %475 = vmatprep.subr.mxu0 0.0
        %476 = vmatpush1.msra.mxu0 0.0
        %477 = vmatprep.subr.mxu0 0.0
        %478 = vmatpush1.msra.mxu0 0.0
        %479 = vmatprep.subr.mxu0 0.0
        %480 = vmatpush1.msra.mxu0 0.0
        %481 = vmatprep.subr.mxu0 0.0
        %482 = vmatpush1.msra.mxu0 0.0
        %483 = vmatprep.subr.mxu0 0.0
        %484 = vmatpush1.msra.mxu0 0.0
        %485 = vmatprep.subr.mxu0 0.0
        %486 = vmatpush1.msra.mxu0 0.0
        %487 = vmatprep.subr.mxu0 0.0
        %488 = vmatpush1.msra.mxu0 0.0
        %489 = vmatprep.subr.mxu0 0.0
        %490 = vmatpush1.msra.mxu0 0.0
        %491 = vmatprep.subr.mxu0 0.0
        %492 = vmatpush1.msra.mxu0 0.0
        %493 = vmatprep.subr.mxu0 0.0
        %494 = vmatpush1.msra.mxu0 0.0
        %495 = vmatprep.subr.mxu0 0.0
        %496 = vmatpush1.msra.mxu0 0.0
        %497 = vmatprep.subr.mxu0 0.0
        %498 = vmatpush1.msra.mxu0 0.0
        %499 = vmatprep.subr.mxu0 0.0
        %500 = vmatpush1.msra.mxu0 0.0
        %501 = vmatprep.subr.mxu0 0.0
        %502 = vmatpush1.msra.mxu0 0.0
        %503 = vmatprep.subr.mxu0 0.0
        %504 = vmatpush1.msra.mxu0 0.0
        %505 = vmatprep.subr.mxu0 0.0
        %506 = vmatpush1.msra.mxu0 0.0
        %507 = vmatprep.subr.mxu0 0.0
        %508 = vmatpush1.msra.mxu0 0.0
        %509 = vmatprep.subr.mxu0 0.0
        %510 = vmatpush1.msra.mxu0 0.0
        %511 = vmatprep.subr.mxu0 0.0
        %512 = vmatpush1.msra.mxu0 0.0
        %513 = vmatprep.subr.mxu0 0.0
        %514 = vmatpush1.msra.mxu0 0.0
        %515 = vmatprep.subr.mxu0 0.0
        %516 = vmatpush1.msra.mxu0 0.0
        %517 = vmatprep.subr.mxu0 0.0
        %518 = vmatpush1.msra.mxu0 0.0
        %519 = vmatprep.subr.mxu0 0.0
        %520 = vmatpush1.msra.mxu0 0.0
        %521 = vmatprep.subr.mxu0 0.0
        %522 = vmatpush1.msra.mxu0 0.0
        %523 = vmatprep.subr.mxu0 0.0
        %524 = vmatpush1.msra.mxu0 0.0
        %525 = vmatprep.subr.mxu0 0.0
        %526 = vmatpush1.msra.mxu0 0.0
        %527 = vmatprep.subr.mxu0 0.0
        %528 = vmatpush1.msra.mxu0 0.0
        %529 = vmatprep.subr.mxu0 0.0
        %530 = vmatpush1.msra.mxu0 0.0
        %531 = vmatprep.mubr.f32.mxu0 0.0
        %532 = vmatmul.mubr.f32.gmra.mrb[0].mxu0 %v462
        %v533 = vpop.f32.mrb[0].mxu0
        %v534 = vadd.f32 0.0, %v533
        %v535 = vpop.f32.mrb[0].mxu0
        %v536 = vadd.f32 0.0, %v535
        %537 = vmatprep.mubr.f32.mxu0 0.0
        %538 = vmatmul.mubr.f32.gmra.mrb[0].mxu0 %v465
        %v539 = vpop.f32.mrb[0].mxu0
        %v540 = vadd.f32 0.0, %v539
        %v541 = vpop.f32.mrb[0].mxu0
        %v542 = vadd.f32 0.0, %v541
        %543 = vdwg.mxu0
        %v544 = vld [vmem:[#allocation2] sm:$0xff]
        %v545 = vld [vmem:[#allocation2 + $0x8] sm:$0xff]
        %v546 = vld [vmem:[#allocation2 + $0x10] sm:$0xff]
        %v547 = vld [vmem:[#allocation2 + $0x18] sm:$0xff]
        %v548 = vld [vmem:[#allocation2 + $0x20] sm:$0xff]
        %v549 = vld [vmem:[#allocation2 + $0x28] sm:$0xff]
        %v550 = vld [vmem:[#allocation2 + $0x30] sm:$0xff]
        %v551 = vld [vmem:[#allocation2 + $0x38] sm:$0xff]
        %v552 = vld [vmem:[#allocation2 + $0x40] sm:$0xff]
        %v553 = vld [vmem:[#allocation2 + $0x48] sm:$0xff]
        %v554 = vld [vmem:[#allocation2 + $0x50] sm:$0xff]
        %v555 = vld [vmem:[#allocation2 + $0x58] sm:$0xff]
        %v556 = vld [vmem:[#allocation2 + $0x60] sm:$0xff]
        %v557 = vld [vmem:[#allocation2 + $0x68] sm:$0xff]
        %v558 = vld [vmem:[#allocation2 + $0x70] sm:$0xff]
        %v559 = vld [vmem:[#allocation2 + $0x78] sm:$0xff]
        %v560 = vld [vmem:[#allocation2 + $0x80] sm:$0xff]
        %v561 = vld [vmem:[#allocation2 + $0x88] sm:$0xff]
        %v562 = vld [vmem:[#allocation2 + $0x90] sm:$0xff]
        %v563 = vld [vmem:[#allocation2 + $0x98] sm:$0xff]
        %v564 = vld [vmem:[#allocation2 + $0xa0] sm:$0xff]
        %v565 = vld [vmem:[#allocation2 + $0xa8] sm:$0xff]
        %v566 = vld [vmem:[#allocation2 + $0xb0] sm:$0xff]
        %v567 = vld [vmem:[#allocation2 + $0xb8] sm:$0xff]
        %v568 = vld [vmem:[#allocation2 + $0xc0] sm:$0xff]
        %v569 = vld [vmem:[#allocation2 + $0xc8] sm:$0xff]
        %v570 = vld [vmem:[#allocation2 + $0xd0] sm:$0xff]
        %v571 = vld [vmem:[#allocation2 + $0xd8] sm:$0xff]
        %v572 = vld [vmem:[#allocation2 + $0xe0] sm:$0xff]
        %v573 = vld [vmem:[#allocation2 + $0xe8] sm:$0xff]
        %v574 = vld [vmem:[#allocation2 + $0xf0] sm:$0xff]
        %v575 = vld [vmem:[#allocation2 + $0xf8] sm:$0xff]
        %v576 = vld [vmem:[#allocation2 + $0x100] sm:$0xff]
        %v577 = vld [vmem:[#allocation2 + $0x108] sm:$0xff]
        %v578 = vld [vmem:[#allocation2 + $0x110] sm:$0xff]
        %v579 = vld [vmem:[#allocation2 + $0x118] sm:$0xff]
        %v580 = vld [vmem:[#allocation2 + $0x120] sm:$0xff]
        %v581 = vld [vmem:[#allocation2 + $0x128] sm:$0xff]
        %v582 = vld [vmem:[#allocation2 + $0x130] sm:$0xff]
        %v583 = vld [vmem:[#allocation2 + $0x138] sm:$0xff]
        %v584 = vld [vmem:[#allocation2 + $0x140] sm:$0xff]
        %v585 = vld [vmem:[#allocation2 + $0x148] sm:$0xff]
        %v586 = vld [vmem:[#allocation2 + $0x150] sm:$0xff]
        %v587 = vld [vmem:[#allocation2 + $0x158] sm:$0xff]
        %v588 = vld [vmem:[#allocation2 + $0x160] sm:$0xff]
        %v589 = vld [vmem:[#allocation2 + $0x168] sm:$0xff]
        %v590 = vld [vmem:[#allocation2 + $0x170] sm:$0xff]
        %v591 = vld [vmem:[#allocation2 + $0x178] sm:$0xff]
        %v592 = vld [vmem:[#allocation2 + $0x180] sm:$0xff]
        %v593 = vld [vmem:[#allocation2 + $0x188] sm:$0xff]
        %v594 = vld [vmem:[#allocation2 + $0x190] sm:$0xff]
        %v595 = vld [vmem:[#allocation2 + $0x198] sm:$0xff]
        %v596 = vld [vmem:[#allocation2 + $0x1a0] sm:$0xff]
        %v597 = vld [vmem:[#allocation2 + $0x1a8] sm:$0xff]
        %v598 = vld [vmem:[#allocation2 + $0x1b0] sm:$0xff]
        %v599 = vld [vmem:[#allocation2 + $0x1b8] sm:$0xff]
        %v600 = vld [vmem:[#allocation2 + $0x1c0] sm:$0xff]
        %v601 = vld [vmem:[#allocation2 + $0x1c8] sm:$0xff]
        %v602 = vld [vmem:[#allocation2 + $0x1d0] sm:$0xff]
        %v603 = vld [vmem:[#allocation2 + $0x1d8] sm:$0xff]
        %v604 = vld [vmem:[#allocation2 + $0x1e0] sm:$0xff]
        %v605 = vld [vmem:[#allocation2 + $0x1e8] sm:$0xff]
        %v606 = vld [vmem:[#allocation2 + $0x1f0] sm:$0xff]
        %v607 = vld [vmem:[#allocation2 + $0x1f8] sm:$0xff]
        %s608 = scalar_lea.vmem [#allocation2], 512
        %v609 = vld [vmem:[%s608] sm:$0xff]
        %v610 = vld [vmem:[%s608 + $0x8] sm:$0xff]
        %v611 = vld [vmem:[%s608 + $0x10] sm:$0xff]
        %v612 = vld [vmem:[%s608 + $0x18] sm:$0xff]
        %v613 = vld [vmem:[%s608 + $0x20] sm:$0xff]
        %v614 = vld [vmem:[%s608 + $0x28] sm:$0xff]
        %v615 = vld [vmem:[%s608 + $0x30] sm:$0xff]
        %v616 = vld [vmem:[%s608 + $0x38] sm:$0xff]
        %v617 = vld [vmem:[%s608 + $0x40] sm:$0xff]
        %v618 = vld [vmem:[%s608 + $0x48] sm:$0xff]
        %v619 = vld [vmem:[%s608 + $0x50] sm:$0xff]
        %v620 = vld [vmem:[%s608 + $0x58] sm:$0xff]
        %v621 = vld [vmem:[%s608 + $0x60] sm:$0xff]
        %v622 = vld [vmem:[%s608 + $0x68] sm:$0xff]
        %v623 = vld [vmem:[%s608 + $0x70] sm:$0xff]
        %v624 = vld [vmem:[%s608 + $0x78] sm:$0xff]
        %v625 = vld [vmem:[%s608 + $0x80] sm:$0xff]
        %v626 = vld [vmem:[%s608 + $0x88] sm:$0xff]
        %v627 = vld [vmem:[%s608 + $0x90] sm:$0xff]
        %v628 = vld [vmem:[%s608 + $0x98] sm:$0xff]
        %v629 = vld [vmem:[%s608 + $0xa0] sm:$0xff]
        %v630 = vld [vmem:[%s608 + $0xa8] sm:$0xff]
        %v631 = vld [vmem:[%s608 + $0xb0] sm:$0xff]
        %v632 = vld [vmem:[%s608 + $0xb8] sm:$0xff]
        %v633 = vld [vmem:[%s608 + $0xc0] sm:$0xff]
        %v634 = vld [vmem:[%s608 + $0xc8] sm:$0xff]
        %v635 = vld [vmem:[%s608 + $0xd0] sm:$0xff]
        %v636 = vld [vmem:[%s608 + $0xd8] sm:$0xff]
        %v637 = vld [vmem:[%s608 + $0xe0] sm:$0xff]
        %v638 = vld [vmem:[%s608 + $0xe8] sm:$0xff]
        %v639 = vld [vmem:[%s608 + $0xf0] sm:$0xff]
        %v640 = vld [vmem:[%s608 + $0xf8] sm:$0xff]
        %v641 = vld [vmem:[%s608 + $0x100] sm:$0xff]
        %v642 = vld [vmem:[%s608 + $0x108] sm:$0xff]
        %v643 = vld [vmem:[%s608 + $0x110] sm:$0xff]
        %v644 = vld [vmem:[%s608 + $0x118] sm:$0xff]
        %v645 = vld [vmem:[%s608 + $0x120] sm:$0xff]
        %v646 = vld [vmem:[%s608 + $0x128] sm:$0xff]
        %v647 = vld [vmem:[%s608 + $0x130] sm:$0xff]
        %v648 = vld [vmem:[%s608 + $0x138] sm:$0xff]
        %v649 = vld [vmem:[%s608 + $0x140] sm:$0xff]
        %v650 = vld [vmem:[%s608 + $0x148] sm:$0xff]
        %v651 = vld [vmem:[%s608 + $0x150] sm:$0xff]
        %v652 = vld [vmem:[%s608 + $0x158] sm:$0xff]
        %v653 = vld [vmem:[%s608 + $0x160] sm:$0xff]
        %v654 = vld [vmem:[%s608 + $0x168] sm:$0xff]
        %v655 = vld [vmem:[%s608 + $0x170] sm:$0xff]
        %v656 = vld [vmem:[%s608 + $0x178] sm:$0xff]
        %v657 = vld [vmem:[%s608 + $0x180] sm:$0xff]
        %v658 = vld [vmem:[%s608 + $0x188] sm:$0xff]
        %v659 = vld [vmem:[%s608 + $0x190] sm:$0xff]
        %v660 = vld [vmem:[%s608 + $0x198] sm:$0xff]
        %v661 = vld [vmem:[%s608 + $0x1a0] sm:$0xff]
        %v662 = vld [vmem:[%s608 + $0x1a8] sm:$0xff]
        %v663 = vld [vmem:[%s608 + $0x1b0] sm:$0xff]
        %v664 = vld [vmem:[%s608 + $0x1b8] sm:$0xff]
        %v665 = vld [vmem:[%s608 + $0x1c0] sm:$0xff]
        %v666 = vld [vmem:[%s608 + $0x1c8] sm:$0xff]
        %v667 = vld [vmem:[%s608 + $0x1d0] sm:$0xff]
        %v668 = vld [vmem:[%s608 + $0x1d8] sm:$0xff]
        %v669 = vld [vmem:[%s608 + $0x1e0] sm:$0xff]
        %v670 = vld [vmem:[%s608 + $0x1e8] sm:$0xff]
        %v671 = vld [vmem:[%s608 + $0x1f0] sm:$0xff]
        %v672 = vld [vmem:[%s608 + $0x1f8] sm:$0xff]
        %673 = vmatprep.subr.mxu0 %v610
        %674 = vmatpush1.msra.mxu0 %v609
        %675 = vmatprep.subr.mxu0 %v612
        %676 = vmatpush1.msra.mxu0 %v611
        %677 = vmatprep.subr.mxu0 %v614
        %678 = vmatpush1.msra.mxu0 %v613
        %679 = vmatprep.subr.mxu0 %v616
        %680 = vmatpush1.msra.mxu0 %v615
        %681 = vmatprep.subr.mxu0 %v618
        %682 = vmatpush1.msra.mxu0 %v617
        %683 = vmatprep.subr.mxu0 %v620
        %684 = vmatpush1.msra.mxu0 %v619
        %685 = vmatprep.subr.mxu0 %v622
        %686 = vmatpush1.msra.mxu0 %v621
        %687 = vmatprep.subr.mxu0 %v624
        %688 = vmatpush1.msra.mxu0 %v623
        %689 = vmatprep.subr.mxu0 %v626
        %690 = vmatpush1.msra.mxu0 %v625
        %691 = vmatprep.subr.mxu0 %v628
        %692 = vmatpush1.msra.mxu0 %v627
        %693 = vmatprep.subr.mxu0 %v630
        %694 = vmatpush1.msra.mxu0 %v629
        %695 = vmatprep.subr.mxu0 %v632
        %696 = vmatpush1.msra.mxu0 %v631
        %697 = vmatprep.subr.mxu0 %v634
        %698 = vmatpush1.msra.mxu0 %v633
        %699 = vmatprep.subr.mxu0 %v636
        %700 = vmatpush1.msra.mxu0 %v635
        %701 = vmatprep.subr.mxu0 %v638
        %702 = vmatpush1.msra.mxu0 %v637
        %703 = vmatprep.subr.mxu0 %v640
        %704 = vmatpush1.msra.mxu0 %v639
        %705 = vmatprep.subr.mxu0 %v642
        %706 = vmatpush1.msra.mxu0 %v641
        %707 = vmatprep.subr.mxu0 %v644
        %708 = vmatpush1.msra.mxu0 %v643
        %709 = vmatprep.subr.mxu0 %v646
        %710 = vmatpush1.msra.mxu0 %v645
        %711 = vmatprep.subr.mxu0 %v648
        %712 = vmatpush1.msra.mxu0 %v647
        %713 = vmatprep.subr.mxu0 %v650
        %714 = vmatpush1.msra.mxu0 %v649
        %715 = vmatprep.subr.mxu0 %v652
        %716 = vmatpush1.msra.mxu0 %v651
        %717 = vmatprep.subr.mxu0 %v654
        %718 = vmatpush1.msra.mxu0 %v653
        %719 = vmatprep.subr.mxu0 %v656
        %720 = vmatpush1.msra.mxu0 %v655
        %721 = vmatprep.subr.mxu0 %v658
        %722 = vmatpush1.msra.mxu0 %v657
        %723 = vmatprep.subr.mxu0 %v660
        %724 = vmatpush1.msra.mxu0 %v659
        %725 = vmatprep.subr.mxu0 %v662
        %726 = vmatpush1.msra.mxu0 %v661
        %727 = vmatprep.subr.mxu0 %v664
        %728 = vmatpush1.msra.mxu0 %v663
        %729 = vmatprep.subr.mxu0 %v666
        %730 = vmatpush1.msra.mxu0 %v665
        %731 = vmatprep.subr.mxu0 %v668
        %732 = vmatpush1.msra.mxu0 %v667
        %733 = vmatprep.subr.mxu0 %v670
        %734 = vmatpush1.msra.mxu0 %v669
        %735 = vmatprep.subr.mxu0 %v672
        %736 = vmatpush1.msra.mxu0 %v671
        %737 = vmatprep.mubr.f32.mxu0 %v353
        %738 = vmatmul.mubr.f32.gmra.mrb[0].mxu0 %v352
        %v739 = vpop.f32.mrb[0].mxu0
        %v740 = vadd.f32 0.0, %v739
        %v741 = vpop.f32.mrb[0].mxu0
        %v742 = vadd.f32 0.0, %v741
        %743 = vmatprep.mubr.f32.mxu0 %v355
        %744 = vmatmul.mubr.f32.gmra.mrb[0].mxu0 %v354
        %v745 = vpop.f32.mrb[0].mxu0
        %v746 = vadd.f32 0.0, %v745
        %v747 = vpop.f32.mrb[0].mxu0
        %v748 = vadd.f32 0.0, %v747
        %749 = vdwg.mxu0
        %750 = vmatprep.subr.mxu0 %v545
        %751 = vmatpush1.msra.mxu0 %v544
        %752 = vmatprep.subr.mxu0 %v547
        %753 = vmatpush1.msra.mxu0 %v546
        %754 = vmatprep.subr.mxu0 %v549
        %755 = vmatpush1.msra.mxu0 %v548
        %756 = vmatprep.subr.mxu0 %v551
        %757 = vmatpush1.msra.mxu0 %v550
        %758 = vmatprep.subr.mxu0 %v553
        %759 = vmatpush1.msra.mxu0 %v552
        %760 = vmatprep.subr.mxu0 %v555
        %761 = vmatpush1.msra.mxu0 %v554
        %762 = vmatprep.subr.mxu0 %v557
        %763 = vmatpush1.msra.mxu0 %v556
        %764 = vmatprep.subr.mxu0 %v559
        %765 = vmatpush1.msra.mxu0 %v558
        %766 = vmatprep.subr.mxu0 %v561
        %767 = vmatpush1.msra.mxu0 %v560
        %768 = vmatprep.subr.mxu0 %v563
        %769 = vmatpush1.msra.mxu0 %v562
        %770 = vmatprep.subr.mxu0 %v565
        %771 = vmatpush1.msra.mxu0 %v564
        %772 = vmatprep.subr.mxu0 %v567
        %773 = vmatpush1.msra.mxu0 %v566
        %774 = vmatprep.subr.mxu0 %v569
        %775 = vmatpush1.msra.mxu0 %v568
        %776 = vmatprep.subr.mxu0 %v571
        %777 = vmatpush1.msra.mxu0 %v570
        %778 = vmatprep.subr.mxu0 %v573
        %779 = vmatpush1.msra.mxu0 %v572
        %780 = vmatprep.subr.mxu0 %v575
        %781 = vmatpush1.msra.mxu0 %v574
        %782 = vmatprep.subr.mxu0 %v577
        %783 = vmatpush1.msra.mxu0 %v576
        %784 = vmatprep.subr.mxu0 %v579
        %785 = vmatpush1.msra.mxu0 %v578
        %786 = vmatprep.subr.mxu0 %v581
        %787 = vmatpush1.msra.mxu0 %v580
        %788 = vmatprep.subr.mxu0 %v583
        %789 = vmatpush1.msra.mxu0 %v582
        %790 = vmatprep.subr.mxu0 %v585
        %791 = vmatpush1.msra.mxu0 %v584
        %792 = vmatprep.subr.mxu0 %v587
        %793 = vmatpush1.msra.mxu0 %v586
        %794 = vmatprep.subr.mxu0 %v589
        %795 = vmatpush1.msra.mxu0 %v588
        %796 = vmatprep.subr.mxu0 %v591
        %797 = vmatpush1.msra.mxu0 %v590
        %798 = vmatprep.subr.mxu0 %v593
        %799 = vmatpush1.msra.mxu0 %v592
        %800 = vmatprep.subr.mxu0 %v595
        %801 = vmatpush1.msra.mxu0 %v594
        %802 = vmatprep.subr.mxu0 %v597
        %803 = vmatpush1.msra.mxu0 %v596
        %804 = vmatprep.subr.mxu0 %v599
        %805 = vmatpush1.msra.mxu0 %v598
        %806 = vmatprep.subr.mxu0 %v601
        %807 = vmatpush1.msra.mxu0 %v600
        %808 = vmatprep.subr.mxu0 %v603
        %809 = vmatpush1.msra.mxu0 %v602
        %810 = vmatprep.subr.mxu0 %v605
        %811 = vmatpush1.msra.mxu0 %v604
        %812 = vmatprep.subr.mxu0 %v607
        %813 = vmatpush1.msra.mxu0 %v606
        %814 = vmatprep.mubr.f32.mxu0 %v453
        %815 = vmatmul.mubr.f32.gmra.mrb[0].mxu0 %v451
        %v816 = vpop.f32.mrb[0].mxu0
        %v817 = vadd.f32 %v740, %v816
        %v818 = vpop.f32.mrb[0].mxu0
        %v819 = vadd.f32 %v742, %v818
        %820 = vmatprep.mubr.f32.mxu0 %v459
        %821 = vmatmul.mubr.f32.gmra.mrb[0].mxu0 %v457
        %v822 = vpop.f32.mrb[0].mxu0
        %v823 = vadd.f32 %v746, %v822
        %v824 = vpop.f32.mrb[0].mxu0
        %v825 = vadd.f32 %v748, %v824
        %826 = vdwg.mxu0
        %s827 = scalar_lea.vmem [#allocation2], 1024
        %v828 = vld [vmem:[%s827] sm:$0xff]
        %v829 = vld [vmem:[%s827 + $0x8] sm:$0xff]
        %v830 = vld [vmem:[%s827 + $0x10] sm:$0xff]
        %v831 = vld [vmem:[%s827 + $0x18] sm:$0xff]
        %v832 = vld [vmem:[%s827 + $0x20] sm:$0xff]
        %v833 = vld [vmem:[%s827 + $0x28] sm:$0xff]
        %v834 = vld [vmem:[%s827 + $0x30] sm:$0xff]
        %v835 = vld [vmem:[%s827 + $0x38] sm:$0xff]
        %v836 = vld [vmem:[%s827 + $0x40] sm:$0xff]
        %v837 = vld [vmem:[%s827 + $0x48] sm:$0xff]
        %v838 = vld [vmem:[%s827 + $0x50] sm:$0xff]
        %v839 = vld [vmem:[%s827 + $0x58] sm:$0xff]
        %v840 = vld [vmem:[%s827 + $0x60] sm:$0xff]
        %v841 = vld [vmem:[%s827 + $0x68] sm:$0xff]
        %v842 = vld [vmem:[%s827 + $0x70] sm:$0xff]
        %v843 = vld [vmem:[%s827 + $0x78] sm:$0xff]
        %v844 = vld [vmem:[%s827 + $0x80] sm:$0xff]
        %v845 = vld [vmem:[%s827 + $0x88] sm:$0xff]
        %v846 = vld [vmem:[%s827 + $0x90] sm:$0xff]
        %v847 = vld [vmem:[%s827 + $0x98] sm:$0xff]
        %v848 = vld [vmem:[%s827 + $0xa0] sm:$0xff]
        %v849 = vld [vmem:[%s827 + $0xa8] sm:$0xff]
        %v850 = vld [vmem:[%s827 + $0xb0] sm:$0xff]
        %v851 = vld [vmem:[%s827 + $0xb8] sm:$0xff]
        %v852 = vld [vmem:[%s827 + $0xc0] sm:$0xff]
        %v853 = vld [vmem:[%s827 + $0xc8] sm:$0xff]
        %v854 = vld [vmem:[%s827 + $0xd0] sm:$0xff]
        %v855 = vld [vmem:[%s827 + $0xd8] sm:$0xff]
        %v856 = vld [vmem:[%s827 + $0xe0] sm:$0xff]
        %v857 = vld [vmem:[%s827 + $0xe8] sm:$0xff]
        %v858 = vld [vmem:[%s827 + $0xf0] sm:$0xff]
        %v859 = vld [vmem:[%s827 + $0xf8] sm:$0xff]
        %v860 = vld [vmem:[%s827 + $0x100] sm:$0xff]
        %v861 = vld [vmem:[%s827 + $0x108] sm:$0xff]
        %v862 = vld [vmem:[%s827 + $0x110] sm:$0xff]
        %v863 = vld [vmem:[%s827 + $0x118] sm:$0xff]
        %v864 = vld [vmem:[%s827 + $0x120] sm:$0xff]
        %v865 = vld [vmem:[%s827 + $0x128] sm:$0xff]
        %v866 = vld [vmem:[%s827 + $0x130] sm:$0xff]
        %v867 = vld [vmem:[%s827 + $0x138] sm:$0xff]
        %v868 = vld [vmem:[%s827 + $0x140] sm:$0xff]
        %v869 = vld [vmem:[%s827 + $0x148] sm:$0xff]
        %v870 = vld [vmem:[%s827 + $0x150] sm:$0xff]
        %v871 = vld [vmem:[%s827 + $0x158] sm:$0xff]
        %v872 = vld [vmem:[%s827 + $0x160] sm:$0xff]
        %v873 = vld [vmem:[%s827 + $0x168] sm:$0xff]
        %v874 = vld [vmem:[%s827 + $0x170] sm:$0xff]
        %v875 = vld [vmem:[%s827 + $0x178] sm:$0xff]
        %v876 = vld [vmem:[%s827 + $0x180] sm:$0xff]
        %v877 = vld [vmem:[%s827 + $0x188] sm:$0xff]
        %v878 = vld [vmem:[%s827 + $0x190] sm:$0xff]
        %v879 = vld [vmem:[%s827 + $0x198] sm:$0xff]
        %v880 = vld [vmem:[%s827 + $0x1a0] sm:$0xff]
        %v881 = vld [vmem:[%s827 + $0x1a8] sm:$0xff]
        %v882 = vld [vmem:[%s827 + $0x1b0] sm:$0xff]
        %v883 = vld [vmem:[%s827 + $0x1b8] sm:$0xff]
        %v884 = vld [vmem:[%s827 + $0x1c0] sm:$0xff]
        %v885 = vld [vmem:[%s827 + $0x1c8] sm:$0xff]
        %v886 = vld [vmem:[%s827 + $0x1d0] sm:$0xff]
        %v887 = vld [vmem:[%s827 + $0x1d8] sm:$0xff]
        %v888 = vld [vmem:[%s827 + $0x1e0] sm:$0xff]
        %v889 = vld [vmem:[%s827 + $0x1e8] sm:$0xff]
        %v890 = vld [vmem:[%s827 + $0x1f0] sm:$0xff]
        %v891 = vld [vmem:[%s827 + $0x1f8] sm:$0xff]
        %892 = vmatprep.subr.mxu0 %v829
        %893 = vmatpush1.msra.mxu0 %v828
        %894 = vmatprep.subr.mxu0 %v831
        %895 = vmatpush1.msra.mxu0 %v830
        %896 = vmatprep.subr.mxu0 %v833
        %897 = vmatpush1.msra.mxu0 %v832
        %898 = vmatprep.subr.mxu0 %v835
        %899 = vmatpush1.msra.mxu0 %v834
        %900 = vmatprep.subr.mxu0 %v837
        %901 = vmatpush1.msra.mxu0 %v836
        %902 = vmatprep.subr.mxu0 %v839
        %903 = vmatpush1.msra.mxu0 %v838
        %904 = vmatprep.subr.mxu0 %v841
        %905 = vmatpush1.msra.mxu0 %v840
        %906 = vmatprep.subr.mxu0 %v843
        %907 = vmatpush1.msra.mxu0 %v842
        %908 = vmatprep.subr.mxu0 %v845
        %909 = vmatpush1.msra.mxu0 %v844
        %910 = vmatprep.subr.mxu0 %v847
        %911 = vmatpush1.msra.mxu0 %v846
        %912 = vmatprep.subr.mxu0 %v849
        %913 = vmatpush1.msra.mxu0 %v848
        %914 = vmatprep.subr.mxu0 %v851
        %915 = vmatpush1.msra.mxu0 %v850
        %916 = vmatprep.subr.mxu0 %v853
        %917 = vmatpush1.msra.mxu0 %v852
        %918 = vmatprep.subr.mxu0 %v855
        %919 = vmatpush1.msra.mxu0 %v854
        %920 = vmatprep.subr.mxu0 %v857
        %921 = vmatpush1.msra.mxu0 %v856
        %922 = vmatprep.subr.mxu0 %v859
        %923 = vmatpush1.msra.mxu0 %v858
        %924 = vmatprep.subr.mxu0 %v861
        %925 = vmatpush1.msra.mxu0 %v860
        %926 = vmatprep.subr.mxu0 %v863
        %927 = vmatpush1.msra.mxu0 %v862
        %928 = vmatprep.subr.mxu0 %v865
        %929 = vmatpush1.msra.mxu0 %v864
        %930 = vmatprep.subr.mxu0 %v867
        %931 = vmatpush1.msra.mxu0 %v866
        %932 = vmatprep.subr.mxu0 %v869
        %933 = vmatpush1.msra.mxu0 %v868
        %934 = vmatprep.subr.mxu0 %v871
        %935 = vmatpush1.msra.mxu0 %v870
        %936 = vmatprep.subr.mxu0 %v873
        %937 = vmatpush1.msra.mxu0 %v872
        %938 = vmatprep.subr.mxu0 %v875
        %939 = vmatpush1.msra.mxu0 %v874
        %940 = vmatprep.subr.mxu0 %v877
        %941 = vmatpush1.msra.mxu0 %v876
        %942 = vmatprep.subr.mxu0 %v879
        %943 = vmatpush1.msra.mxu0 %v878
        %944 = vmatprep.subr.mxu0 %v881
        %945 = vmatpush1.msra.mxu0 %v880
        %946 = vmatprep.subr.mxu0 %v883
        %947 = vmatpush1.msra.mxu0 %v882
        %948 = vmatprep.subr.mxu0 %v885
        %949 = vmatpush1.msra.mxu0 %v884
        %950 = vmatprep.subr.mxu0 %v887
        %951 = vmatpush1.msra.mxu0 %v886
        %952 = vmatprep.subr.mxu0 %v889
        %953 = vmatpush1.msra.mxu0 %v888
        %954 = vmatprep.subr.mxu0 %v891
        %955 = vmatpush1.msra.mxu0 %v890
        %956 = vmatprep.mubr.f32.mxu0 %v536
        %957 = vmatmul.mubr.f32.gmra.mrb[0].mxu0 %v534
        %v958 = vpop.f32.mrb[0].mxu0
        %v959 = vadd.f32 0.0, %v958
        %v960 = vpop.f32.mrb[0].mxu0
        %v961 = vadd.f32 0.0, %v960
        %962 = vmatprep.mubr.f32.mxu0 %v542
        %963 = vmatmul.mubr.f32.gmra.mrb[0].mxu0 %v540
        %v964 = vpop.f32.mrb[0].mxu0
        %v965 = vadd.f32 0.0, %v964
        %v966 = vpop.f32.mrb[0].mxu0
        %v967 = vadd.f32 0.0, %v966
        %968 = vdwg.mxu0
        %v969 = vadd.f32 %v817, %v959
        %v970 = vadd.f32 %v819, %v961
        %v971 = vadd.f32 %v823, %v965
        %v972 = vadd.f32 %v825, %v967
        %v973 = vld [vmem:[#allocation4] sm:$0x3]
        %v975 = vlaneseq
        %v976 = vshrl.u32 %v975, 7
        %v977 = vsub.s32 0, %v976
        %v978 = vrot.slane %v973, %v977
        %v979 = vlaneseq
        %v980 = vshrl.u32 %v979, 7
        %v981 = vsub.s32 1, %v980
        %v982 = vrot.slane %v973, %v981
        %v985 = vadd.f32 %v969, %v978
        %v986 = vadd.f32 %v970, %v982
        %v987 = vadd.f32 %v971, %v978
        %v988 = vadd.f32 %v972, %v982
        %v989 = vmax.f32 %v985, 0.0
        %v990 = vmax.f32 %v986, 0.0
        %v991 = vmax.f32 %v987, 0.0
        %v992 = vmax.f32 %v988, 0.0
        %993 = vmatprep.subr.mxu0 %v990
        %994 = vmatpush1.msra.mxu0 %v989
        %995 = vmatprep.subr.mxu0 %v992
        %996 = vmatpush1.msra.mxu0 %v991
        %997 = vmatprep.subr.mxu0 0.0
        %998 = vmatpush1.msra.mxu0 0.0
        %999 = vmatprep.subr.mxu0 0.0
        %1000 = vmatpush1.msra.mxu0 0.0
        %1001 = vmatprep.subr.mxu0 0.0
        %1002 = vmatpush1.msra.mxu0 0.0
        %1003 = vmatprep.subr.mxu0 0.0
        %1004 = vmatpush1.msra.mxu0 0.0
        %1005 = vmatprep.subr.mxu0 0.0
        %1006 = vmatpush1.msra.mxu0 0.0
        %1007 = vmatprep.subr.mxu0 0.0
        %1008 = vmatpush1.msra.mxu0 0.0
        %1009 = vmatprep.subr.mxu0 0.0
        %1010 = vmatpush1.msra.mxu0 0.0
        %1011 = vmatprep.subr.mxu0 0.0
        %1012 = vmatpush1.msra.mxu0 0.0
        %1013 = vmatprep.subr.mxu0 0.0
        %1014 = vmatpush1.msra.mxu0 0.0
        %1015 = vmatprep.subr.mxu0 0.0
        %1016 = vmatpush1.msra.mxu0 0.0
        %1017 = vmatprep.subr.mxu0 0.0
        %1018 = vmatpush1.msra.mxu0 0.0
        %1019 = vmatprep.subr.mxu0 0.0
        %1020 = vmatpush1.msra.mxu0 0.0
        %1021 = vmatprep.subr.mxu0 0.0
        %1022 = vmatpush1.msra.mxu0 0.0
        %1023 = vmatprep.subr.mxu0 0.0
        %1024 = vmatpush1.msra.mxu0 0.0
        %1025 = vmatprep.subr.mxu0 0.0
        %1026 = vmatpush1.msra.mxu0 0.0
        %1027 = vmatprep.subr.mxu0 0.0
        %1028 = vmatpush1.msra.mxu0 0.0
        %1029 = vmatprep.subr.mxu0 0.0
        %1030 = vmatpush1.msra.mxu0 0.0
        %1031 = vmatprep.subr.mxu0 0.0
        %1032 = vmatpush1.msra.mxu0 0.0
        %1033 = vmatprep.subr.mxu0 0.0
        %1034 = vmatpush1.msra.mxu0 0.0
        %1035 = vmatprep.subr.mxu0 0.0
        %1036 = vmatpush1.msra.mxu0 0.0
        %1037 = vmatprep.subr.mxu0 0.0
        %1038 = vmatpush1.msra.mxu0 0.0
        %1039 = vmatprep.subr.mxu0 0.0
        %1040 = vmatpush1.msra.mxu0 0.0
        %1041 = vmatprep.subr.mxu0 0.0
        %1042 = vmatpush1.msra.mxu0 0.0
        %1043 = vmatprep.subr.mxu0 0.0
        %1044 = vmatpush1.msra.mxu0 0.0
        %1045 = vmatprep.subr.mxu0 0.0
        %1046 = vmatpush1.msra.mxu0 0.0
        %1047 = vmatprep.subr.mxu0 0.0
        %1048 = vmatpush1.msra.mxu0 0.0
        %1049 = vmatprep.subr.mxu0 0.0
        %1050 = vmatpush1.msra.mxu0 0.0
        %1051 = vmatprep.subr.mxu0 0.0
        %1052 = vmatpush1.msra.mxu0 0.0
        %1053 = vmatprep.subr.mxu0 0.0
        %1054 = vmatpush1.msra.mxu0 0.0
        %1055 = vmatprep.subr.mxu0 0.0
        %1056 = vmatpush1.msra.mxu0 0.0
        %1057 = vmatprep.mubr.f32.mxu0 0.0
        %1058 = vmatmul.mubr.f32.gmra.mrb[0].mxu0 %v379
        %v1059 = vpop.f32.mrb[0].mxu0
        %v1060 = vadd.f32 0.0, %v1059
        %v1061 = vpop.f32.mrb[0].mxu0
        %v1062 = vadd.f32 0.0, %v1061
        %1063 = vmatprep.mubr.f32.mxu0 0.0
        %1064 = vmatmul.mubr.f32.gmra.mrb[0].mxu0 %v382
        %v1065 = vpop.f32.mrb[0].mxu0
        %v1066 = vadd.f32 0.0, %v1065
        %v1067 = vpop.f32.mrb[0].mxu0
        %v1068 = vadd.f32 0.0, %v1067
        %1069 = vdwg.mxu0
        %1070 = vmatprep.subr.mxu0 %v990
        %1071 = vmatpush1.msra.mxu0 %v989
        %1072 = vmatprep.subr.mxu0 %v992
        %1073 = vmatpush1.msra.mxu0 %v991
        %1074 = vmatprep.subr.mxu0 0.0
        %1075 = vmatpush1.msra.mxu0 0.0
        %1076 = vmatprep.subr.mxu0 0.0
        %1077 = vmatpush1.msra.mxu0 0.0
        %1078 = vmatprep.subr.mxu0 0.0
        %1079 = vmatpush1.msra.mxu0 0.0
        %1080 = vmatprep.subr.mxu0 0.0
        %1081 = vmatpush1.msra.mxu0 0.0
        %1082 = vmatprep.subr.mxu0 0.0
        %1083 = vmatpush1.msra.mxu0 0.0
        %1084 = vmatprep.subr.mxu0 0.0
        %1085 = vmatpush1.msra.mxu0 0.0
        %1086 = vmatprep.subr.mxu0 0.0
        %1087 = vmatpush1.msra.mxu0 0.0
        %1088 = vmatprep.subr.mxu0 0.0
        %1089 = vmatpush1.msra.mxu0 0.0
        %1090 = vmatprep.subr.mxu0 0.0
        %1091 = vmatpush1.msra.mxu0 0.0
        %1092 = vmatprep.subr.mxu0 0.0
        %1093 = vmatpush1.msra.mxu0 0.0
        %1094 = vmatprep.subr.mxu0 0.0
        %1095 = vmatpush1.msra.mxu0 0.0
        %1096 = vmatprep.subr.mxu0 0.0
        %1097 = vmatpush1.msra.mxu0 0.0
        %1098 = vmatprep.subr.mxu0 0.0
        %1099 = vmatpush1.msra.mxu0 0.0
        %1100 = vmatprep.subr.mxu0 0.0
        %1101 = vmatpush1.msra.mxu0 0.0
        %1102 = vmatprep.subr.mxu0 0.0
        %1103 = vmatpush1.msra.mxu0 0.0
        %1104 = vmatprep.subr.mxu0 0.0
        %1105 = vmatpush1.msra.mxu0 0.0
        %1106 = vmatprep.subr.mxu0 0.0
        %1107 = vmatpush1.msra.mxu0 0.0
        %1108 = vmatprep.subr.mxu0 0.0
        %1109 = vmatpush1.msra.mxu0 0.0
        %1110 = vmatprep.subr.mxu0 0.0
        %1111 = vmatpush1.msra.mxu0 0.0
        %1112 = vmatprep.subr.mxu0 0.0
        %1113 = vmatpush1.msra.mxu0 0.0
        %1114 = vmatprep.subr.mxu0 0.0
        %1115 = vmatpush1.msra.mxu0 0.0
        %1116 = vmatprep.subr.mxu0 0.0
        %1117 = vmatpush1.msra.mxu0 0.0
        %1118 = vmatprep.subr.mxu0 0.0
        %1119 = vmatpush1.msra.mxu0 0.0
        %1120 = vmatprep.subr.mxu0 0.0
        %1121 = vmatpush1.msra.mxu0 0.0
        %1122 = vmatprep.subr.mxu0 0.0
        %1123 = vmatpush1.msra.mxu0 0.0
        %1124 = vmatprep.subr.mxu0 0.0
        %1125 = vmatpush1.msra.mxu0 0.0
        %1126 = vmatprep.subr.mxu0 0.0
        %1127 = vmatpush1.msra.mxu0 0.0
        %1128 = vmatprep.subr.mxu0 0.0
        %1129 = vmatpush1.msra.mxu0 0.0
        %1130 = vmatprep.subr.mxu0 0.0
        %1131 = vmatpush1.msra.mxu0 0.0
        %1132 = vmatprep.subr.mxu0 0.0
        %1133 = vmatpush1.msra.mxu0 0.0
        %1134 = vmatprep.mubr.f32.mxu0 0.0
        %1135 = vmatmul.mubr.f32.gmra.mrb[0].mxu0 %v462
        %v1136 = vpop.f32.mrb[0].mxu0
        %v1137 = vadd.f32 0.0, %v1136
        %v1138 = vpop.f32.mrb[0].mxu0
        %v1139 = vadd.f32 0.0, %v1138
        %1140 = vmatprep.mubr.f32.mxu0 0.0
        %1141 = vmatmul.mubr.f32.gmra.mrb[0].mxu0 %v465
        %v1142 = vpop.f32.mrb[0].mxu0
        %v1143 = vadd.f32 0.0, %v1142
        %v1144 = vpop.f32.mrb[0].mxu0
        %v1145 = vadd.f32 0.0, %v1144
        %1146 = vdwg.mxu0
        %s1147 = scalar_lea.vmem [#allocation2], 1536
        %v1148 = vld [vmem:[%s1147] sm:$0xff]
        %v1149 = vld [vmem:[%s1147 + $0x8] sm:$0xff]
        %v1150 = vld [vmem:[%s1147 + $0x10] sm:$0xff]
        %v1151 = vld [vmem:[%s1147 + $0x18] sm:$0xff]
        %v1152 = vld [vmem:[%s1147 + $0x20] sm:$0xff]
        %v1153 = vld [vmem:[%s1147 + $0x28] sm:$0xff]
        %v1154 = vld [vmem:[%s1147 + $0x30] sm:$0xff]
        %v1155 = vld [vmem:[%s1147 + $0x38] sm:$0xff]
        %v1156 = vld [vmem:[%s1147 + $0x40] sm:$0xff]
        %v1157 = vld [vmem:[%s1147 + $0x48] sm:$0xff]
        %v1158 = vld [vmem:[%s1147 + $0x50] sm:$0xff]
        %v1159 = vld [vmem:[%s1147 + $0x58] sm:$0xff]
        %v1160 = vld [vmem:[%s1147 + $0x60] sm:$0xff]
        %v1161 = vld [vmem:[%s1147 + $0x68] sm:$0xff]
        %v1162 = vld [vmem:[%s1147 + $0x70] sm:$0xff]
        %v1163 = vld [vmem:[%s1147 + $0x78] sm:$0xff]
        %v1164 = vld [vmem:[%s1147 + $0x80] sm:$0xff]
        %v1165 = vld [vmem:[%s1147 + $0x88] sm:$0xff]
        %v1166 = vld [vmem:[%s1147 + $0x90] sm:$0xff]
        %v1167 = vld [vmem:[%s1147 + $0x98] sm:$0xff]
        %v1168 = vld [vmem:[%s1147 + $0xa0] sm:$0xff]
        %v1169 = vld [vmem:[%s1147 + $0xa8] sm:$0xff]
        %v1170 = vld [vmem:[%s1147 + $0xb0] sm:$0xff]
        %v1171 = vld [vmem:[%s1147 + $0xb8] sm:$0xff]
        %v1172 = vld [vmem:[%s1147 + $0xc0] sm:$0xff]
        %v1173 = vld [vmem:[%s1147 + $0xc8] sm:$0xff]
        %v1174 = vld [vmem:[%s1147 + $0xd0] sm:$0xff]
        %v1175 = vld [vmem:[%s1147 + $0xd8] sm:$0xff]
        %v1176 = vld [vmem:[%s1147 + $0xe0] sm:$0xff]
        %v1177 = vld [vmem:[%s1147 + $0xe8] sm:$0xff]
        %v1178 = vld [vmem:[%s1147 + $0xf0] sm:$0xff]
        %v1179 = vld [vmem:[%s1147 + $0xf8] sm:$0xff]
        %v1180 = vld [vmem:[%s1147 + $0x100] sm:$0xff]
        %v1181 = vld [vmem:[%s1147 + $0x108] sm:$0xff]
        %v1182 = vld [vmem:[%s1147 + $0x110] sm:$0xff]
        %v1183 = vld [vmem:[%s1147 + $0x118] sm:$0xff]
        %v1184 = vld [vmem:[%s1147 + $0x120] sm:$0xff]
        %v1185 = vld [vmem:[%s1147 + $0x128] sm:$0xff]
        %v1186 = vld [vmem:[%s1147 + $0x130] sm:$0xff]
        %v1187 = vld [vmem:[%s1147 + $0x138] sm:$0xff]
        %v1188 = vld [vmem:[%s1147 + $0x140] sm:$0xff]
        %v1189 = vld [vmem:[%s1147 + $0x148] sm:$0xff]
        %v1190 = vld [vmem:[%s1147 + $0x150] sm:$0xff]
        %v1191 = vld [vmem:[%s1147 + $0x158] sm:$0xff]
        %v1192 = vld [vmem:[%s1147 + $0x160] sm:$0xff]
        %v1193 = vld [vmem:[%s1147 + $0x168] sm:$0xff]
        %v1194 = vld [vmem:[%s1147 + $0x170] sm:$0xff]
        %v1195 = vld [vmem:[%s1147 + $0x178] sm:$0xff]
        %v1196 = vld [vmem:[%s1147 + $0x180] sm:$0xff]
        %v1197 = vld [vmem:[%s1147 + $0x188] sm:$0xff]
        %v1198 = vld [vmem:[%s1147 + $0x190] sm:$0xff]
        %v1199 = vld [vmem:[%s1147 + $0x198] sm:$0xff]
        %v1200 = vld [vmem:[%s1147 + $0x1a0] sm:$0xff]
        %v1201 = vld [vmem:[%s1147 + $0x1a8] sm:$0xff]
        %v1202 = vld [vmem:[%s1147 + $0x1b0] sm:$0xff]
        %v1203 = vld [vmem:[%s1147 + $0x1b8] sm:$0xff]
        %v1204 = vld [vmem:[%s1147 + $0x1c0] sm:$0xff]
        %v1205 = vld [vmem:[%s1147 + $0x1c8] sm:$0xff]
        %v1206 = vld [vmem:[%s1147 + $0x1d0] sm:$0xff]
        %v1207 = vld [vmem:[%s1147 + $0x1d8] sm:$0xff]
        %v1208 = vld [vmem:[%s1147 + $0x1e0] sm:$0xff]
        %v1209 = vld [vmem:[%s1147 + $0x1e8] sm:$0xff]
        %v1210 = vld [vmem:[%s1147 + $0x1f0] sm:$0xff]
        %v1211 = vld [vmem:[%s1147 + $0x1f8] sm:$0xff]
        %s1212 = scalar_lea.vmem [#allocation2], 2048
        %v1213 = vld [vmem:[%s1212] sm:$0xff]
        %v1214 = vld [vmem:[%s1212 + $0x8] sm:$0xff]
        %v1215 = vld [vmem:[%s1212 + $0x10] sm:$0xff]
        %v1216 = vld [vmem:[%s1212 + $0x18] sm:$0xff]
        %v1217 = vld [vmem:[%s1212 + $0x20] sm:$0xff]
        %v1218 = vld [vmem:[%s1212 + $0x28] sm:$0xff]
        %v1219 = vld [vmem:[%s1212 + $0x30] sm:$0xff]
        %v1220 = vld [vmem:[%s1212 + $0x38] sm:$0xff]
        %v1221 = vld [vmem:[%s1212 + $0x40] sm:$0xff]
        %v1222 = vld [vmem:[%s1212 + $0x48] sm:$0xff]
        %v1223 = vld [vmem:[%s1212 + $0x50] sm:$0xff]
        %v1224 = vld [vmem:[%s1212 + $0x58] sm:$0xff]
        %v1225 = vld [vmem:[%s1212 + $0x60] sm:$0xff]
        %v1226 = vld [vmem:[%s1212 + $0x68] sm:$0xff]
        %v1227 = vld [vmem:[%s1212 + $0x70] sm:$0xff]
        %v1228 = vld [vmem:[%s1212 + $0x78] sm:$0xff]
        %v1229 = vld [vmem:[%s1212 + $0x80] sm:$0xff]
        %v1230 = vld [vmem:[%s1212 + $0x88] sm:$0xff]
        %v1231 = vld [vmem:[%s1212 + $0x90] sm:$0xff]
        %v1232 = vld [vmem:[%s1212 + $0x98] sm:$0xff]
        %v1233 = vld [vmem:[%s1212 + $0xa0] sm:$0xff]
        %v1234 = vld [vmem:[%s1212 + $0xa8] sm:$0xff]
        %v1235 = vld [vmem:[%s1212 + $0xb0] sm:$0xff]
        %v1236 = vld [vmem:[%s1212 + $0xb8] sm:$0xff]
        %v1237 = vld [vmem:[%s1212 + $0xc0] sm:$0xff]
        %v1238 = vld [vmem:[%s1212 + $0xc8] sm:$0xff]
        %v1239 = vld [vmem:[%s1212 + $0xd0] sm:$0xff]
        %v1240 = vld [vmem:[%s1212 + $0xd8] sm:$0xff]
        %v1241 = vld [vmem:[%s1212 + $0xe0] sm:$0xff]
        %v1242 = vld [vmem:[%s1212 + $0xe8] sm:$0xff]
        %v1243 = vld [vmem:[%s1212 + $0xf0] sm:$0xff]
        %v1244 = vld [vmem:[%s1212 + $0xf8] sm:$0xff]
        %v1245 = vld [vmem:[%s1212 + $0x100] sm:$0xff]
        %v1246 = vld [vmem:[%s1212 + $0x108] sm:$0xff]
        %v1247 = vld [vmem:[%s1212 + $0x110] sm:$0xff]
        %v1248 = vld [vmem:[%s1212 + $0x118] sm:$0xff]
        %v1249 = vld [vmem:[%s1212 + $0x120] sm:$0xff]
        %v1250 = vld [vmem:[%s1212 + $0x128] sm:$0xff]
        %v1251 = vld [vmem:[%s1212 + $0x130] sm:$0xff]
        %v1252 = vld [vmem:[%s1212 + $0x138] sm:$0xff]
        %v1253 = vld [vmem:[%s1212 + $0x140] sm:$0xff]
        %v1254 = vld [vmem:[%s1212 + $0x148] sm:$0xff]
        %v1255 = vld [vmem:[%s1212 + $0x150] sm:$0xff]
        %v1256 = vld [vmem:[%s1212 + $0x158] sm:$0xff]
        %v1257 = vld [vmem:[%s1212 + $0x160] sm:$0xff]
        %v1258 = vld [vmem:[%s1212 + $0x168] sm:$0xff]
        %v1259 = vld [vmem:[%s1212 + $0x170] sm:$0xff]
        %v1260 = vld [vmem:[%s1212 + $0x178] sm:$0xff]
        %v1261 = vld [vmem:[%s1212 + $0x180] sm:$0xff]
        %v1262 = vld [vmem:[%s1212 + $0x188] sm:$0xff]
        %v1263 = vld [vmem:[%s1212 + $0x190] sm:$0xff]
        %v1264 = vld [vmem:[%s1212 + $0x198] sm:$0xff]
        %v1265 = vld [vmem:[%s1212 + $0x1a0] sm:$0xff]
        %v1266 = vld [vmem:[%s1212 + $0x1a8] sm:$0xff]
        %v1267 = vld [vmem:[%s1212 + $0x1b0] sm:$0xff]
        %v1268 = vld [vmem:[%s1212 + $0x1b8] sm:$0xff]
        %v1269 = vld [vmem:[%s1212 + $0x1c0] sm:$0xff]
        %v1270 = vld [vmem:[%s1212 + $0x1c8] sm:$0xff]
        %v1271 = vld [vmem:[%s1212 + $0x1d0] sm:$0xff]
        %v1272 = vld [vmem:[%s1212 + $0x1d8] sm:$0xff]
        %v1273 = vld [vmem:[%s1212 + $0x1e0] sm:$0xff]
        %v1274 = vld [vmem:[%s1212 + $0x1e8] sm:$0xff]
        %v1275 = vld [vmem:[%s1212 + $0x1f0] sm:$0xff]
        %v1276 = vld [vmem:[%s1212 + $0x1f8] sm:$0xff]
        %1277 = vmatprep.subr.mxu0 %v1214
        %1278 = vmatpush1.msra.mxu0 %v1213
        %1279 = vmatprep.subr.mxu0 %v1216
        %1280 = vmatpush1.msra.mxu0 %v1215
        %1281 = vmatprep.subr.mxu0 %v1218
        %1282 = vmatpush1.msra.mxu0 %v1217
        %1283 = vmatprep.subr.mxu0 %v1220
        %1284 = vmatpush1.msra.mxu0 %v1219
        %1285 = vmatprep.subr.mxu0 %v1222
        %1286 = vmatpush1.msra.mxu0 %v1221
        %1287 = vmatprep.subr.mxu0 %v1224
        %1288 = vmatpush1.msra.mxu0 %v1223
        %1289 = vmatprep.subr.mxu0 %v1226
        %1290 = vmatpush1.msra.mxu0 %v1225
        %1291 = vmatprep.subr.mxu0 %v1228
        %1292 = vmatpush1.msra.mxu0 %v1227
        %1293 = vmatprep.subr.mxu0 %v1230
        %1294 = vmatpush1.msra.mxu0 %v1229
        %1295 = vmatprep.subr.mxu0 %v1232
        %1296 = vmatpush1.msra.mxu0 %v1231
        %1297 = vmatprep.subr.mxu0 %v1234
        %1298 = vmatpush1.msra.mxu0 %v1233
        %1299 = vmatprep.subr.mxu0 %v1236
        %1300 = vmatpush1.msra.mxu0 %v1235
        %1301 = vmatprep.subr.mxu0 %v1238
        %1302 = vmatpush1.msra.mxu0 %v1237
        %1303 = vmatprep.subr.mxu0 %v1240
        %1304 = vmatpush1.msra.mxu0 %v1239
        %1305 = vmatprep.subr.mxu0 %v1242
        %1306 = vmatpush1.msra.mxu0 %v1241
        %1307 = vmatprep.subr.mxu0 %v1244
        %1308 = vmatpush1.msra.mxu0 %v1243
        %1309 = vmatprep.subr.mxu0 %v1246
        %1310 = vmatpush1.msra.mxu0 %v1245
        %1311 = vmatprep.subr.mxu0 %v1248
        %1312 = vmatpush1.msra.mxu0 %v1247
        %1313 = vmatprep.subr.mxu0 %v1250
        %1314 = vmatpush1.msra.mxu0 %v1249
        %1315 = vmatprep.subr.mxu0 %v1252
        %1316 = vmatpush1.msra.mxu0 %v1251
        %1317 = vmatprep.subr.mxu0 %v1254
        %1318 = vmatpush1.msra.mxu0 %v1253
        %1319 = vmatprep.subr.mxu0 %v1256
        %1320 = vmatpush1.msra.mxu0 %v1255
        %1321 = vmatprep.subr.mxu0 %v1258
        %1322 = vmatpush1.msra.mxu0 %v1257
        %1323 = vmatprep.subr.mxu0 %v1260
        %1324 = vmatpush1.msra.mxu0 %v1259
        %1325 = vmatprep.subr.mxu0 %v1262
        %1326 = vmatpush1.msra.mxu0 %v1261
        %1327 = vmatprep.subr.mxu0 %v1264
        %1328 = vmatpush1.msra.mxu0 %v1263
        %1329 = vmatprep.subr.mxu0 %v1266
        %1330 = vmatpush1.msra.mxu0 %v1265
        %1331 = vmatprep.subr.mxu0 %v1268
        %1332 = vmatpush1.msra.mxu0 %v1267
        %1333 = vmatprep.subr.mxu0 %v1270
        %1334 = vmatpush1.msra.mxu0 %v1269
        %1335 = vmatprep.subr.mxu0 %v1272
        %1336 = vmatpush1.msra.mxu0 %v1271
        %1337 = vmatprep.subr.mxu0 %v1274
        %1338 = vmatpush1.msra.mxu0 %v1273
        %1339 = vmatprep.subr.mxu0 %v1276
        %1340 = vmatpush1.msra.mxu0 %v1275
        %1341 = vmatprep.mubr.f32.mxu0 %v990
        %1342 = vmatmul.mubr.f32.gmra.mrb[0].mxu0 %v989
        %v1343 = vpop.f32.mrb[0].mxu0
        %v1344 = vadd.f32 0.0, %v1343
        %v1345 = vpop.f32.mrb[0].mxu0
        %v1346 = vadd.f32 0.0, %v1345
        %1347 = vmatprep.mubr.f32.mxu0 %v992
        %1348 = vmatmul.mubr.f32.gmra.mrb[0].mxu0 %v991
        %v1349 = vpop.f32.mrb[0].mxu0
        %v1350 = vadd.f32 0.0, %v1349
        %v1351 = vpop.f32.mrb[0].mxu0
        %v1352 = vadd.f32 0.0, %v1351
        %1353 = vdwg.mxu0
        %1354 = vmatprep.subr.mxu0 %v1149
        %1355 = vmatpush1.msra.mxu0 %v1148
        %1356 = vmatprep.subr.mxu0 %v1151
        %1357 = vmatpush1.msra.mxu0 %v1150
        %1358 = vmatprep.subr.mxu0 %v1153
        %1359 = vmatpush1.msra.mxu0 %v1152
        %1360 = vmatprep.subr.mxu0 %v1155
        %1361 = vmatpush1.msra.mxu0 %v1154
        %1362 = vmatprep.subr.mxu0 %v1157
        %1363 = vmatpush1.msra.mxu0 %v1156
        %1364 = vmatprep.subr.mxu0 %v1159
        %1365 = vmatpush1.msra.mxu0 %v1158
        %1366 = vmatprep.subr.mxu0 %v1161
        %1367 = vmatpush1.msra.mxu0 %v1160
        %1368 = vmatprep.subr.mxu0 %v1163
        %1369 = vmatpush1.msra.mxu0 %v1162
        %1370 = vmatprep.subr.mxu0 %v1165
        %1371 = vmatpush1.msra.mxu0 %v1164
        %1372 = vmatprep.subr.mxu0 %v1167
        %1373 = vmatpush1.msra.mxu0 %v1166
        %1374 = vmatprep.subr.mxu0 %v1169
        %1375 = vmatpush1.msra.mxu0 %v1168
        %1376 = vmatprep.subr.mxu0 %v1171
        %1377 = vmatpush1.msra.mxu0 %v1170
        %1378 = vmatprep.subr.mxu0 %v1173
        %1379 = vmatpush1.msra.mxu0 %v1172
        %1380 = vmatprep.subr.mxu0 %v1175
        %1381 = vmatpush1.msra.mxu0 %v1174
        %1382 = vmatprep.subr.mxu0 %v1177
        %1383 = vmatpush1.msra.mxu0 %v1176
        %1384 = vmatprep.subr.mxu0 %v1179
        %1385 = vmatpush1.msra.mxu0 %v1178
        %1386 = vmatprep.subr.mxu0 %v1181
        %1387 = vmatpush1.msra.mxu0 %v1180
        %1388 = vmatprep.subr.mxu0 %v1183
        %1389 = vmatpush1.msra.mxu0 %v1182
        %1390 = vmatprep.subr.mxu0 %v1185
        %1391 = vmatpush1.msra.mxu0 %v1184
        %1392 = vmatprep.subr.mxu0 %v1187
        %1393 = vmatpush1.msra.mxu0 %v1186
        %1394 = vmatprep.subr.mxu0 %v1189
        %1395 = vmatpush1.msra.mxu0 %v1188
        %1396 = vmatprep.subr.mxu0 %v1191
        %1397 = vmatpush1.msra.mxu0 %v1190
        %1398 = vmatprep.subr.mxu0 %v1193
        %1399 = vmatpush1.msra.mxu0 %v1192
        %1400 = vmatprep.subr.mxu0 %v1195
        %1401 = vmatpush1.msra.mxu0 %v1194
        %1402 = vmatprep.subr.mxu0 %v1197
        %1403 = vmatpush1.msra.mxu0 %v1196
        %1404 = vmatprep.subr.mxu0 %v1199
        %1405 = vmatpush1.msra.mxu0 %v1198
        %1406 = vmatprep.subr.mxu0 %v1201
        %1407 = vmatpush1.msra.mxu0 %v1200
        %1408 = vmatprep.subr.mxu0 %v1203
        %1409 = vmatpush1.msra.mxu0 %v1202
        %1410 = vmatprep.subr.mxu0 %v1205
        %1411 = vmatpush1.msra.mxu0 %v1204
        %1412 = vmatprep.subr.mxu0 %v1207
        %1413 = vmatpush1.msra.mxu0 %v1206
        %1414 = vmatprep.subr.mxu0 %v1209
        %1415 = vmatpush1.msra.mxu0 %v1208
        %1416 = vmatprep.subr.mxu0 %v1211
        %1417 = vmatpush1.msra.mxu0 %v1210
        %1418 = vmatprep.mubr.f32.mxu0 %v1062
        %1419 = vmatmul.mubr.f32.gmra.mrb[0].mxu0 %v1060
        %v1420 = vpop.f32.mrb[0].mxu0
        %v1421 = vadd.f32 %v1344, %v1420
        %v1422 = vpop.f32.mrb[0].mxu0
        %v1423 = vadd.f32 %v1346, %v1422
        %1424 = vmatprep.mubr.f32.mxu0 %v1068
        %1425 = vmatmul.mubr.f32.gmra.mrb[0].mxu0 %v1066
        %v1426 = vpop.f32.mrb[0].mxu0
        %v1427 = vadd.f32 %v1350, %v1426
        %v1428 = vpop.f32.mrb[0].mxu0
        %v1429 = vadd.f32 %v1352, %v1428
        %1430 = vdwg.mxu0
        %s1431 = scalar_lea.vmem [#allocation2], 2560
        %v1432 = vld [vmem:[%s1431] sm:$0xff]
        %v1433 = vld [vmem:[%s1431 + $0x8] sm:$0xff]
        %v1434 = vld [vmem:[%s1431 + $0x10] sm:$0xff]
        %v1435 = vld [vmem:[%s1431 + $0x18] sm:$0xff]
        %v1436 = vld [vmem:[%s1431 + $0x20] sm:$0xff]
        %v1437 = vld [vmem:[%s1431 + $0x28] sm:$0xff]
        %v1438 = vld [vmem:[%s1431 + $0x30] sm:$0xff]
        %v1439 = vld [vmem:[%s1431 + $0x38] sm:$0xff]
        %v1440 = vld [vmem:[%s1431 + $0x40] sm:$0xff]
        %v1441 = vld [vmem:[%s1431 + $0x48] sm:$0xff]
        %v1442 = vld [vmem:[%s1431 + $0x50] sm:$0xff]
        %v1443 = vld [vmem:[%s1431 + $0x58] sm:$0xff]
        %v1444 = vld [vmem:[%s1431 + $0x60] sm:$0xff]
        %v1445 = vld [vmem:[%s1431 + $0x68] sm:$0xff]
        %v1446 = vld [vmem:[%s1431 + $0x70] sm:$0xff]
        %v1447 = vld [vmem:[%s1431 + $0x78] sm:$0xff]
        %v1448 = vld [vmem:[%s1431 + $0x80] sm:$0xff]
        %v1449 = vld [vmem:[%s1431 + $0x88] sm:$0xff]
        %v1450 = vld [vmem:[%s1431 + $0x90] sm:$0xff]
        %v1451 = vld [vmem:[%s1431 + $0x98] sm:$0xff]
        %v1452 = vld [vmem:[%s1431 + $0xa0] sm:$0xff]
        %v1453 = vld [vmem:[%s1431 + $0xa8] sm:$0xff]
        %v1454 = vld [vmem:[%s1431 + $0xb0] sm:$0xff]
        %v1455 = vld [vmem:[%s1431 + $0xb8] sm:$0xff]
        %v1456 = vld [vmem:[%s1431 + $0xc0] sm:$0xff]
        %v1457 = vld [vmem:[%s1431 + $0xc8] sm:$0xff]
        %v1458 = vld [vmem:[%s1431 + $0xd0] sm:$0xff]
        %v1459 = vld [vmem:[%s1431 + $0xd8] sm:$0xff]
        %v1460 = vld [vmem:[%s1431 + $0xe0] sm:$0xff]
        %v1461 = vld [vmem:[%s1431 + $0xe8] sm:$0xff]
        %v1462 = vld [vmem:[%s1431 + $0xf0] sm:$0xff]
        %v1463 = vld [vmem:[%s1431 + $0xf8] sm:$0xff]
        %v1464 = vld [vmem:[%s1431 + $0x100] sm:$0xff]
        %v1465 = vld [vmem:[%s1431 + $0x108] sm:$0xff]
        %v1466 = vld [vmem:[%s1431 + $0x110] sm:$0xff]
        %v1467 = vld [vmem:[%s1431 + $0x118] sm:$0xff]
        %v1468 = vld [vmem:[%s1431 + $0x120] sm:$0xff]
        %v1469 = vld [vmem:[%s1431 + $0x128] sm:$0xff]
        %v1470 = vld [vmem:[%s1431 + $0x130] sm:$0xff]
        %v1471 = vld [vmem:[%s1431 + $0x138] sm:$0xff]
        %v1472 = vld [vmem:[%s1431 + $0x140] sm:$0xff]
        %v1473 = vld [vmem:[%s1431 + $0x148] sm:$0xff]
        %v1474 = vld [vmem:[%s1431 + $0x150] sm:$0xff]
        %v1475 = vld [vmem:[%s1431 + $0x158] sm:$0xff]
        %v1476 = vld [vmem:[%s1431 + $0x160] sm:$0xff]
        %v1477 = vld [vmem:[%s1431 + $0x168] sm:$0xff]
        %v1478 = vld [vmem:[%s1431 + $0x170] sm:$0xff]
        %v1479 = vld [vmem:[%s1431 + $0x178] sm:$0xff]
        %v1480 = vld [vmem:[%s1431 + $0x180] sm:$0xff]
        %v1481 = vld [vmem:[%s1431 + $0x188] sm:$0xff]
        %v1482 = vld [vmem:[%s1431 + $0x190] sm:$0xff]
        %v1483 = vld [vmem:[%s1431 + $0x198] sm:$0xff]
        %v1484 = vld [vmem:[%s1431 + $0x1a0] sm:$0xff]
        %v1485 = vld [vmem:[%s1431 + $0x1a8] sm:$0xff]
        %v1486 = vld [vmem:[%s1431 + $0x1b0] sm:$0xff]
        %v1487 = vld [vmem:[%s1431 + $0x1b8] sm:$0xff]
        %v1488 = vld [vmem:[%s1431 + $0x1c0] sm:$0xff]
        %v1489 = vld [vmem:[%s1431 + $0x1c8] sm:$0xff]
        %v1490 = vld [vmem:[%s1431 + $0x1d0] sm:$0xff]
        %v1491 = vld [vmem:[%s1431 + $0x1d8] sm:$0xff]
        %v1492 = vld [vmem:[%s1431 + $0x1e0] sm:$0xff]
        %v1493 = vld [vmem:[%s1431 + $0x1e8] sm:$0xff]
        %v1494 = vld [vmem:[%s1431 + $0x1f0] sm:$0xff]
        %v1495 = vld [vmem:[%s1431 + $0x1f8] sm:$0xff]
        %1496 = vmatprep.subr.mxu0 %v1433
        %1497 = vmatpush1.msra.mxu0 %v1432
        %1498 = vmatprep.subr.mxu0 %v1435
        %1499 = vmatpush1.msra.mxu0 %v1434
        %1500 = vmatprep.subr.mxu0 %v1437
        %1501 = vmatpush1.msra.mxu0 %v1436
        %1502 = vmatprep.subr.mxu0 %v1439
        %1503 = vmatpush1.msra.mxu0 %v1438
        %1504 = vmatprep.subr.mxu0 %v1441
        %1505 = vmatpush1.msra.mxu0 %v1440
        %1506 = vmatprep.subr.mxu0 %v1443
        %1507 = vmatpush1.msra.mxu0 %v1442
        %1508 = vmatprep.subr.mxu0 %v1445
        %1509 = vmatpush1.msra.mxu0 %v1444
        %1510 = vmatprep.subr.mxu0 %v1447
        %1511 = vmatpush1.msra.mxu0 %v1446
        %1512 = vmatprep.subr.mxu0 %v1449
        %1513 = vmatpush1.msra.mxu0 %v1448
        %1514 = vmatprep.subr.mxu0 %v1451
        %1515 = vmatpush1.msra.mxu0 %v1450
        %1516 = vmatprep.subr.mxu0 %v1453
        %1517 = vmatpush1.msra.mxu0 %v1452
        %1518 = vmatprep.subr.mxu0 %v1455
        %1519 = vmatpush1.msra.mxu0 %v1454
        %1520 = vmatprep.subr.mxu0 %v1457
        %1521 = vmatpush1.msra.mxu0 %v1456
        %1522 = vmatprep.subr.mxu0 %v1459
        %1523 = vmatpush1.msra.mxu0 %v1458
        %1524 = vmatprep.subr.mxu0 %v1461
        %1525 = vmatpush1.msra.mxu0 %v1460
        %1526 = vmatprep.subr.mxu0 %v1463
        %1527 = vmatpush1.msra.mxu0 %v1462
        %1528 = vmatprep.subr.mxu0 %v1465
        %1529 = vmatpush1.msra.mxu0 %v1464
        %1530 = vmatprep.subr.mxu0 %v1467
        %1531 = vmatpush1.msra.mxu0 %v1466
        %1532 = vmatprep.subr.mxu0 %v1469
        %1533 = vmatpush1.msra.mxu0 %v1468
        %1534 = vmatprep.subr.mxu0 %v1471
        %1535 = vmatpush1.msra.mxu0 %v1470
        %1536 = vmatprep.subr.mxu0 %v1473
        %1537 = vmatpush1.msra.mxu0 %v1472
        %1538 = vmatprep.subr.mxu0 %v1475
        %1539 = vmatpush1.msra.mxu0 %v1474
        %1540 = vmatprep.subr.mxu0 %v1477
        %1541 = vmatpush1.msra.mxu0 %v1476
        %1542 = vmatprep.subr.mxu0 %v1479
        %1543 = vmatpush1.msra.mxu0 %v1478
        %1544 = vmatprep.subr.mxu0 %v1481
        %1545 = vmatpush1.msra.mxu0 %v1480
        %1546 = vmatprep.subr.mxu0 %v1483
        %1547 = vmatpush1.msra.mxu0 %v1482
        %1548 = vmatprep.subr.mxu0 %v1485
        %1549 = vmatpush1.msra.mxu0 %v1484
        %1550 = vmatprep.subr.mxu0 %v1487
        %1551 = vmatpush1.msra.mxu0 %v1486
        %1552 = vmatprep.subr.mxu0 %v1489
        %1553 = vmatpush1.msra.mxu0 %v1488
        %1554 = vmatprep.subr.mxu0 %v1491
        %1555 = vmatpush1.msra.mxu0 %v1490
        %1556 = vmatprep.subr.mxu0 %v1493
        %1557 = vmatpush1.msra.mxu0 %v1492
        %1558 = vmatprep.subr.mxu0 %v1495
        %1559 = vmatpush1.msra.mxu0 %v1494
        %1560 = vmatprep.mubr.f32.mxu0 %v1139
        %1561 = vmatmul.mubr.f32.gmra.mrb[0].mxu0 %v1137
        %v1562 = vpop.f32.mrb[0].mxu0
        %v1563 = vadd.f32 0.0, %v1562
        %v1564 = vpop.f32.mrb[0].mxu0
        %v1565 = vadd.f32 0.0, %v1564
        %1566 = vmatprep.mubr.f32.mxu0 %v1145
        %1567 = vmatmul.mubr.f32.gmra.mrb[0].mxu0 %v1143
        %v1568 = vpop.f32.mrb[0].mxu0
        %v1569 = vadd.f32 0.0, %v1568
        %v1570 = vpop.f32.mrb[0].mxu0
        %v1571 = vadd.f32 0.0, %v1570
        %1572 = vdwg.mxu0
        %v1573 = vadd.f32 %v1421, %v1563
        %v1574 = vadd.f32 %v1423, %v1565
        %v1575 = vadd.f32 %v1427, %v1569
        %v1576 = vadd.f32 %v1429, %v1571
        %s1577 = scalar_lea.vmem [#allocation4], 2
        %v1578 = vld [vmem:[%s1577] sm:$0x3]
        %v1580 = vlaneseq
        %v1581 = vshrl.u32 %v1580, 7
        %v1582 = vsub.s32 0, %v1581
        %v1583 = vrot.slane %v1578, %v1582
        %v1584 = vlaneseq
        %v1585 = vshrl.u32 %v1584, 7
        %v1586 = vsub.s32 1, %v1585
        %v1587 = vrot.slane %v1578, %v1586
        %v1590 = vadd.f32 %v1573, %v1583
        %v1591 = vadd.f32 %v1574, %v1587
        %v1592 = vadd.f32 %v1575, %v1583
        %v1593 = vadd.f32 %v1576, %v1587
        %v1594 = vadd.f32 %v1590, %v1592
        %v1595 = vrot.slane %v1594, 4
        %v1596 = vadd.f32 %v1594, %v1595
        %v1597 = vrot.slane %v1596, 2
        %v1598 = vadd.f32 %v1596, %v1597
        %v1599 = vrot.slane %v1598, 1
        %v1600 = vadd.f32 %v1598, %v1599
        %v1601 = vadd.f32 %v1591, %v1593
        %v1602 = vrot.slane %v1601, 4
        %v1603 = vadd.f32 %v1601, %v1602
        %v1604 = vrot.slane %v1603, 2
        %v1605 = vadd.f32 %v1603, %v1604
        %v1606 = vrot.slane %v1605, 1
        %v1607 = vadd.f32 %v1605, %v1606
        %v1608 = vmul.f32 %v1600, 0.00390625
        %v1609 = vmul.f32 %v1607, 0.00390625
        %v1610 = vld [vmem:[%s3] sm:$0xff]
        %v1611 = vld [vmem:[%s3 + $0x8] sm:$0xff]
        %v1612 = vld [vmem:[%s3 + $0x10] sm:$0xff]
        %v1613 = vld [vmem:[%s3 + $0x18] sm:$0xff]
        %v1614 = vld [vmem:[%s3 + $0x20] sm:$0xff]
        %v1615 = vld [vmem:[%s3 + $0x28] sm:$0xff]
        %v1616 = vld [vmem:[%s3 + $0x30] sm:$0xff]
        %v1617 = vld [vmem:[%s3 + $0x38] sm:$0xff]
        %v1618 = vld [vmem:[%s3 + $0x40] sm:$0xff]
        %v1619 = vld [vmem:[%s3 + $0x48] sm:$0xff]
        %v1620 = vld [vmem:[%s3 + $0x50] sm:$0xff]
        %v1621 = vld [vmem:[%s3 + $0x58] sm:$0xff]
        %v1622 = vld [vmem:[%s3 + $0x60] sm:$0xff]
        %v1623 = vld [vmem:[%s3 + $0x68] sm:$0xff]
        %v1624 = vld [vmem:[%s3 + $0x70] sm:$0xff]
        %v1625 = vld [vmem:[%s3 + $0x78] sm:$0xff]
        %v1626 = vld [vmem:[%s3 + $0x80] sm:$0xff]
        %v1627 = vld [vmem:[%s3 + $0x88] sm:$0xff]
        %v1628 = vld [vmem:[%s3 + $0x90] sm:$0xff]
        %v1629 = vld [vmem:[%s3 + $0x98] sm:$0xff]
        %v1630 = vld [vmem:[%s3 + $0xa0] sm:$0xff]
        %v1631 = vld [vmem:[%s3 + $0xa8] sm:$0xff]
        %v1632 = vld [vmem:[%s3 + $0xb0] sm:$0xff]
        %v1633 = vld [vmem:[%s3 + $0xb8] sm:$0xff]
        %v1634 = vld [vmem:[%s3 + $0xc0] sm:$0xff]
        %v1635 = vld [vmem:[%s3 + $0xc8] sm:$0xff]
        %v1636 = vld [vmem:[%s3 + $0xd0] sm:$0xff]
        %v1637 = vld [vmem:[%s3 + $0xd8] sm:$0xff]
        %v1638 = vld [vmem:[%s3 + $0xe0] sm:$0xff]
        %v1639 = vld [vmem:[%s3 + $0xe8] sm:$0xff]
        %v1640 = vld [vmem:[%s3 + $0xf0] sm:$0xff]
        %v1641 = vld [vmem:[%s3 + $0xf8] sm:$0xff]
        %v1642 = vld [vmem:[#allocation6] sm:$0x1]
        %1643 = vmatprep.subr.mxu0 0.0
        %1644 = vmatpush1.msra.mxu0 %v1610
        %1645 = vmatprep.subr.mxu0 0.0
        %1646 = vmatpush1.msra.mxu0 %v1611
        %1647 = vmatprep.subr.mxu0 0.0
        %1648 = vmatpush1.msra.mxu0 %v1612
        %1649 = vmatprep.subr.mxu0 0.0
        %1650 = vmatpush1.msra.mxu0 %v1613
        %1651 = vmatprep.subr.mxu0 0.0
        %1652 = vmatpush1.msra.mxu0 %v1614
        %1653 = vmatprep.subr.mxu0 0.0
        %1654 = vmatpush1.msra.mxu0 %v1615
        %1655 = vmatprep.subr.mxu0 0.0
        %1656 = vmatpush1.msra.mxu0 %v1616
        %1657 = vmatprep.subr.mxu0 0.0
        %1658 = vmatpush1.msra.mxu0 %v1617
        %1659 = vmatprep.subr.mxu0 0.0
        %1660 = vmatpush1.msra.mxu0 %v1618
        %1661 = vmatprep.subr.mxu0 0.0
        %1662 = vmatpush1.msra.mxu0 %v1619
        %1663 = vmatprep.subr.mxu0 0.0
        %1664 = vmatpush1.msra.mxu0 %v1620
        %1665 = vmatprep.subr.mxu0 0.0
        %1666 = vmatpush1.msra.mxu0 %v1621
        %1667 = vmatprep.subr.mxu0 0.0
        %1668 = vmatpush1.msra.mxu0 %v1622
        %1669 = vmatprep.subr.mxu0 0.0
        %1670 = vmatpush1.msra.mxu0 %v1623
        %1671 = vmatprep.subr.mxu0 0.0
        %1672 = vmatpush1.msra.mxu0 %v1624
        %1673 = vmatprep.subr.mxu0 0.0
        %1674 = vmatpush1.msra.mxu0 %v1625
        %1675 = vmatprep.subr.mxu0 0.0
        %1676 = vmatpush1.msra.mxu0 %v1626
        %1677 = vmatprep.subr.mxu0 0.0
        %1678 = vmatpush1.msra.mxu0 %v1627
        %1679 = vmatprep.subr.mxu0 0.0
        %1680 = vmatpush1.msra.mxu0 %v1628
        %1681 = vmatprep.subr.mxu0 0.0
        %1682 = vmatpush1.msra.mxu0 %v1629
        %1683 = vmatprep.subr.mxu0 0.0
        %1684 = vmatpush1.msra.mxu0 %v1630
        %1685 = vmatprep.subr.mxu0 0.0
        %1686 = vmatpush1.msra.mxu0 %v1631
        %1687 = vmatprep.subr.mxu0 0.0
        %1688 = vmatpush1.msra.mxu0 %v1632
        %1689 = vmatprep.subr.mxu0 0.0
        %1690 = vmatpush1.msra.mxu0 %v1633
        %1691 = vmatprep.subr.mxu0 0.0
        %1692 = vmatpush1.msra.mxu0 %v1634
        %1693 = vmatprep.subr.mxu0 0.0
        %1694 = vmatpush1.msra.mxu0 %v1635
        %1695 = vmatprep.subr.mxu0 0.0
        %1696 = vmatpush1.msra.mxu0 %v1636
        %1697 = vmatprep.subr.mxu0 0.0
        %1698 = vmatpush1.msra.mxu0 %v1637
        %1699 = vmatprep.subr.mxu0 0.0
        %1700 = vmatpush1.msra.mxu0 %v1638
        %1701 = vmatprep.subr.mxu0 0.0
        %1702 = vmatpush1.msra.mxu0 %v1639
        %1703 = vmatprep.subr.mxu0 0.0
        %1704 = vmatpush1.msra.mxu0 %v1640
        %1705 = vmatprep.subr.mxu0 0.0
        %1706 = vmatpush1.msra.mxu0 %v1641
        %1707 = vmatprep.mubr.f32.mxu0 %v1609
        %1708 = vmatmul.mubr.f32.gmra.mrb[0].mxu0 %v1608
        %v1709 = vpop.f32.mrb[0].mxu0
        %v1710 = vadd.f32 %v1642, %v1709
        %v1711 = vpop.f32.mrb[0].mxu0
        %1712 = vdwg.mxu0
        %v1713 = vmax.f32 %v1710, 0.0
        %v1714 = vld [vmem:[#allocation7] sm:$0xff]
        %v1715 = vld [vmem:[#allocation9] sm:$0x3]
        %v1717 = vcombine.high %v1714, %v1714
        %v1719 = vlaneseq
        %v1720 = vshrl.u32 %v1719, 7
        %v1721 = vsub.s32 0, %v1720
        %v1722 = vrot.slane %v1715, %v1721
        %v1723 = vlaneseq
        %v1724 = vshrl.u32 %v1723, 7
        %v1725 = vsub.s32 1, %v1724
        %v1726 = vrot.slane %v1715, %v1725
        %vm1729 = vcmask 31744
        %v1731 = vsel %vm1729, %v1713, 0
        %vm1733 = vcmask 1043456
        %v1734 = vsel %vm1733, %v1714, 0
        %v1736 = vsel %vm1733, %v1717, 0
        %1738 = vmatprep.subr.mxu0 %v1736
        %1739 = vmatpush1.msra.mxu0 %v1734
        %1740 = vmatprep.subr.mxu0 0.0
        %1741 = vmatpush1.msra.mxu0 0.0
        %1742 = vmatprep.subr.mxu0 0.0
        %1743 = vmatpush1.msra.mxu0 0.0
        %1744 = vmatprep.subr.mxu0 0.0
        %1745 = vmatpush1.msra.mxu0 0.0
        %1746 = vmatprep.subr.mxu0 0.0
        %1747 = vmatpush1.msra.mxu0 0.0
        %1748 = vmatprep.subr.mxu0 0.0
        %1749 = vmatpush1.msra.mxu0 0.0
        %1750 = vmatprep.subr.mxu0 0.0
        %1751 = vmatpush1.msra.mxu0 0.0
        %1752 = vmatprep.subr.mxu0 0.0
        %1753 = vmatpush1.msra.mxu0 0.0
        %1754 = vmatprep.subr.mxu0 0.0
        %1755 = vmatpush1.msra.mxu0 0.0
        %1756 = vmatprep.subr.mxu0 0.0
        %1757 = vmatpush1.msra.mxu0 0.0
        %1758 = vmatprep.subr.mxu0 0.0
        %1759 = vmatpush1.msra.mxu0 0.0
        %1760 = vmatprep.subr.mxu0 0.0
        %1761 = vmatpush1.msra.mxu0 0.0
        %1762 = vmatprep.subr.mxu0 0.0
        %1763 = vmatpush1.msra.mxu0 0.0
        %1764 = vmatprep.subr.mxu0 0.0
        %1765 = vmatpush1.msra.mxu0 0.0
        %1766 = vmatprep.subr.mxu0 0.0
        %1767 = vmatpush1.msra.mxu0 0.0
        %1768 = vmatprep.subr.mxu0 0.0
        %1769 = vmatpush1.msra.mxu0 0.0
        %1770 = vmatprep.subr.mxu0 0.0
        %1771 = vmatpush1.msra.mxu0 0.0
        %1772 = vmatprep.subr.mxu0 0.0
        %1773 = vmatpush1.msra.mxu0 0.0
        %1774 = vmatprep.subr.mxu0 0.0
        %1775 = vmatpush1.msra.mxu0 0.0
        %1776 = vmatprep.subr.mxu0 0.0
        %1777 = vmatpush1.msra.mxu0 0.0
        %1778 = vmatprep.subr.mxu0 0.0
        %1779 = vmatpush1.msra.mxu0 0.0
        %1780 = vmatprep.subr.mxu0 0.0
        %1781 = vmatpush1.msra.mxu0 0.0
        %1782 = vmatprep.subr.mxu0 0.0
        %1783 = vmatpush1.msra.mxu0 0.0
        %1784 = vmatprep.subr.mxu0 0.0
        %1785 = vmatpush1.msra.mxu0 0.0
        %1786 = vmatprep.subr.mxu0 0.0
        %1787 = vmatpush1.msra.mxu0 0.0
        %1788 = vmatprep.subr.mxu0 0.0
        %1789 = vmatpush1.msra.mxu0 0.0
        %1790 = vmatprep.subr.mxu0 0.0
        %1791 = vmatpush1.msra.mxu0 0.0
        %1792 = vmatprep.subr.mxu0 0.0
        %1793 = vmatpush1.msra.mxu0 0.0
        %1794 = vmatprep.subr.mxu0 0.0
        %1795 = vmatpush1.msra.mxu0 0.0
        %1796 = vmatprep.subr.mxu0 0.0
        %1797 = vmatpush1.msra.mxu0 0.0
        %1798 = vmatprep.subr.mxu0 0.0
        %1799 = vmatpush1.msra.mxu0 0.0
        %1800 = vmatprep.subr.mxu0 0.0
        %1801 = vmatpush1.msra.mxu0 0.0
        %1802 = vmatprep.mubr.f32.mxu0 0.0
        %1803 = vmatmul.mubr.f32.gmra.mrb[0].mxu0 %v1731
        %v1804 = vpop.f32.mrb[0].mxu0
        %v1805 = vadd.f32 %v1722, %v1804
        %v1806 = vpop.f32.mrb[0].mxu0
        %v1807 = vadd.f32 %v1726, %v1806
        %1808 = vdwg.mxu0
        %v1809 = vxor.u32 %v1805, 2147483648
        %v1810 = vxor.u32 %v1807, 2147483648
        %v1811 = vmul.f32 %v1809, 1.442695
        %v1812 = vpow.pop %v1811
        %v1813 = vmul.f32 %v1810, 1.442695
        %v1814 = vpow.pop %v1813
        %v1815 = vadd.f32 %v1812, 1.0
        %v1816 = vadd.f32 %v1814, 1.0
        %v1817 = vrcp.pop %v1815
        %v1818 = vmul.f32 1.0, %v1817
        %v1819 = vrcp.pop %v1816
        %v1820 = vmul.f32 1.0, %v1819
        %v1821 = vlaneseq
        %v1822 = vshrl.u32 %v1821, 7
        %v1823 = vsub.s32 0, %v1822
        %v1824 = vrot.slane %v1818, %v1823
        %v1825 = vlaneseq
        %v1826 = vshrl.u32 %v1825, 7
        %v1827 = vsub.s32 0, %v1826
        %v1828 = vrot.slane %v1820, %v1827
        %v1829 = vmul.f32 %v1590, %v1824
        %v1830 = vmul.f32 %v1591, %v1828
        %v1831 = vmul.f32 %v1592, %v1824
        %v1832 = vmul.f32 %v1593, %v1828
        %v1833 = vadd.f32 %v1829, %v352
        %v1834 = vadd.f32 %v1830, %v353
        %v1835 = vadd.f32 %v1831, %v354
        %v1836 = vadd.f32 %v1832, %v355
        %1837 = vmatprep.subr.mxu0 %v1834
        %1838 = vmatpush1.msra.mxu0 %v1833
        %1839 = vmatprep.subr.mxu0 %v1836
        %1840 = vmatpush1.msra.mxu0 %v1835
        %1841 = vmatprep.subr.mxu0 0.0
        %1842 = vmatpush1.msra.mxu0 0.0
        %1843 = vmatprep.subr.mxu0 0.0
        %1844 = vmatpush1.msra.mxu0 0.0
        %1845 = vmatprep.subr.mxu0 0.0
        %1846 = vmatpush1.msra.mxu0 0.0
        %1847 = vmatprep.subr.mxu0 0.0
        %1848 = vmatpush1.msra.mxu0 0.0
        %1849 = vmatprep.subr.mxu0 0.0
        %1850 = vmatpush1.msra.mxu0 0.0
        %1851 = vmatprep.subr.mxu0 0.0
        %1852 = vmatpush1.msra.mxu0 0.0
        %1853 = vmatprep.subr.mxu0 0.0
        %1854 = vmatpush1.msra.mxu0 0.0
        %1855 = vmatprep.subr.mxu0 0.0
        %1856 = vmatpush1.msra.mxu0 0.0
        %1857 = vmatprep.subr.mxu0 0.0
        %1858 = vmatpush1.msra.mxu0 0.0
        %1859 = vmatprep.subr.mxu0 0.0
        %1860 = vmatpush1.msra.mxu0 0.0
        %1861 = vmatprep.subr.mxu0 0.0
        %1862 = vmatpush1.msra.mxu0 0.0
        %1863 = vmatprep.subr.mxu0 0.0
        %1864 = vmatpush1.msra.mxu0 0.0
        %1865 = vmatprep.subr.mxu0 0.0
        %1866 = vmatpush1.msra.mxu0 0.0
        %1867 = vmatprep.subr.mxu0 0.0
        %1868 = vmatpush1.msra.mxu0 0.0
        %1869 = vmatprep.subr.mxu0 0.0
        %1870 = vmatpush1.msra.mxu0 0.0
        %1871 = vmatprep.subr.mxu0 0.0
        %1872 = vmatpush1.msra.mxu0 0.0
        %1873 = vmatprep.subr.mxu0 0.0
        %1874 = vmatpush1.msra.mxu0 0.0
        %1875 = vmatprep.subr.mxu0 0.0
        %1876 = vmatpush1.msra.mxu0 0.0
        %1877 = vmatprep.subr.mxu0 0.0
        %1878 = vmatpush1.msra.mxu0 0.0
        %1879 = vmatprep.subr.mxu0 0.0
        %1880 = vmatpush1.msra.mxu0 0.0
        %1881 = vmatprep.subr.mxu0 0.0
        %1882 = vmatpush1.msra.mxu0 0.0
        %1883 = vmatprep.subr.mxu0 0.0
        %1884 = vmatpush1.msra.mxu0 0.0
        %1885 = vmatprep.subr.mxu0 0.0
        %1886 = vmatpush1.msra.mxu0 0.0
        %1887 = vmatprep.subr.mxu0 0.0
        %1888 = vmatpush1.msra.mxu0 0.0
        %1889 = vmatprep.subr.mxu0 0.0
        %1890 = vmatpush1.msra.mxu0 0.0
        %1891 = vmatprep.subr.mxu0 0.0
        %1892 = vmatpush1.msra.mxu0 0.0
        %1893 = vmatprep.subr.mxu0 0.0
        %1894 = vmatpush1.msra.mxu0 0.0
        %1895 = vmatprep.subr.mxu0 0.0
        %1896 = vmatpush1.msra.mxu0 0.0
        %1897 = vmatprep.subr.mxu0 0.0
        %1898 = vmatpush1.msra.mxu0 0.0
        %1899 = vmatprep.subr.mxu0 0.0
        %1900 = vmatpush1.msra.mxu0 0.0
        %1901 = vmatprep.mubr.f32.mxu0 0.0
        %1902 = vmatmul.mubr.f32.gmra.mrb[0].mxu0 %v379
        %v1903 = vpop.f32.mrb[0].mxu0
        %v1904 = vadd.f32 0.0, %v1903
        %v1905 = vpop.f32.mrb[0].mxu0
        %v1906 = vadd.f32 0.0, %v1905
        %1907 = vmatprep.mubr.f32.mxu0 0.0
        %1908 = vmatmul.mubr.f32.gmra.mrb[0].mxu0 %v382
        %v1909 = vpop.f32.mrb[0].mxu0
        %v1910 = vadd.f32 0.0, %v1909
        %v1911 = vpop.f32.mrb[0].mxu0
        %v1912 = vadd.f32 0.0, %v1911
        %1913 = vdwg.mxu0
        %1914 = vmatprep.subr.mxu0 %v1834
        %1915 = vmatpush1.msra.mxu0 %v1833
        %1916 = vmatprep.subr.mxu0 %v1836
        %1917 = vmatpush1.msra.mxu0 %v1835
        %1918 = vmatprep.subr.mxu0 0.0
        %1919 = vmatpush1.msra.mxu0 0.0
        %1920 = vmatprep.subr.mxu0 0.0
        %1921 = vmatpush1.msra.mxu0 0.0
        %1922 = vmatprep.subr.mxu0 0.0
        %1923 = vmatpush1.msra.mxu0 0.0
        %1924 = vmatprep.subr.mxu0 0.0
        %1925 = vmatpush1.msra.mxu0 0.0
        %1926 = vmatprep.subr.mxu0 0.0
        %1927 = vmatpush1.msra.mxu0 0.0
        %1928 = vmatprep.subr.mxu0 0.0
        %1929 = vmatpush1.msra.mxu0 0.0
        %1930 = vmatprep.subr.mxu0 0.0
        %1931 = vmatpush1.msra.mxu0 0.0
        %1932 = vmatprep.subr.mxu0 0.0
        %1933 = vmatpush1.msra.mxu0 0.0
        %1934 = vmatprep.subr.mxu0 0.0
        %1935 = vmatpush1.msra.mxu0 0.0
        %1936 = vmatprep.subr.mxu0 0.0
        %1937 = vmatpush1.msra.mxu0 0.0
        %1938 = vmatprep.subr.mxu0 0.0
        %1939 = vmatpush1.msra.mxu0 0.0
        %1940 = vmatprep.subr.mxu0 0.0
        %1941 = vmatpush1.msra.mxu0 0.0
        %1942 = vmatprep.subr.mxu0 0.0
        %1943 = vmatpush1.msra.mxu0 0.0
        %1944 = vmatprep.subr.mxu0 0.0
        %1945 = vmatpush1.msra.mxu0 0.0
        %1946 = vmatprep.subr.mxu0 0.0
        %1947 = vmatpush1.msra.mxu0 0.0
        %1948 = vmatprep.subr.mxu0 0.0
        %1949 = vmatpush1.msra.mxu0 0.0
        %1950 = vmatprep.subr.mxu0 0.0
        %1951 = vmatpush1.msra.mxu0 0.0
        %1952 = vmatprep.subr.mxu0 0.0
        %1953 = vmatpush1.msra.mxu0 0.0
        %1954 = vmatprep.subr.mxu0 0.0
        %1955 = vmatpush1.msra.mxu0 0.0
        %1956 = vmatprep.subr.mxu0 0.0
        %1957 = vmatpush1.msra.mxu0 0.0
        %1958 = vmatprep.subr.mxu0 0.0
        %1959 = vmatpush1.msra.mxu0 0.0
        %1960 = vmatprep.subr.mxu0 0.0
        %1961 = vmatpush1.msra.mxu0 0.0
        %1962 = vmatprep.subr.mxu0 0.0
        %1963 = vmatpush1.msra.mxu0 0.0
        %1964 = vmatprep.subr.mxu0 0.0
        %1965 = vmatpush1.msra.mxu0 0.0
        %1966 = vmatprep.subr.mxu0 0.0
        %1967 = vmatpush1.msra.mxu0 0.0
        %1968 = vmatprep.subr.mxu0 0.0
        %1969 = vmatpush1.msra.mxu0 0.0
        %1970 = vmatprep.subr.mxu0 0.0
        %1971 = vmatpush1.msra.mxu0 0.0
        %1972 = vmatprep.subr.mxu0 0.0
        %1973 = vmatpush1.msra.mxu0 0.0
        %1974 = vmatprep.subr.mxu0 0.0
        %1975 = vmatpush1.msra.mxu0 0.0
        %1976 = vmatprep.subr.mxu0 0.0
        %1977 = vmatpush1.msra.mxu0 0.0
        %1978 = vmatprep.mubr.f32.mxu0 0.0
        %1979 = vmatmul.mubr.f32.gmra.mrb[0].mxu0 %v462
        %v1980 = vpop.f32.mrb[0].mxu0
        %v1981 = vadd.f32 0.0, %v1980
        %v1982 = vpop.f32.mrb[0].mxu0
        %v1983 = vadd.f32 0.0, %v1982
        %1984 = vmatprep.mubr.f32.mxu0 0.0
        %1985 = vmatmul.mubr.f32.gmra.mrb[0].mxu0 %v465
        %v1986 = vpop.f32.mrb[0].mxu0
        %v1987 = vadd.f32 0.0, %v1986
        %v1988 = vpop.f32.mrb[0].mxu0
        %v1989 = vadd.f32 0.0, %v1988
        %1990 = vdwg.mxu0
        %s1991 = scalar_lea.vmem [#allocation2], 3072
        %v1992 = vld [vmem:[%s1991] sm:$0xff]
        %v1993 = vld [vmem:[%s1991 + $0x8] sm:$0xff]
        %v1994 = vld [vmem:[%s1991 + $0x10] sm:$0xff]
        %v1995 = vld [vmem:[%s1991 + $0x18] sm:$0xff]
        %v1996 = vld [vmem:[%s1991 + $0x20] sm:$0xff]
        %v1997 = vld [vmem:[%s1991 + $0x28] sm:$0xff]
        %v1998 = vld [vmem:[%s1991 + $0x30] sm:$0xff]
        %v1999 = vld [vmem:[%s1991 + $0x38] sm:$0xff]
        %v2000 = vld [vmem:[%s1991 + $0x40] sm:$0xff]
        %v2001 = vld [vmem:[%s1991 + $0x48] sm:$0xff]
        %v2002 = vld [vmem:[%s1991 + $0x50] sm:$0xff]
        %v2003 = vld [vmem:[%s1991 + $0x58] sm:$0xff]
        %v2004 = vld [vmem:[%s1991 + $0x60] sm:$0xff]
        %v2005 = vld [vmem:[%s1991 + $0x68] sm:$0xff]
        %v2006 = vld [vmem:[%s1991 + $0x70] sm:$0xff]
        %v2007 = vld [vmem:[%s1991 + $0x78] sm:$0xff]
        %v2008 = vld [vmem:[%s1991 + $0x80] sm:$0xff]
        %v2009 = vld [vmem:[%s1991 + $0x88] sm:$0xff]
        %v2010 = vld [vmem:[%s1991 + $0x90] sm:$0xff]
        %v2011 = vld [vmem:[%s1991 + $0x98] sm:$0xff]
        %v2012 = vld [vmem:[%s1991 + $0xa0] sm:$0xff]
        %v2013 = vld [vmem:[%s1991 + $0xa8] sm:$0xff]
        %v2014 = vld [vmem:[%s1991 + $0xb0] sm:$0xff]
        %v2015 = vld [vmem:[%s1991 + $0xb8] sm:$0xff]
        %v2016 = vld [vmem:[%s1991 + $0xc0] sm:$0xff]
        %v2017 = vld [vmem:[%s1991 + $0xc8] sm:$0xff]
        %v2018 = vld [vmem:[%s1991 + $0xd0] sm:$0xff]
        %v2019 = vld [vmem:[%s1991 + $0xd8] sm:$0xff]
        %v2020 = vld [vmem:[%s1991 + $0xe0] sm:$0xff]
        %v2021 = vld [vmem:[%s1991 + $0xe8] sm:$0xff]
        %v2022 = vld [vmem:[%s1991 + $0xf0] sm:$0xff]
        %v2023 = vld [vmem:[%s1991 + $0xf8] sm:$0xff]
        %v2024 = vld [vmem:[%s1991 + $0x100] sm:$0xff]
        %v2025 = vld [vmem:[%s1991 + $0x108] sm:$0xff]
        %v2026 = vld [vmem:[%s1991 + $0x110] sm:$0xff]
        %v2027 = vld [vmem:[%s1991 + $0x118] sm:$0xff]
        %v2028 = vld [vmem:[%s1991 + $0x120] sm:$0xff]
        %v2029 = vld [vmem:[%s1991 + $0x128] sm:$0xff]
        %v2030 = vld [vmem:[%s1991 + $0x130] sm:$0xff]
        %v2031 = vld [vmem:[%s1991 + $0x138] sm:$0xff]
        %v2032 = vld [vmem:[%s1991 + $0x140] sm:$0xff]
        %v2033 = vld [vmem:[%s1991 + $0x148] sm:$0xff]
        %v2034 = vld [vmem:[%s1991 + $0x150] sm:$0xff]
        %v2035 = vld [vmem:[%s1991 + $0x158] sm:$0xff]
        %v2036 = vld [vmem:[%s1991 + $0x160] sm:$0xff]
        %v2037 = vld [vmem:[%s1991 + $0x168] sm:$0xff]
        %v2038 = vld [vmem:[%s1991 + $0x170] sm:$0xff]
        %v2039 = vld [vmem:[%s1991 + $0x178] sm:$0xff]
        %v2040 = vld [vmem:[%s1991 + $0x180] sm:$0xff]
        %v2041 = vld [vmem:[%s1991 + $0x188] sm:$0xff]
        %v2042 = vld [vmem:[%s1991 + $0x190] sm:$0xff]
        %v2043 = vld [vmem:[%s1991 + $0x198] sm:$0xff]
        %v2044 = vld [vmem:[%s1991 + $0x1a0] sm:$0xff]
        %v2045 = vld [vmem:[%s1991 + $0x1a8] sm:$0xff]
        %v2046 = vld [vmem:[%s1991 + $0x1b0] sm:$0xff]
        %v2047 = vld [vmem:[%s1991 + $0x1b8] sm:$0xff]
        %v2048 = vld [vmem:[%s1991 + $0x1c0] sm:$0xff]
        %v2049 = vld [vmem:[%s1991 + $0x1c8] sm:$0xff]
        %v2050 = vld [vmem:[%s1991 + $0x1d0] sm:$0xff]
        %v2051 = vld [vmem:[%s1991 + $0x1d8] sm:$0xff]
        %v2052 = vld [vmem:[%s1991 + $0x1e0] sm:$0xff]
        %v2053 = vld [vmem:[%s1991 + $0x1e8] sm:$0xff]
        %v2054 = vld [vmem:[%s1991 + $0x1f0] sm:$0xff]
        %v2055 = vld [vmem:[%s1991 + $0x1f8] sm:$0xff]
        %s2056 = scalar_lea.vmem [#allocation2], 3584
        %v2057 = vld [vmem:[%s2056] sm:$0xff]
        %v2058 = vld [vmem:[%s2056 + $0x8] sm:$0xff]
        %v2059 = vld [vmem:[%s2056 + $0x10] sm:$0xff]
        %v2060 = vld [vmem:[%s2056 + $0x18] sm:$0xff]
        %v2061 = vld [vmem:[%s2056 + $0x20] sm:$0xff]
        %v2062 = vld [vmem:[%s2056 + $0x28] sm:$0xff]
        %v2063 = vld [vmem:[%s2056 + $0x30] sm:$0xff]
        %v2064 = vld [vmem:[%s2056 + $0x38] sm:$0xff]
        %v2065 = vld [vmem:[%s2056 + $0x40] sm:$0xff]
        %v2066 = vld [vmem:[%s2056 + $0x48] sm:$0xff]
        %v2067 = vld [vmem:[%s2056 + $0x50] sm:$0xff]
        %v2068 = vld [vmem:[%s2056 + $0x58] sm:$0xff]
        %v2069 = vld [vmem:[%s2056 + $0x60] sm:$0xff]
        %v2070 = vld [vmem:[%s2056 + $0x68] sm:$0xff]
        %v2071 = vld [vmem:[%s2056 + $0x70] sm:$0xff]
        %v2072 = vld [vmem:[%s2056 + $0x78] sm:$0xff]
        %v2073 = vld [vmem:[%s2056 + $0x80] sm:$0xff]
        %v2074 = vld [vmem:[%s2056 + $0x88] sm:$0xff]
        %v2075 = vld [vmem:[%s2056 + $0x90] sm:$0xff]
        %v2076 = vld [vmem:[%s2056 + $0x98] sm:$0xff]
        %v2077 = vld [vmem:[%s2056 + $0xa0] sm:$0xff]
        %v2078 = vld [vmem:[%s2056 + $0xa8] sm:$0xff]
        %v2079 = vld [vmem:[%s2056 + $0xb0] sm:$0xff]
        %v2080 = vld [vmem:[%s2056 + $0xb8] sm:$0xff]
        %v2081 = vld [vmem:[%s2056 + $0xc0] sm:$0xff]
        %v2082 = vld [vmem:[%s2056 + $0xc8] sm:$0xff]
        %v2083 = vld [vmem:[%s2056 + $0xd0] sm:$0xff]
        %v2084 = vld [vmem:[%s2056 + $0xd8] sm:$0xff]
        %v2085 = vld [vmem:[%s2056 + $0xe0] sm:$0xff]
        %v2086 = vld [vmem:[%s2056 + $0xe8] sm:$0xff]
        %v2087 = vld [vmem:[%s2056 + $0xf0] sm:$0xff]
        %v2088 = vld [vmem:[%s2056 + $0xf8] sm:$0xff]
        %v2089 = vld [vmem:[%s2056 + $0x100] sm:$0xff]
        %v2090 = vld [vmem:[%s2056 + $0x108] sm:$0xff]
        %v2091 = vld [vmem:[%s2056 + $0x110] sm:$0xff]
        %v2092 = vld [vmem:[%s2056 + $0x118] sm:$0xff]
        %v2093 = vld [vmem:[%s2056 + $0x120] sm:$0xff]
        %v2094 = vld [vmem:[%s2056 + $0x128] sm:$0xff]
        %v2095 = vld [vmem:[%s2056 + $0x130] sm:$0xff]
        %v2096 = vld [vmem:[%s2056 + $0x138] sm:$0xff]
        %v2097 = vld [vmem:[%s2056 + $0x140] sm:$0xff]
        %v2098 = vld [vmem:[%s2056 + $0x148] sm:$0xff]
        %v2099 = vld [vmem:[%s2056 + $0x150] sm:$0xff]
        %v2100 = vld [vmem:[%s2056 + $0x158] sm:$0xff]
        %v2101 = vld [vmem:[%s2056 + $0x160] sm:$0xff]
        %v2102 = vld [vmem:[%s2056 + $0x168] sm:$0xff]
        %v2103 = vld [vmem:[%s2056 + $0x170] sm:$0xff]
        %v2104 = vld [vmem:[%s2056 + $0x178] sm:$0xff]
        %v2105 = vld [vmem:[%s2056 + $0x180] sm:$0xff]
        %v2106 = vld [vmem:[%s2056 + $0x188] sm:$0xff]
        %v2107 = vld [vmem:[%s2056 + $0x190] sm:$0xff]
        %v2108 = vld [vmem:[%s2056 + $0x198] sm:$0xff]
        %v2109 = vld [vmem:[%s2056 + $0x1a0] sm:$0xff]
        %v2110 = vld [vmem:[%s2056 + $0x1a8] sm:$0xff]
        %v2111 = vld [vmem:[%s2056 + $0x1b0] sm:$0xff]
        %v2112 = vld [vmem:[%s2056 + $0x1b8] sm:$0xff]
        %v2113 = vld [vmem:[%s2056 + $0x1c0] sm:$0xff]
        %v2114 = vld [vmem:[%s2056 + $0x1c8] sm:$0xff]
        %v2115 = vld [vmem:[%s2056 + $0x1d0] sm:$0xff]
        %v2116 = vld [vmem:[%s2056 + $0x1d8] sm:$0xff]
        %v2117 = vld [vmem:[%s2056 + $0x1e0] sm:$0xff]
        %v2118 = vld [vmem:[%s2056 + $0x1e8] sm:$0xff]
        %v2119 = vld [vmem:[%s2056 + $0x1f0] sm:$0xff]
        %v2120 = vld [vmem:[%s2056 + $0x1f8] sm:$0xff]
        %2121 = vmatprep.subr.mxu0 %v2058
        %2122 = vmatpush1.msra.mxu0 %v2057
        %2123 = vmatprep.subr.mxu0 %v2060
        %2124 = vmatpush1.msra.mxu0 %v2059
        %2125 = vmatprep.subr.mxu0 %v2062
        %2126 = vmatpush1.msra.mxu0 %v2061
        %2127 = vmatprep.subr.mxu0 %v2064
        %2128 = vmatpush1.msra.mxu0 %v2063
        %2129 = vmatprep.subr.mxu0 %v2066
        %2130 = vmatpush1.msra.mxu0 %v2065
        %2131 = vmatprep.subr.mxu0 %v2068
        %2132 = vmatpush1.msra.mxu0 %v2067
        %2133 = vmatprep.subr.mxu0 %v2070
        %2134 = vmatpush1.msra.mxu0 %v2069
        %2135 = vmatprep.subr.mxu0 %v2072
        %2136 = vmatpush1.msra.mxu0 %v2071
        %2137 = vmatprep.subr.mxu0 %v2074
        %2138 = vmatpush1.msra.mxu0 %v2073
        %2139 = vmatprep.subr.mxu0 %v2076
        %2140 = vmatpush1.msra.mxu0 %v2075
        %2141 = vmatprep.subr.mxu0 %v2078
        %2142 = vmatpush1.msra.mxu0 %v2077
        %2143 = vmatprep.subr.mxu0 %v2080
        %2144 = vmatpush1.msra.mxu0 %v2079
        %2145 = vmatprep.subr.mxu0 %v2082
        %2146 = vmatpush1.msra.mxu0 %v2081
        %2147 = vmatprep.subr.mxu0 %v2084
        %2148 = vmatpush1.msra.mxu0 %v2083
        %2149 = vmatprep.subr.mxu0 %v2086
        %2150 = vmatpush1.msra.mxu0 %v2085
        %2151 = vmatprep.subr.mxu0 %v2088
        %2152 = vmatpush1.msra.mxu0 %v2087
        %2153 = vmatprep.subr.mxu0 %v2090
        %2154 = vmatpush1.msra.mxu0 %v2089
        %2155 = vmatprep.subr.mxu0 %v2092
        %2156 = vmatpush1.msra.mxu0 %v2091
        %2157 = vmatprep.subr.mxu0 %v2094
        %2158 = vmatpush1.msra.mxu0 %v2093
        %2159 = vmatprep.subr.mxu0 %v2096
        %2160 = vmatpush1.msra.mxu0 %v2095
        %2161 = vmatprep.subr.mxu0 %v2098
        %2162 = vmatpush1.msra.mxu0 %v2097
        %2163 = vmatprep.subr.mxu0 %v2100
        %2164 = vmatpush1.msra.mxu0 %v2099
        %2165 = vmatprep.subr.mxu0 %v2102
        %2166 = vmatpush1.msra.mxu0 %v2101
        %2167 = vmatprep.subr.mxu0 %v2104
        %2168 = vmatpush1.msra.mxu0 %v2103
        %2169 = vmatprep.subr.mxu0 %v2106
        %2170 = vmatpush1.msra.mxu0 %v2105
        %2171 = vmatprep.subr.mxu0 %v2108
        %2172 = vmatpush1.msra.mxu0 %v2107
        %2173 = vmatprep.subr.mxu0 %v2110
        %2174 = vmatpush1.msra.mxu0 %v2109
        %2175 = vmatprep.subr.mxu0 %v2112
        %2176 = vmatpush1.msra.mxu0 %v2111
        %2177 = vmatprep.subr.mxu0 %v2114
        %2178 = vmatpush1.msra.mxu0 %v2113
        %2179 = vmatprep.subr.mxu0 %v2116
        %2180 = vmatpush1.msra.mxu0 %v2115
        %2181 = vmatprep.subr.mxu0 %v2118
        %2182 = vmatpush1.msra.mxu0 %v2117
        %2183 = vmatprep.subr.mxu0 %v2120
        %2184 = vmatpush1.msra.mxu0 %v2119
        %2185 = vmatprep.mubr.f32.mxu0 %v1834
        %2186 = vmatmul.mubr.f32.gmra.mrb[0].mxu0 %v1833
        %v2187 = vpop.f32.mrb[0].mxu0
        %v2188 = vadd.f32 0.0, %v2187
        %v2189 = vpop.f32.mrb[0].mxu0
        %v2190 = vadd.f32 0.0, %v2189
        %2191 = vmatprep.mubr.f32.mxu0 %v1836
        %2192 = vmatmul.mubr.f32.gmra.mrb[0].mxu0 %v1835
        %v2193 = vpop.f32.mrb[0].mxu0
        %v2194 = vadd.f32 0.0, %v2193
        %v2195 = vpop.f32.mrb[0].mxu0
        %v2196 = vadd.f32 0.0, %v2195
        %2197 = vdwg.mxu0
        %2198 = vmatprep.subr.mxu0 %v1993
        %2199 = vmatpush1.msra.mxu0 %v1992
        %2200 = vmatprep.subr.mxu0 %v1995
        %2201 = vmatpush1.msra.mxu0 %v1994
        %2202 = vmatprep.subr.mxu0 %v1997
        %2203 = vmatpush1.msra.mxu0 %v1996
        %2204 = vmatprep.subr.mxu0 %v1999
        %2205 = vmatpush1.msra.mxu0 %v1998
        %2206 = vmatprep.subr.mxu0 %v2001
        %2207 = vmatpush1.msra.mxu0 %v2000
        %2208 = vmatprep.subr.mxu0 %v2003
        %2209 = vmatpush1.msra.mxu0 %v2002
        %2210 = vmatprep.subr.mxu0 %v2005
        %2211 = vmatpush1.msra.mxu0 %v2004
        %2212 = vmatprep.subr.mxu0 %v2007
        %2213 = vmatpush1.msra.mxu0 %v2006
        %2214 = vmatprep.subr.mxu0 %v2009
        %2215 = vmatpush1.msra.mxu0 %v2008
        %2216 = vmatprep.subr.mxu0 %v2011
        %2217 = vmatpush1.msra.mxu0 %v2010
        %2218 = vmatprep.subr.mxu0 %v2013
        %2219 = vmatpush1.msra.mxu0 %v2012
        %2220 = vmatprep.subr.mxu0 %v2015
        %2221 = vmatpush1.msra.mxu0 %v2014
        %2222 = vmatprep.subr.mxu0 %v2017
        %2223 = vmatpush1.msra.mxu0 %v2016
        %2224 = vmatprep.subr.mxu0 %v2019
        %2225 = vmatpush1.msra.mxu0 %v2018
        %2226 = vmatprep.subr.mxu0 %v2021
        %2227 = vmatpush1.msra.mxu0 %v2020
        %2228 = vmatprep.subr.mxu0 %v2023
        %2229 = vmatpush1.msra.mxu0 %v2022
        %2230 = vmatprep.subr.mxu0 %v2025
        %2231 = vmatpush1.msra.mxu0 %v2024
        %2232 = vmatprep.subr.mxu0 %v2027
        %2233 = vmatpush1.msra.mxu0 %v2026
        %2234 = vmatprep.subr.mxu0 %v2029
        %2235 = vmatpush1.msra.mxu0 %v2028
        %2236 = vmatprep.subr.mxu0 %v2031
        %2237 = vmatpush1.msra.mxu0 %v2030
        %2238 = vmatprep.subr.mxu0 %v2033
        %2239 = vmatpush1.msra.mxu0 %v2032
        %2240 = vmatprep.subr.mxu0 %v2035
        %2241 = vmatpush1.msra.mxu0 %v2034
        %2242 = vmatprep.subr.mxu0 %v2037
        %2243 = vmatpush1.msra.mxu0 %v2036
        %2244 = vmatprep.subr.mxu0 %v2039
        %2245 = vmatpush1.msra.mxu0 %v2038
        %2246 = vmatprep.subr.mxu0 %v2041
        %2247 = vmatpush1.msra.mxu0 %v2040
        %2248 = vmatprep.subr.mxu0 %v2043
        %2249 = vmatpush1.msra.mxu0 %v2042
        %2250 = vmatprep.subr.mxu0 %v2045
        %2251 = vmatpush1.msra.mxu0 %v2044
        %2252 = vmatprep.subr.mxu0 %v2047
        %2253 = vmatpush1.msra.mxu0 %v2046
        %2254 = vmatprep.subr.mxu0 %v2049
        %2255 = vmatpush1.msra.mxu0 %v2048
        %2256 = vmatprep.subr.mxu0 %v2051
        %2257 = vmatpush1.msra.mxu0 %v2050
        %2258 = vmatprep.subr.mxu0 %v2053
        %2259 = vmatpush1.msra.mxu0 %v2052
        %2260 = vmatprep.subr.mxu0 %v2055
        %2261 = vmatpush1.msra.mxu0 %v2054
        %2262 = vmatprep.mubr.f32.mxu0 %v1906
        %2263 = vmatmul.mubr.f32.gmra.mrb[0].mxu0 %v1904
        %v2264 = vpop.f32.mrb[0].mxu0
        %v2265 = vadd.f32 %v2188, %v2264
        %v2266 = vpop.f32.mrb[0].mxu0
        %v2267 = vadd.f32 %v2190, %v2266
        %2268 = vmatprep.mubr.f32.mxu0 %v1912
        %2269 = vmatmul.mubr.f32.gmra.mrb[0].mxu0 %v1910
        %v2270 = vpop.f32.mrb[0].mxu0
        %v2271 = vadd.f32 %v2194, %v2270
        %v2272 = vpop.f32.mrb[0].mxu0
        %v2273 = vadd.f32 %v2196, %v2272
        %2274 = vdwg.mxu0
        %s2275 = scalar_lea.vmem [#allocation2], 4096
        %v2276 = vld [vmem:[%s2275] sm:$0xff]
        %v2277 = vld [vmem:[%s2275 + $0x8] sm:$0xff]
        %v2278 = vld [vmem:[%s2275 + $0x10] sm:$0xff]
        %v2279 = vld [vmem:[%s2275 + $0x18] sm:$0xff]
        %v2280 = vld [vmem:[%s2275 + $0x20] sm:$0xff]
        %v2281 = vld [vmem:[%s2275 + $0x28] sm:$0xff]
        %v2282 = vld [vmem:[%s2275 + $0x30] sm:$0xff]
        %v2283 = vld [vmem:[%s2275 + $0x38] sm:$0xff]
        %v2284 = vld [vmem:[%s2275 + $0x40] sm:$0xff]
        %v2285 = vld [vmem:[%s2275 + $0x48] sm:$0xff]
        %v2286 = vld [vmem:[%s2275 + $0x50] sm:$0xff]
        %v2287 = vld [vmem:[%s2275 + $0x58] sm:$0xff]
        %v2288 = vld [vmem:[%s2275 + $0x60] sm:$0xff]
        %v2289 = vld [vmem:[%s2275 + $0x68] sm:$0xff]
        %v2290 = vld [vmem:[%s2275 + $0x70] sm:$0xff]
        %v2291 = vld [vmem:[%s2275 + $0x78] sm:$0xff]
        %v2292 = vld [vmem:[%s2275 + $0x80] sm:$0xff]
        %v2293 = vld [vmem:[%s2275 + $0x88] sm:$0xff]
        %v2294 = vld [vmem:[%s2275 + $0x90] sm:$0xff]
        %v2295 = vld [vmem:[%s2275 + $0x98] sm:$0xff]
        %v2296 = vld [vmem:[%s2275 + $0xa0] sm:$0xff]
        %v2297 = vld [vmem:[%s2275 + $0xa8] sm:$0xff]
        %v2298 = vld [vmem:[%s2275 + $0xb0] sm:$0xff]
        %v2299 = vld [vmem:[%s2275 + $0xb8] sm:$0xff]
        %v2300 = vld [vmem:[%s2275 + $0xc0] sm:$0xff]
        %v2301 = vld [vmem:[%s2275 + $0xc8] sm:$0xff]
        %v2302 = vld [vmem:[%s2275 + $0xd0] sm:$0xff]
        %v2303 = vld [vmem:[%s2275 + $0xd8] sm:$0xff]
        %v2304 = vld [vmem:[%s2275 + $0xe0] sm:$0xff]
        %v2305 = vld [vmem:[%s2275 + $0xe8] sm:$0xff]
        %v2306 = vld [vmem:[%s2275 + $0xf0] sm:$0xff]
        %v2307 = vld [vmem:[%s2275 + $0xf8] sm:$0xff]
        %v2308 = vld [vmem:[%s2275 + $0x100] sm:$0xff]
        %v2309 = vld [vmem:[%s2275 + $0x108] sm:$0xff]
        %v2310 = vld [vmem:[%s2275 + $0x110] sm:$0xff]
        %v2311 = vld [vmem:[%s2275 + $0x118] sm:$0xff]
        %v2312 = vld [vmem:[%s2275 + $0x120] sm:$0xff]
        %v2313 = vld [vmem:[%s2275 + $0x128] sm:$0xff]
        %v2314 = vld [vmem:[%s2275 + $0x130] sm:$0xff]
        %v2315 = vld [vmem:[%s2275 + $0x138] sm:$0xff]
        %v2316 = vld [vmem:[%s2275 + $0x140] sm:$0xff]
        %v2317 = vld [vmem:[%s2275 + $0x148] sm:$0xff]
        %v2318 = vld [vmem:[%s2275 + $0x150] sm:$0xff]
        %v2319 = vld [vmem:[%s2275 + $0x158] sm:$0xff]
        %v2320 = vld [vmem:[%s2275 + $0x160] sm:$0xff]
        %v2321 = vld [vmem:[%s2275 + $0x168] sm:$0xff]
        %v2322 = vld [vmem:[%s2275 + $0x170] sm:$0xff]
        %v2323 = vld [vmem:[%s2275 + $0x178] sm:$0xff]
        %v2324 = vld [vmem:[%s2275 + $0x180] sm:$0xff]
        %v2325 = vld [vmem:[%s2275 + $0x188] sm:$0xff]
        %v2326 = vld [vmem:[%s2275 + $0x190] sm:$0xff]
        %v2327 = vld [vmem:[%s2275 + $0x198] sm:$0xff]
        %v2328 = vld [vmem:[%s2275 + $0x1a0] sm:$0xff]
        %v2329 = vld [vmem:[%s2275 + $0x1a8] sm:$0xff]
        %v2330 = vld [vmem:[%s2275 + $0x1b0] sm:$0xff]
        %v2331 = vld [vmem:[%s2275 + $0x1b8] sm:$0xff]
        %v2332 = vld [vmem:[%s2275 + $0x1c0] sm:$0xff]
        %v2333 = vld [vmem:[%s2275 + $0x1c8] sm:$0xff]
        %v2334 = vld [vmem:[%s2275 + $0x1d0] sm:$0xff]
        %v2335 = vld [vmem:[%s2275 + $0x1d8] sm:$0xff]
        %v2336 = vld [vmem:[%s2275 + $0x1e0] sm:$0xff]
        %v2337 = vld [vmem:[%s2275 + $0x1e8] sm:$0xff]
        %v2338 = vld [vmem:[%s2275 + $0x1f0] sm:$0xff]
        %v2339 = vld [vmem:[%s2275 + $0x1f8] sm:$0xff]
        %2340 = vmatprep.subr.mxu0 %v2277
        %2341 = vmatpush1.msra.mxu0 %v2276
        %2342 = vmatprep.subr.mxu0 %v2279
        %2343 = vmatpush1.msra.mxu0 %v2278
        %2344 = vmatprep.subr.mxu0 %v2281
        %2345 = vmatpush1.msra.mxu0 %v2280
        %2346 = vmatprep.subr.mxu0 %v2283
        %2347 = vmatpush1.msra.mxu0 %v2282
        %2348 = vmatprep.subr.mxu0 %v2285
        %2349 = vmatpush1.msra.mxu0 %v2284
        %2350 = vmatprep.subr.mxu0 %v2287
        %2351 = vmatpush1.msra.mxu0 %v2286
        %2352 = vmatprep.subr.mxu0 %v2289
        %2353 = vmatpush1.msra.mxu0 %v2288
        %2354 = vmatprep.subr.mxu0 %v2291
        %2355 = vmatpush1.msra.mxu0 %v2290
        %2356 = vmatprep.subr.mxu0 %v2293
        %2357 = vmatpush1.msra.mxu0 %v2292
        %2358 = vmatprep.subr.mxu0 %v2295
        %2359 = vmatpush1.msra.mxu0 %v2294
        %2360 = vmatprep.subr.mxu0 %v2297
        %2361 = vmatpush1.msra.mxu0 %v2296
        %2362 = vmatprep.subr.mxu0 %v2299
        %2363 = vmatpush1.msra.mxu0 %v2298
        %2364 = vmatprep.subr.mxu0 %v2301
        %2365 = vmatpush1.msra.mxu0 %v2300
        %2366 = vmatprep.subr.mxu0 %v2303
        %2367 = vmatpush1.msra.mxu0 %v2302
        %2368 = vmatprep.subr.mxu0 %v2305
        %2369 = vmatpush1.msra.mxu0 %v2304
        %2370 = vmatprep.subr.mxu0 %v2307
        %2371 = vmatpush1.msra.mxu0 %v2306
        %2372 = vmatprep.subr.mxu0 %v2309
        %2373 = vmatpush1.msra.mxu0 %v2308
        %2374 = vmatprep.subr.mxu0 %v2311
        %2375 = vmatpush1.msra.mxu0 %v2310
        %2376 = vmatprep.subr.mxu0 %v2313
        %2377 = vmatpush1.msra.mxu0 %v2312
        %2378 = vmatprep.subr.mxu0 %v2315
        %2379 = vmatpush1.msra.mxu0 %v2314
        %2380 = vmatprep.subr.mxu0 %v2317
        %2381 = vmatpush1.msra.mxu0 %v2316
        %2382 = vmatprep.subr.mxu0 %v2319
        %2383 = vmatpush1.msra.mxu0 %v2318
        %2384 = vmatprep.subr.mxu0 %v2321
        %2385 = vmatpush1.msra.mxu0 %v2320
        %2386 = vmatprep.subr.mxu0 %v2323
        %2387 = vmatpush1.msra.mxu0 %v2322
        %2388 = vmatprep.subr.mxu0 %v2325
        %2389 = vmatpush1.msra.mxu0 %v2324
        %2390 = vmatprep.subr.mxu0 %v2327
        %2391 = vmatpush1.msra.mxu0 %v2326
        %2392 = vmatprep.subr.mxu0 %v2329
        %2393 = vmatpush1.msra.mxu0 %v2328
        %2394 = vmatprep.subr.mxu0 %v2331
        %2395 = vmatpush1.msra.mxu0 %v2330
        %2396 = vmatprep.subr.mxu0 %v2333
        %2397 = vmatpush1.msra.mxu0 %v2332
        %2398 = vmatprep.subr.mxu0 %v2335
        %2399 = vmatpush1.msra.mxu0 %v2334
        %2400 = vmatprep.subr.mxu0 %v2337
        %2401 = vmatpush1.msra.mxu0 %v2336
        %2402 = vmatprep.subr.mxu0 %v2339
        %2403 = vmatpush1.msra.mxu0 %v2338
        %2404 = vmatprep.mubr.f32.mxu0 %v1983
        %2405 = vmatmul.mubr.f32.gmra.mrb[0].mxu0 %v1981
        %v2406 = vpop.f32.mrb[0].mxu0
        %v2407 = vadd.f32 0.0, %v2406
        %v2408 = vpop.f32.mrb[0].mxu0
        %v2409 = vadd.f32 0.0, %v2408
        %2410 = vmatprep.mubr.f32.mxu0 %v1989
        %2411 = vmatmul.mubr.f32.gmra.mrb[0].mxu0 %v1987
        %v2412 = vpop.f32.mrb[0].mxu0
        %v2413 = vadd.f32 0.0, %v2412
        %v2414 = vpop.f32.mrb[0].mxu0
        %v2415 = vadd.f32 0.0, %v2414
        %2416 = vdwg.mxu0
        %v2417 = vadd.f32 %v2265, %v2407
        %v2418 = vadd.f32 %v2267, %v2409
        %v2419 = vadd.f32 %v2271, %v2413
        %v2420 = vadd.f32 %v2273, %v2415
        %s2421 = scalar_lea.vmem [#allocation4], 4
        %v2422 = vld [vmem:[%s2421] sm:$0x3]
        %v2424 = vlaneseq
        %v2425 = vshrl.u32 %v2424, 7
        %v2426 = vsub.s32 0, %v2425
        %v2427 = vrot.slane %v2422, %v2426
        %v2428 = vlaneseq
        %v2429 = vshrl.u32 %v2428, 7
        %v2430 = vsub.s32 1, %v2429
        %v2431 = vrot.slane %v2422, %v2430
        %v2434 = vadd.f32 %v2417, %v2427
        %v2435 = vadd.f32 %v2418, %v2431
        %v2436 = vadd.f32 %v2419, %v2427
        %v2437 = vadd.f32 %v2420, %v2431
        %v2438 = vmax.f32 %v2434, 0.0
        %v2439 = vmax.f32 %v2435, 0.0
        %v2440 = vmax.f32 %v2436, 0.0
        %v2441 = vmax.f32 %v2437, 0.0
        %2442 = vmatprep.subr.mxu0 %v2439
        %2443 = vmatpush1.msra.mxu0 %v2438
        %2444 = vmatprep.subr.mxu0 %v2441
        %2445 = vmatpush1.msra.mxu0 %v2440
        %2446 = vmatprep.subr.mxu0 0.0
        %2447 = vmatpush1.msra.mxu0 0.0
        %2448 = vmatprep.subr.mxu0 0.0
        %2449 = vmatpush1.msra.mxu0 0.0
        %2450 = vmatprep.subr.mxu0 0.0
        %2451 = vmatpush1.msra.mxu0 0.0
        %2452 = vmatprep.subr.mxu0 0.0
        %2453 = vmatpush1.msra.mxu0 0.0
        %2454 = vmatprep.subr.mxu0 0.0
        %2455 = vmatpush1.msra.mxu0 0.0
        %2456 = vmatprep.subr.mxu0 0.0
        %2457 = vmatpush1.msra.mxu0 0.0
        %2458 = vmatprep.subr.mxu0 0.0
        %2459 = vmatpush1.msra.mxu0 0.0
        %2460 = vmatprep.subr.mxu0 0.0
        %2461 = vmatpush1.msra.mxu0 0.0
        %2462 = vmatprep.subr.mxu0 0.0
        %2463 = vmatpush1.msra.mxu0 0.0
        %2464 = vmatprep.subr.mxu0 0.0
        %2465 = vmatpush1.msra.mxu0 0.0
        %2466 = vmatprep.subr.mxu0 0.0
        %2467 = vmatpush1.msra.mxu0 0.0
        %2468 = vmatprep.subr.mxu0 0.0
        %2469 = vmatpush1.msra.mxu0 0.0
        %2470 = vmatprep.subr.mxu0 0.0
        %2471 = vmatpush1.msra.mxu0 0.0
        %2472 = vmatprep.subr.mxu0 0.0
        %2473 = vmatpush1.msra.mxu0 0.0
        %2474 = vmatprep.subr.mxu0 0.0
        %2475 = vmatpush1.msra.mxu0 0.0
        %2476 = vmatprep.subr.mxu0 0.0
        %2477 = vmatpush1.msra.mxu0 0.0
        %2478 = vmatprep.subr.mxu0 0.0
        %2479 = vmatpush1.msra.mxu0 0.0
        %2480 = vmatprep.subr.mxu0 0.0
        %2481 = vmatpush1.msra.mxu0 0.0
        %2482 = vmatprep.subr.mxu0 0.0
        %2483 = vmatpush1.msra.mxu0 0.0
        %2484 = vmatprep.subr.mxu0 0.0
        %2485 = vmatpush1.msra.mxu0 0.0
        %2486 = vmatprep.subr.mxu0 0.0
        %2487 = vmatpush1.msra.mxu0 0.0
        %2488 = vmatprep.subr.mxu0 0.0
        %2489 = vmatpush1.msra.mxu0 0.0
        %2490 = vmatprep.subr.mxu0 0.0
        %2491 = vmatpush1.msra.mxu0 0.0
        %2492 = vmatprep.subr.mxu0 0.0
        %2493 = vmatpush1.msra.mxu0 0.0
        %2494 = vmatprep.subr.mxu0 0.0
        %2495 = vmatpush1.msra.mxu0 0.0
        %2496 = vmatprep.subr.mxu0 0.0
        %2497 = vmatpush1.msra.mxu0 0.0
        %2498 = vmatprep.subr.mxu0 0.0
        %2499 = vmatpush1.msra.mxu0 0.0
        %2500 = vmatprep.subr.mxu0 0.0
        %2501 = vmatpush1.msra.mxu0 0.0
        %2502 = vmatprep.subr.mxu0 0.0
        %2503 = vmatpush1.msra.mxu0 0.0
        %2504 = vmatprep.subr.mxu0 0.0
        %2505 = vmatpush1.msra.mxu0 0.0
        %2506 = vmatprep.mubr.f32.mxu0 0.0
        %2507 = vmatmul.mubr.f32.gmra.mrb[0].mxu0 %v379
        %v2508 = vpop.f32.mrb[0].mxu0
        %v2509 = vadd.f32 0.0, %v2508
        %v2510 = vpop.f32.mrb[0].mxu0
        %v2511 = vadd.f32 0.0, %v2510
        %2512 = vmatprep.mubr.f32.mxu0 0.0
        %2513 = vmatmul.mubr.f32.gmra.mrb[0].mxu0 %v382
        %v2514 = vpop.f32.mrb[0].mxu0
        %v2515 = vadd.f32 0.0, %v2514
        %v2516 = vpop.f32.mrb[0].mxu0
        %v2517 = vadd.f32 0.0, %v2516
        %2518 = vdwg.mxu0
        %2519 = vmatprep.subr.mxu0 %v2439
        %2520 = vmatpush1.msra.mxu0 %v2438
        %2521 = vmatprep.subr.mxu0 %v2441
        %2522 = vmatpush1.msra.mxu0 %v2440
        %2523 = vmatprep.subr.mxu0 0.0
        %2524 = vmatpush1.msra.mxu0 0.0
        %2525 = vmatprep.subr.mxu0 0.0
        %2526 = vmatpush1.msra.mxu0 0.0
        %2527 = vmatprep.subr.mxu0 0.0
        %2528 = vmatpush1.msra.mxu0 0.0
        %2529 = vmatprep.subr.mxu0 0.0
        %2530 = vmatpush1.msra.mxu0 0.0
        %2531 = vmatprep.subr.mxu0 0.0
        %2532 = vmatpush1.msra.mxu0 0.0
        %2533 = vmatprep.subr.mxu0 0.0
        %2534 = vmatpush1.msra.mxu0 0.0
        %2535 = vmatprep.subr.mxu0 0.0
        %2536 = vmatpush1.msra.mxu0 0.0
        %2537 = vmatprep.subr.mxu0 0.0
        %2538 = vmatpush1.msra.mxu0 0.0
        %2539 = vmatprep.subr.mxu0 0.0
        %2540 = vmatpush1.msra.mxu0 0.0
        %2541 = vmatprep.subr.mxu0 0.0
        %2542 = vmatpush1.msra.mxu0 0.0
        %2543 = vmatprep.subr.mxu0 0.0
        %2544 = vmatpush1.msra.mxu0 0.0
        %2545 = vmatprep.subr.mxu0 0.0
        %2546 = vmatpush1.msra.mxu0 0.0
        %2547 = vmatprep.subr.mxu0 0.0
        %2548 = vmatpush1.msra.mxu0 0.0
        %2549 = vmatprep.subr.mxu0 0.0
        %2550 = vmatpush1.msra.mxu0 0.0
        %2551 = vmatprep.subr.mxu0 0.0
        %2552 = vmatpush1.msra.mxu0 0.0
        %2553 = vmatprep.subr.mxu0 0.0
        %2554 = vmatpush1.msra.mxu0 0.0
        %2555 = vmatprep.subr.mxu0 0.0
        %2556 = vmatpush1.msra.mxu0 0.0
        %2557 = vmatprep.subr.mxu0 0.0
        %2558 = vmatpush1.msra.mxu0 0.0
        %2559 = vmatprep.subr.mxu0 0.0
        %2560 = vmatpush1.msra.mxu0 0.0
        %2561 = vmatprep.subr.mxu0 0.0
        %2562 = vmatpush1.msra.mxu0 0.0
        %2563 = vmatprep.subr.mxu0 0.0
        %2564 = vmatpush1.msra.mxu0 0.0
        %2565 = vmatprep.subr.mxu0 0.0
        %2566 = vmatpush1.msra.mxu0 0.0
        %2567 = vmatprep.subr.mxu0 0.0
        %2568 = vmatpush1.msra.mxu0 0.0
        %2569 = vmatprep.subr.mxu0 0.0
        %2570 = vmatpush1.msra.mxu0 0.0
        %2571 = vmatprep.subr.mxu0 0.0
        %2572 = vmatpush1.msra.mxu0 0.0
        %2573 = vmatprep.subr.mxu0 0.0
        %2574 = vmatpush1.msra.mxu0 0.0
        %2575 = vmatprep.subr.mxu0 0.0
        %2576 = vmatpush1.msra.mxu0 0.0
        %2577 = vmatprep.subr.mxu0 0.0
        %2578 = vmatpush1.msra.mxu0 0.0
        %2579 = vmatprep.subr.mxu0 0.0
        %2580 = vmatpush1.msra.mxu0 0.0
        %2581 = vmatprep.subr.mxu0 0.0
        %2582 = vmatpush1.msra.mxu0 0.0
        %2583 = vmatprep.mubr.f32.mxu0 0.0
        %2584 = vmatmul.mubr.f32.gmra.mrb[0].mxu0 %v462
        %v2585 = vpop.f32.mrb[0].mxu0
        %v2586 = vadd.f32 0.0, %v2585
        %v2587 = vpop.f32.mrb[0].mxu0
        %v2588 = vadd.f32 0.0, %v2587
        %2589 = vmatprep.mubr.f32.mxu0 0.0
        %2590 = vmatmul.mubr.f32.gmra.mrb[0].mxu0 %v465
        %v2591 = vpop.f32.mrb[0].mxu0
        %v2592 = vadd.f32 0.0, %v2591
        %v2593 = vpop.f32.mrb[0].mxu0
        %v2594 = vadd.f32 0.0, %v2593
        %2595 = vdwg.mxu0
        %s2596 = scalar_lea.vmem [#allocation2], 4608
        %v2597 = vld [vmem:[%s2596] sm:$0xff]
        %v2598 = vld [vmem:[%s2596 + $0x8] sm:$0xff]
        %v2599 = vld [vmem:[%s2596 + $0x10] sm:$0xff]
        %v2600 = vld [vmem:[%s2596 + $0x18] sm:$0xff]
        %v2601 = vld [vmem:[%s2596 + $0x20] sm:$0xff]
        %v2602 = vld [vmem:[%s2596 + $0x28] sm:$0xff]
        %v2603 = vld [vmem:[%s2596 + $0x30] sm:$0xff]
        %v2604 = vld [vmem:[%s2596 + $0x38] sm:$0xff]
        %v2605 = vld [vmem:[%s2596 + $0x40] sm:$0xff]
        %v2606 = vld [vmem:[%s2596 + $0x48] sm:$0xff]
        %v2607 = vld [vmem:[%s2596 + $0x50] sm:$0xff]
        %v2608 = vld [vmem:[%s2596 + $0x58] sm:$0xff]
        %v2609 = vld [vmem:[%s2596 + $0x60] sm:$0xff]
        %v2610 = vld [vmem:[%s2596 + $0x68] sm:$0xff]
        %v2611 = vld [vmem:[%s2596 + $0x70] sm:$0xff]
        %v2612 = vld [vmem:[%s2596 + $0x78] sm:$0xff]
        %v2613 = vld [vmem:[%s2596 + $0x80] sm:$0xff]
        %v2614 = vld [vmem:[%s2596 + $0x88] sm:$0xff]
        %v2615 = vld [vmem:[%s2596 + $0x90] sm:$0xff]
        %v2616 = vld [vmem:[%s2596 + $0x98] sm:$0xff]
        %v2617 = vld [vmem:[%s2596 + $0xa0] sm:$0xff]
        %v2618 = vld [vmem:[%s2596 + $0xa8] sm:$0xff]
        %v2619 = vld [vmem:[%s2596 + $0xb0] sm:$0xff]
        %v2620 = vld [vmem:[%s2596 + $0xb8] sm:$0xff]
        %v2621 = vld [vmem:[%s2596 + $0xc0] sm:$0xff]
        %v2622 = vld [vmem:[%s2596 + $0xc8] sm:$0xff]
        %v2623 = vld [vmem:[%s2596 + $0xd0] sm:$0xff]
        %v2624 = vld [vmem:[%s2596 + $0xd8] sm:$0xff]
        %v2625 = vld [vmem:[%s2596 + $0xe0] sm:$0xff]
        %v2626 = vld [vmem:[%s2596 + $0xe8] sm:$0xff]
        %v2627 = vld [vmem:[%s2596 + $0xf0] sm:$0xff]
        %v2628 = vld [vmem:[%s2596 + $0xf8] sm:$0xff]
        %v2629 = vld [vmem:[%s2596 + $0x100] sm:$0xff]
        %v2630 = vld [vmem:[%s2596 + $0x108] sm:$0xff]
        %v2631 = vld [vmem:[%s2596 + $0x110] sm:$0xff]
        %v2632 = vld [vmem:[%s2596 + $0x118] sm:$0xff]
        %v2633 = vld [vmem:[%s2596 + $0x120] sm:$0xff]
        %v2634 = vld [vmem:[%s2596 + $0x128] sm:$0xff]
        %v2635 = vld [vmem:[%s2596 + $0x130] sm:$0xff]
        %v2636 = vld [vmem:[%s2596 + $0x138] sm:$0xff]
        %v2637 = vld [vmem:[%s2596 + $0x140] sm:$0xff]
        %v2638 = vld [vmem:[%s2596 + $0x148] sm:$0xff]
        %v2639 = vld [vmem:[%s2596 + $0x150] sm:$0xff]
        %v2640 = vld [vmem:[%s2596 + $0x158] sm:$0xff]
        %v2641 = vld [vmem:[%s2596 + $0x160] sm:$0xff]
        %v2642 = vld [vmem:[%s2596 + $0x168] sm:$0xff]
        %v2643 = vld [vmem:[%s2596 + $0x170] sm:$0xff]
        %v2644 = vld [vmem:[%s2596 + $0x178] sm:$0xff]
        %v2645 = vld [vmem:[%s2596 + $0x180] sm:$0xff]
        %v2646 = vld [vmem:[%s2596 + $0x188] sm:$0xff]
        %v2647 = vld [vmem:[%s2596 + $0x190] sm:$0xff]
        %v2648 = vld [vmem:[%s2596 + $0x198] sm:$0xff]
        %v2649 = vld [vmem:[%s2596 + $0x1a0] sm:$0xff]
        %v2650 = vld [vmem:[%s2596 + $0x1a8] sm:$0xff]
        %v2651 = vld [vmem:[%s2596 + $0x1b0] sm:$0xff]
        %v2652 = vld [vmem:[%s2596 + $0x1b8] sm:$0xff]
        %v2653 = vld [vmem:[%s2596 + $0x1c0] sm:$0xff]
        %v2654 = vld [vmem:[%s2596 + $0x1c8] sm:$0xff]
        %v2655 = vld [vmem:[%s2596 + $0x1d0] sm:$0xff]
        %v2656 = vld [vmem:[%s2596 + $0x1d8] sm:$0xff]
        %v2657 = vld [vmem:[%s2596 + $0x1e0] sm:$0xff]
        %v2658 = vld [vmem:[%s2596 + $0x1e8] sm:$0xff]
        %v2659 = vld [vmem:[%s2596 + $0x1f0] sm:$0xff]
        %v2660 = vld [vmem:[%s2596 + $0x1f8] sm:$0xff]
        %s2661 = scalar_lea.vmem [#allocation2], 5120
        %v2662 = vld [vmem:[%s2661] sm:$0xff]
        %v2663 = vld [vmem:[%s2661 + $0x8] sm:$0xff]
        %v2664 = vld [vmem:[%s2661 + $0x10] sm:$0xff]
        %v2665 = vld [vmem:[%s2661 + $0x18] sm:$0xff]
        %v2666 = vld [vmem:[%s2661 + $0x20] sm:$0xff]
        %v2667 = vld [vmem:[%s2661 + $0x28] sm:$0xff]
        %v2668 = vld [vmem:[%s2661 + $0x30] sm:$0xff]
        %v2669 = vld [vmem:[%s2661 + $0x38] sm:$0xff]
        %v2670 = vld [vmem:[%s2661 + $0x40] sm:$0xff]
        %v2671 = vld [vmem:[%s2661 + $0x48] sm:$0xff]
        %v2672 = vld [vmem:[%s2661 + $0x50] sm:$0xff]
        %v2673 = vld [vmem:[%s2661 + $0x58] sm:$0xff]
        %v2674 = vld [vmem:[%s2661 + $0x60] sm:$0xff]
        %v2675 = vld [vmem:[%s2661 + $0x68] sm:$0xff]
        %v2676 = vld [vmem:[%s2661 + $0x70] sm:$0xff]
        %v2677 = vld [vmem:[%s2661 + $0x78] sm:$0xff]
        %v2678 = vld [vmem:[%s2661 + $0x80] sm:$0xff]
        %v2679 = vld [vmem:[%s2661 + $0x88] sm:$0xff]
        %v2680 = vld [vmem:[%s2661 + $0x90] sm:$0xff]
        %v2681 = vld [vmem:[%s2661 + $0x98] sm:$0xff]
        %v2682 = vld [vmem:[%s2661 + $0xa0] sm:$0xff]
        %v2683 = vld [vmem:[%s2661 + $0xa8] sm:$0xff]
        %v2684 = vld [vmem:[%s2661 + $0xb0] sm:$0xff]
        %v2685 = vld [vmem:[%s2661 + $0xb8] sm:$0xff]
        %v2686 = vld [vmem:[%s2661 + $0xc0] sm:$0xff]
        %v2687 = vld [vmem:[%s2661 + $0xc8] sm:$0xff]
        %v2688 = vld [vmem:[%s2661 + $0xd0] sm:$0xff]
        %v2689 = vld [vmem:[%s2661 + $0xd8] sm:$0xff]
        %v2690 = vld [vmem:[%s2661 + $0xe0] sm:$0xff]
        %v2691 = vld [vmem:[%s2661 + $0xe8] sm:$0xff]
        %v2692 = vld [vmem:[%s2661 + $0xf0] sm:$0xff]
        %v2693 = vld [vmem:[%s2661 + $0xf8] sm:$0xff]
        %v2694 = vld [vmem:[%s2661 + $0x100] sm:$0xff]
        %v2695 = vld [vmem:[%s2661 + $0x108] sm:$0xff]
        %v2696 = vld [vmem:[%s2661 + $0x110] sm:$0xff]
        %v2697 = vld [vmem:[%s2661 + $0x118] sm:$0xff]
        %v2698 = vld [vmem:[%s2661 + $0x120] sm:$0xff]
        %v2699 = vld [vmem:[%s2661 + $0x128] sm:$0xff]
        %v2700 = vld [vmem:[%s2661 + $0x130] sm:$0xff]
        %v2701 = vld [vmem:[%s2661 + $0x138] sm:$0xff]
        %v2702 = vld [vmem:[%s2661 + $0x140] sm:$0xff]
        %v2703 = vld [vmem:[%s2661 + $0x148] sm:$0xff]
        %v2704 = vld [vmem:[%s2661 + $0x150] sm:$0xff]
        %v2705 = vld [vmem:[%s2661 + $0x158] sm:$0xff]
        %v2706 = vld [vmem:[%s2661 + $0x160] sm:$0xff]
        %v2707 = vld [vmem:[%s2661 + $0x168] sm:$0xff]
        %v2708 = vld [vmem:[%s2661 + $0x170] sm:$0xff]
        %v2709 = vld [vmem:[%s2661 + $0x178] sm:$0xff]
        %v2710 = vld [vmem:[%s2661 + $0x180] sm:$0xff]
        %v2711 = vld [vmem:[%s2661 + $0x188] sm:$0xff]
        %v2712 = vld [vmem:[%s2661 + $0x190] sm:$0xff]
        %v2713 = vld [vmem:[%s2661 + $0x198] sm:$0xff]
        %v2714 = vld [vmem:[%s2661 + $0x1a0] sm:$0xff]
        %v2715 = vld [vmem:[%s2661 + $0x1a8] sm:$0xff]
        %v2716 = vld [vmem:[%s2661 + $0x1b0] sm:$0xff]
        %v2717 = vld [vmem:[%s2661 + $0x1b8] sm:$0xff]
        %v2718 = vld [vmem:[%s2661 + $0x1c0] sm:$0xff]
        %v2719 = vld [vmem:[%s2661 + $0x1c8] sm:$0xff]
        %v2720 = vld [vmem:[%s2661 + $0x1d0] sm:$0xff]
        %v2721 = vld [vmem:[%s2661 + $0x1d8] sm:$0xff]
        %v2722 = vld [vmem:[%s2661 + $0x1e0] sm:$0xff]
        %v2723 = vld [vmem:[%s2661 + $0x1e8] sm:$0xff]
        %v2724 = vld [vmem:[%s2661 + $0x1f0] sm:$0xff]
        %v2725 = vld [vmem:[%s2661 + $0x1f8] sm:$0xff]
        %2726 = vmatprep.subr.mxu0 %v2663
        %2727 = vmatpush1.msra.mxu0 %v2662
        %2728 = vmatprep.subr.mxu0 %v2665
        %2729 = vmatpush1.msra.mxu0 %v2664
        %2730 = vmatprep.subr.mxu0 %v2667
        %2731 = vmatpush1.msra.mxu0 %v2666
        %2732 = vmatprep.subr.mxu0 %v2669
        %2733 = vmatpush1.msra.mxu0 %v2668
        %2734 = vmatprep.subr.mxu0 %v2671
        %2735 = vmatpush1.msra.mxu0 %v2670
        %2736 = vmatprep.subr.mxu0 %v2673
        %2737 = vmatpush1.msra.mxu0 %v2672
        %2738 = vmatprep.subr.mxu0 %v2675
        %2739 = vmatpush1.msra.mxu0 %v2674
        %2740 = vmatprep.subr.mxu0 %v2677
        %2741 = vmatpush1.msra.mxu0 %v2676
        %2742 = vmatprep.subr.mxu0 %v2679
        %2743 = vmatpush1.msra.mxu0 %v2678
        %2744 = vmatprep.subr.mxu0 %v2681
        %2745 = vmatpush1.msra.mxu0 %v2680
        %2746 = vmatprep.subr.mxu0 %v2683
        %2747 = vmatpush1.msra.mxu0 %v2682
        %2748 = vmatprep.subr.mxu0 %v2685
        %2749 = vmatpush1.msra.mxu0 %v2684
        %2750 = vmatprep.subr.mxu0 %v2687
        %2751 = vmatpush1.msra.mxu0 %v2686
        %2752 = vmatprep.subr.mxu0 %v2689
        %2753 = vmatpush1.msra.mxu0 %v2688
        %2754 = vmatprep.subr.mxu0 %v2691
        %2755 = vmatpush1.msra.mxu0 %v2690
        %2756 = vmatprep.subr.mxu0 %v2693
        %2757 = vmatpush1.msra.mxu0 %v2692
        %2758 = vmatprep.subr.mxu0 %v2695
        %2759 = vmatpush1.msra.mxu0 %v2694
        %2760 = vmatprep.subr.mxu0 %v2697
        %2761 = vmatpush1.msra.mxu0 %v2696
        %2762 = vmatprep.subr.mxu0 %v2699
        %2763 = vmatpush1.msra.mxu0 %v2698
        %2764 = vmatprep.subr.mxu0 %v2701
        %2765 = vmatpush1.msra.mxu0 %v2700
        %2766 = vmatprep.subr.mxu0 %v2703
        %2767 = vmatpush1.msra.mxu0 %v2702
        %2768 = vmatprep.subr.mxu0 %v2705
        %2769 = vmatpush1.msra.mxu0 %v2704
        %2770 = vmatprep.subr.mxu0 %v2707
        %2771 = vmatpush1.msra.mxu0 %v2706
        %2772 = vmatprep.subr.mxu0 %v2709
        %2773 = vmatpush1.msra.mxu0 %v2708
        %2774 = vmatprep.subr.mxu0 %v2711
        %2775 = vmatpush1.msra.mxu0 %v2710
        %2776 = vmatprep.subr.mxu0 %v2713
        %2777 = vmatpush1.msra.mxu0 %v2712
        %2778 = vmatprep.subr.mxu0 %v2715
        %2779 = vmatpush1.msra.mxu0 %v2714
        %2780 = vmatprep.subr.mxu0 %v2717
        %2781 = vmatpush1.msra.mxu0 %v2716
        %2782 = vmatprep.subr.mxu0 %v2719
        %2783 = vmatpush1.msra.mxu0 %v2718
        %2784 = vmatprep.subr.mxu0 %v2721
        %2785 = vmatpush1.msra.mxu0 %v2720
        %2786 = vmatprep.subr.mxu0 %v2723
        %2787 = vmatpush1.msra.mxu0 %v2722
        %2788 = vmatprep.subr.mxu0 %v2725
        %2789 = vmatpush1.msra.mxu0 %v2724
        %2790 = vmatprep.mubr.f32.mxu0 %v2439
        %2791 = vmatmul.mubr.f32.gmra.mrb[0].mxu0 %v2438
        %v2792 = vpop.f32.mrb[0].mxu0
        %v2793 = vadd.f32 0.0, %v2792
        %v2794 = vpop.f32.mrb[0].mxu0
        %v2795 = vadd.f32 0.0, %v2794
        %2796 = vmatprep.mubr.f32.mxu0 %v2441
        %2797 = vmatmul.mubr.f32.gmra.mrb[0].mxu0 %v2440
        %v2798 = vpop.f32.mrb[0].mxu0
        %v2799 = vadd.f32 0.0, %v2798
        %v2800 = vpop.f32.mrb[0].mxu0
        %v2801 = vadd.f32 0.0, %v2800
        %2802 = vdwg.mxu0
        %2803 = vmatprep.subr.mxu0 %v2598
        %2804 = vmatpush1.msra.mxu0 %v2597
        %2805 = vmatprep.subr.mxu0 %v2600
        %2806 = vmatpush1.msra.mxu0 %v2599
        %2807 = vmatprep.subr.mxu0 %v2602
        %2808 = vmatpush1.msra.mxu0 %v2601
        %2809 = vmatprep.subr.mxu0 %v2604
        %2810 = vmatpush1.msra.mxu0 %v2603
        %2811 = vmatprep.subr.mxu0 %v2606
        %2812 = vmatpush1.msra.mxu0 %v2605
        %2813 = vmatprep.subr.mxu0 %v2608
        %2814 = vmatpush1.msra.mxu0 %v2607
        %2815 = vmatprep.subr.mxu0 %v2610
        %2816 = vmatpush1.msra.mxu0 %v2609
        %2817 = vmatprep.subr.mxu0 %v2612
        %2818 = vmatpush1.msra.mxu0 %v2611
        %2819 = vmatprep.subr.mxu0 %v2614
        %2820 = vmatpush1.msra.mxu0 %v2613
        %2821 = vmatprep.subr.mxu0 %v2616
        %2822 = vmatpush1.msra.mxu0 %v2615
        %2823 = vmatprep.subr.mxu0 %v2618
        %2824 = vmatpush1.msra.mxu0 %v2617
        %2825 = vmatprep.subr.mxu0 %v2620
        %2826 = vmatpush1.msra.mxu0 %v2619
        %2827 = vmatprep.subr.mxu0 %v2622
        %2828 = vmatpush1.msra.mxu0 %v2621
        %2829 = vmatprep.subr.mxu0 %v2624
        %2830 = vmatpush1.msra.mxu0 %v2623
        %2831 = vmatprep.subr.mxu0 %v2626
        %2832 = vmatpush1.msra.mxu0 %v2625
        %2833 = vmatprep.subr.mxu0 %v2628
        %2834 = vmatpush1.msra.mxu0 %v2627
        %2835 = vmatprep.subr.mxu0 %v2630
        %2836 = vmatpush1.msra.mxu0 %v2629
        %2837 = vmatprep.subr.mxu0 %v2632
        %2838 = vmatpush1.msra.mxu0 %v2631
        %2839 = vmatprep.subr.mxu0 %v2634
        %2840 = vmatpush1.msra.mxu0 %v2633
        %2841 = vmatprep.subr.mxu0 %v2636
        %2842 = vmatpush1.msra.mxu0 %v2635
        %2843 = vmatprep.subr.mxu0 %v2638
        %2844 = vmatpush1.msra.mxu0 %v2637
        %2845 = vmatprep.subr.mxu0 %v2640
        %2846 = vmatpush1.msra.mxu0 %v2639
        %2847 = vmatprep.subr.mxu0 %v2642
        %2848 = vmatpush1.msra.mxu0 %v2641
        %2849 = vmatprep.subr.mxu0 %v2644
        %2850 = vmatpush1.msra.mxu0 %v2643
        %2851 = vmatprep.subr.mxu0 %v2646
        %2852 = vmatpush1.msra.mxu0 %v2645
        %2853 = vmatprep.subr.mxu0 %v2648
        %2854 = vmatpush1.msra.mxu0 %v2647
        %2855 = vmatprep.subr.mxu0 %v2650
        %2856 = vmatpush1.msra.mxu0 %v2649
        %2857 = vmatprep.subr.mxu0 %v2652
        %2858 = vmatpush1.msra.mxu0 %v2651
        %2859 = vmatprep.subr.mxu0 %v2654
        %2860 = vmatpush1.msra.mxu0 %v2653
        %2861 = vmatprep.subr.mxu0 %v2656
        %2862 = vmatpush1.msra.mxu0 %v2655
        %2863 = vmatprep.subr.mxu0 %v2658
        %2864 = vmatpush1.msra.mxu0 %v2657
        %2865 = vmatprep.subr.mxu0 %v2660
        %2866 = vmatpush1.msra.mxu0 %v2659
        %2867 = vmatprep.mubr.f32.mxu0 %v2511
        %2868 = vmatmul.mubr.f32.gmra.mrb[0].mxu0 %v2509
        %v2869 = vpop.f32.mrb[0].mxu0
        %v2870 = vadd.f32 %v2793, %v2869
        %v2871 = vpop.f32.mrb[0].mxu0
        %v2872 = vadd.f32 %v2795, %v2871
        %2873 = vmatprep.mubr.f32.mxu0 %v2517
        %2874 = vmatmul.mubr.f32.gmra.mrb[0].mxu0 %v2515
        %v2875 = vpop.f32.mrb[0].mxu0
        %v2876 = vadd.f32 %v2799, %v2875
        %v2877 = vpop.f32.mrb[0].mxu0
        %v2878 = vadd.f32 %v2801, %v2877
        %2879 = vdwg.mxu0
        %s2880 = scalar_lea.vmem [#allocation2], 5632
        %v2881 = vld [vmem:[%s2880] sm:$0xff]
        %v2882 = vld [vmem:[%s2880 + $0x8] sm:$0xff]
        %v2883 = vld [vmem:[%s2880 + $0x10] sm:$0xff]
        %v2884 = vld [vmem:[%s2880 + $0x18] sm:$0xff]
        %v2885 = vld [vmem:[%s2880 + $0x20] sm:$0xff]
        %v2886 = vld [vmem:[%s2880 + $0x28] sm:$0xff]
        %v2887 = vld [vmem:[%s2880 + $0x30] sm:$0xff]
        %v2888 = vld [vmem:[%s2880 + $0x38] sm:$0xff]
        %v2889 = vld [vmem:[%s2880 + $0x40] sm:$0xff]
        %v2890 = vld [vmem:[%s2880 + $0x48] sm:$0xff]
        %v2891 = vld [vmem:[%s2880 + $0x50] sm:$0xff]
        %v2892 = vld [vmem:[%s2880 + $0x58] sm:$0xff]
        %v2893 = vld [vmem:[%s2880 + $0x60] sm:$0xff]
        %v2894 = vld [vmem:[%s2880 + $0x68] sm:$0xff]
        %v2895 = vld [vmem:[%s2880 + $0x70] sm:$0xff]
        %v2896 = vld [vmem:[%s2880 + $0x78] sm:$0xff]
        %v2897 = vld [vmem:[%s2880 + $0x80] sm:$0xff]
        %v2898 = vld [vmem:[%s2880 + $0x88] sm:$0xff]
        %v2899 = vld [vmem:[%s2880 + $0x90] sm:$0xff]
        %v2900 = vld [vmem:[%s2880 + $0x98] sm:$0xff]
        %v2901 = vld [vmem:[%s2880 + $0xa0] sm:$0xff]
        %v2902 = vld [vmem:[%s2880 + $0xa8] sm:$0xff]
        %v2903 = vld [vmem:[%s2880 + $0xb0] sm:$0xff]
        %v2904 = vld [vmem:[%s2880 + $0xb8] sm:$0xff]
        %v2905 = vld [vmem:[%s2880 + $0xc0] sm:$0xff]
        %v2906 = vld [vmem:[%s2880 + $0xc8] sm:$0xff]
        %v2907 = vld [vmem:[%s2880 + $0xd0] sm:$0xff]
        %v2908 = vld [vmem:[%s2880 + $0xd8] sm:$0xff]
        %v2909 = vld [vmem:[%s2880 + $0xe0] sm:$0xff]
        %v2910 = vld [vmem:[%s2880 + $0xe8] sm:$0xff]
        %v2911 = vld [vmem:[%s2880 + $0xf0] sm:$0xff]
        %v2912 = vld [vmem:[%s2880 + $0xf8] sm:$0xff]
        %v2913 = vld [vmem:[%s2880 + $0x100] sm:$0xff]
        %v2914 = vld [vmem:[%s2880 + $0x108] sm:$0xff]
        %v2915 = vld [vmem:[%s2880 + $0x110] sm:$0xff]
        %v2916 = vld [vmem:[%s2880 + $0x118] sm:$0xff]
        %v2917 = vld [vmem:[%s2880 + $0x120] sm:$0xff]
        %v2918 = vld [vmem:[%s2880 + $0x128] sm:$0xff]
        %v2919 = vld [vmem:[%s2880 + $0x130] sm:$0xff]
        %v2920 = vld [vmem:[%s2880 + $0x138] sm:$0xff]
        %v2921 = vld [vmem:[%s2880 + $0x140] sm:$0xff]
        %v2922 = vld [vmem:[%s2880 + $0x148] sm:$0xff]
        %v2923 = vld [vmem:[%s2880 + $0x150] sm:$0xff]
        %v2924 = vld [vmem:[%s2880 + $0x158] sm:$0xff]
        %v2925 = vld [vmem:[%s2880 + $0x160] sm:$0xff]
        %v2926 = vld [vmem:[%s2880 + $0x168] sm:$0xff]
        %v2927 = vld [vmem:[%s2880 + $0x170] sm:$0xff]
        %v2928 = vld [vmem:[%s2880 + $0x178] sm:$0xff]
        %v2929 = vld [vmem:[%s2880 + $0x180] sm:$0xff]
        %v2930 = vld [vmem:[%s2880 + $0x188] sm:$0xff]
        %v2931 = vld [vmem:[%s2880 + $0x190] sm:$0xff]
        %v2932 = vld [vmem:[%s2880 + $0x198] sm:$0xff]
        %v2933 = vld [vmem:[%s2880 + $0x1a0] sm:$0xff]
        %v2934 = vld [vmem:[%s2880 + $0x1a8] sm:$0xff]
        %v2935 = vld [vmem:[%s2880 + $0x1b0] sm:$0xff]
        %v2936 = vld [vmem:[%s2880 + $0x1b8] sm:$0xff]
        %v2937 = vld [vmem:[%s2880 + $0x1c0] sm:$0xff]
        %v2938 = vld [vmem:[%s2880 + $0x1c8] sm:$0xff]
        %v2939 = vld [vmem:[%s2880 + $0x1d0] sm:$0xff]
        %v2940 = vld [vmem:[%s2880 + $0x1d8] sm:$0xff]
        %v2941 = vld [vmem:[%s2880 + $0x1e0] sm:$0xff]
        %v2942 = vld [vmem:[%s2880 + $0x1e8] sm:$0xff]
        %v2943 = vld [vmem:[%s2880 + $0x1f0] sm:$0xff]
        %v2944 = vld [vmem:[%s2880 + $0x1f8] sm:$0xff]
        %2945 = vmatprep.subr.mxu0 %v2882
        %2946 = vmatpush1.msra.mxu0 %v2881
        %2947 = vmatprep.subr.mxu0 %v2884
        %2948 = vmatpush1.msra.mxu0 %v2883
        %2949 = vmatprep.subr.mxu0 %v2886
        %2950 = vmatpush1.msra.mxu0 %v2885
        %2951 = vmatprep.subr.mxu0 %v2888
        %2952 = vmatpush1.msra.mxu0 %v2887
        %2953 = vmatprep.subr.mxu0 %v2890
        %2954 = vmatpush1.msra.mxu0 %v2889
        %2955 = vmatprep.subr.mxu0 %v2892
        %2956 = vmatpush1.msra.mxu0 %v2891
        %2957 = vmatprep.subr.mxu0 %v2894
        %2958 = vmatpush1.msra.mxu0 %v2893
        %2959 = vmatprep.subr.mxu0 %v2896
        %2960 = vmatpush1.msra.mxu0 %v2895
        %2961 = vmatprep.subr.mxu0 %v2898
        %2962 = vmatpush1.msra.mxu0 %v2897
        %2963 = vmatprep.subr.mxu0 %v2900
        %2964 = vmatpush1.msra.mxu0 %v2899
        %2965 = vmatprep.subr.mxu0 %v2902
        %2966 = vmatpush1.msra.mxu0 %v2901
        %2967 = vmatprep.subr.mxu0 %v2904
        %2968 = vmatpush1.msra.mxu0 %v2903
        %2969 = vmatprep.subr.mxu0 %v2906
        %2970 = vmatpush1.msra.mxu0 %v2905
        %2971 = vmatprep.subr.mxu0 %v2908
        %2972 = vmatpush1.msra.mxu0 %v2907
        %2973 = vmatprep.subr.mxu0 %v2910
        %2974 = vmatpush1.msra.mxu0 %v2909
        %2975 = vmatprep.subr.mxu0 %v2912
        %2976 = vmatpush1.msra.mxu0 %v2911
        %2977 = vmatprep.subr.mxu0 %v2914
        %2978 = vmatpush1.msra.mxu0 %v2913
        %2979 = vmatprep.subr.mxu0 %v2916
        %2980 = vmatpush1.msra.mxu0 %v2915
        %2981 = vmatprep.subr.mxu0 %v2918
        %2982 = vmatpush1.msra.mxu0 %v2917
        %2983 = vmatprep.subr.mxu0 %v2920
        %2984 = vmatpush1.msra.mxu0 %v2919
        %2985 = vmatprep.subr.mxu0 %v2922
        %2986 = vmatpush1.msra.mxu0 %v2921
        %2987 = vmatprep.subr.mxu0 %v2924
        %2988 = vmatpush1.msra.mxu0 %v2923
        %2989 = vmatprep.subr.mxu0 %v2926
        %2990 = vmatpush1.msra.mxu0 %v2925
        %2991 = vmatprep.subr.mxu0 %v2928
        %2992 = vmatpush1.msra.mxu0 %v2927
        %2993 = vmatprep.subr.mxu0 %v2930
        %2994 = vmatpush1.msra.mxu0 %v2929
        %2995 = vmatprep.subr.mxu0 %v2932
        %2996 = vmatpush1.msra.mxu0 %v2931
        %2997 = vmatprep.subr.mxu0 %v2934
        %2998 = vmatpush1.msra.mxu0 %v2933
        %2999 = vmatprep.subr.mxu0 %v2936
        %3000 = vmatpush1.msra.mxu0 %v2935
        %3001 = vmatprep.subr.mxu0 %v2938
        %3002 = vmatpush1.msra.mxu0 %v2937
        %3003 = vmatprep.subr.mxu0 %v2940
        %3004 = vmatpush1.msra.mxu0 %v2939
        %3005 = vmatprep.subr.mxu0 %v2942
        %3006 = vmatpush1.msra.mxu0 %v2941
        %3007 = vmatprep.subr.mxu0 %v2944
        %3008 = vmatpush1.msra.mxu0 %v2943
        %3009 = vmatprep.mubr.f32.mxu0 %v2588
        %3010 = vmatmul.mubr.f32.gmra.mrb[0].mxu0 %v2586
        %v3011 = vpop.f32.mrb[0].mxu0
        %v3012 = vadd.f32 0.0, %v3011
        %v3013 = vpop.f32.mrb[0].mxu0
        %v3014 = vadd.f32 0.0, %v3013
        %3015 = vmatprep.mubr.f32.mxu0 %v2594
        %3016 = vmatmul.mubr.f32.gmra.mrb[0].mxu0 %v2592
        %v3017 = vpop.f32.mrb[0].mxu0
        %v3018 = vadd.f32 0.0, %v3017
        %v3019 = vpop.f32.mrb[0].mxu0
        %v3020 = vadd.f32 0.0, %v3019
        %3021 = vdwg.mxu0
        %v3022 = vadd.f32 %v2870, %v3012
        %v3023 = vadd.f32 %v2872, %v3014
        %v3024 = vadd.f32 %v2876, %v3018
        %v3025 = vadd.f32 %v2878, %v3020
        %s3026 = scalar_lea.vmem [#allocation4], 6
        %v3027 = vld [vmem:[%s3026] sm:$0x3]
        %v3029 = vlaneseq
        %v3030 = vshrl.u32 %v3029, 7
        %v3031 = vsub.s32 0, %v3030
        %v3032 = vrot.slane %v3027, %v3031
        %v3033 = vlaneseq
        %v3034 = vshrl.u32 %v3033, 7
        %v3035 = vsub.s32 1, %v3034
        %v3036 = vrot.slane %v3027, %v3035
        %v3039 = vadd.f32 %v3022, %v3032
        %v3040 = vadd.f32 %v3023, %v3036
        %v3041 = vadd.f32 %v3024, %v3032
        %v3042 = vadd.f32 %v3025, %v3036
        %v3043 = vadd.f32 %v3039, %v3041
        %v3044 = vrot.slane %v3043, 4
        %v3045 = vadd.f32 %v3043, %v3044
        %v3046 = vrot.slane %v3045, 2
        %v3047 = vadd.f32 %v3045, %v3046
        %v3048 = vrot.slane %v3047, 1
        %v3049 = vadd.f32 %v3047, %v3048
        %v3050 = vadd.f32 %v3040, %v3042
        %v3051 = vrot.slane %v3050, 4
        %v3052 = vadd.f32 %v3050, %v3051
        %v3053 = vrot.slane %v3052, 2
        %v3054 = vadd.f32 %v3052, %v3053
        %v3055 = vrot.slane %v3054, 1
        %v3056 = vadd.f32 %v3054, %v3055
        %v3057 = vmul.f32 %v3049, 0.00390625
        %v3058 = vmul.f32 %v3056, 0.00390625
        %s3059 = scalar_lea.vmem %s3, 256
        %v3060 = vld [vmem:[%s3059] sm:$0xff]
        %v3061 = vld [vmem:[%s3059 + $0x8] sm:$0xff]
        %v3062 = vld [vmem:[%s3059 + $0x10] sm:$0xff]
        %v3063 = vld [vmem:[%s3059 + $0x18] sm:$0xff]
        %v3064 = vld [vmem:[%s3059 + $0x20] sm:$0xff]
        %v3065 = vld [vmem:[%s3059 + $0x28] sm:$0xff]
        %v3066 = vld [vmem:[%s3059 + $0x30] sm:$0xff]
        %v3067 = vld [vmem:[%s3059 + $0x38] sm:$0xff]
        %v3068 = vld [vmem:[%s3059 + $0x40] sm:$0xff]
        %v3069 = vld [vmem:[%s3059 + $0x48] sm:$0xff]
        %v3070 = vld [vmem:[%s3059 + $0x50] sm:$0xff]
        %v3071 = vld [vmem:[%s3059 + $0x58] sm:$0xff]
        %v3072 = vld [vmem:[%s3059 + $0x60] sm:$0xff]
        %v3073 = vld [vmem:[%s3059 + $0x68] sm:$0xff]
        %v3074 = vld [vmem:[%s3059 + $0x70] sm:$0xff]
        %v3075 = vld [vmem:[%s3059 + $0x78] sm:$0xff]
        %v3076 = vld [vmem:[%s3059 + $0x80] sm:$0xff]
        %v3077 = vld [vmem:[%s3059 + $0x88] sm:$0xff]
        %v3078 = vld [vmem:[%s3059 + $0x90] sm:$0xff]
        %v3079 = vld [vmem:[%s3059 + $0x98] sm:$0xff]
        %v3080 = vld [vmem:[%s3059 + $0xa0] sm:$0xff]
        %v3081 = vld [vmem:[%s3059 + $0xa8] sm:$0xff]
        %v3082 = vld [vmem:[%s3059 + $0xb0] sm:$0xff]
        %v3083 = vld [vmem:[%s3059 + $0xb8] sm:$0xff]
        %v3084 = vld [vmem:[%s3059 + $0xc0] sm:$0xff]
        %v3085 = vld [vmem:[%s3059 + $0xc8] sm:$0xff]
        %v3086 = vld [vmem:[%s3059 + $0xd0] sm:$0xff]
        %v3087 = vld [vmem:[%s3059 + $0xd8] sm:$0xff]
        %v3088 = vld [vmem:[%s3059 + $0xe0] sm:$0xff]
        %v3089 = vld [vmem:[%s3059 + $0xe8] sm:$0xff]
        %v3090 = vld [vmem:[%s3059 + $0xf0] sm:$0xff]
        %v3091 = vld [vmem:[%s3059 + $0xf8] sm:$0xff]
        %s3092 = scalar_lea.vmem [#allocation6], 1
        %v3093 = vld [vmem:[%s3092] sm:$0x1]
        %3094 = vmatprep.subr.mxu0 0.0
        %3095 = vmatpush1.msra.mxu0 %v3060
        %3096 = vmatprep.subr.mxu0 0.0
        %3097 = vmatpush1.msra.mxu0 %v3061
        %3098 = vmatprep.subr.mxu0 0.0
        %3099 = vmatpush1.msra.mxu0 %v3062
        %3100 = vmatprep.subr.mxu0 0.0
        %3101 = vmatpush1.msra.mxu0 %v3063
        %3102 = vmatprep.subr.mxu0 0.0
        %3103 = vmatpush1.msra.mxu0 %v3064
        %3104 = vmatprep.subr.mxu0 0.0
        %3105 = vmatpush1.msra.mxu0 %v3065
        %3106 = vmatprep.subr.mxu0 0.0
        %3107 = vmatpush1.msra.mxu0 %v3066
        %3108 = vmatprep.subr.mxu0 0.0
        %3109 = vmatpush1.msra.mxu0 %v3067
        %3110 = vmatprep.subr.mxu0 0.0
        %3111 = vmatpush1.msra.mxu0 %v3068
        %3112 = vmatprep.subr.mxu0 0.0
        %3113 = vmatpush1.msra.mxu0 %v3069
        %3114 = vmatprep.subr.mxu0 0.0
        %3115 = vmatpush1.msra.mxu0 %v3070
        %3116 = vmatprep.subr.mxu0 0.0
        %3117 = vmatpush1.msra.mxu0 %v3071
        %3118 = vmatprep.subr.mxu0 0.0
        %3119 = vmatpush1.msra.mxu0 %v3072
        %3120 = vmatprep.subr.mxu0 0.0
        %3121 = vmatpush1.msra.mxu0 %v3073
        %3122 = vmatprep.subr.mxu0 0.0
        %3123 = vmatpush1.msra.mxu0 %v3074
        %3124 = vmatprep.subr.mxu0 0.0
        %3125 = vmatpush1.msra.mxu0 %v3075
        %3126 = vmatprep.subr.mxu0 0.0
        %3127 = vmatpush1.msra.mxu0 %v3076
        %3128 = vmatprep.subr.mxu0 0.0
        %3129 = vmatpush1.msra.mxu0 %v3077
        %3130 = vmatprep.subr.mxu0 0.0
        %3131 = vmatpush1.msra.mxu0 %v3078
        %3132 = vmatprep.subr.mxu0 0.0
        %3133 = vmatpush1.msra.mxu0 %v3079
        %3134 = vmatprep.subr.mxu0 0.0
        %3135 = vmatpush1.msra.mxu0 %v3080
        %3136 = vmatprep.subr.mxu0 0.0
        %3137 = vmatpush1.msra.mxu0 %v3081
        %3138 = vmatprep.subr.mxu0 0.0
        %3139 = vmatpush1.msra.mxu0 %v3082
        %3140 = vmatprep.subr.mxu0 0.0
        %3141 = vmatpush1.msra.mxu0 %v3083
        %3142 = vmatprep.subr.mxu0 0.0
        %3143 = vmatpush1.msra.mxu0 %v3084
        %3144 = vmatprep.subr.mxu0 0.0
        %3145 = vmatpush1.msra.mxu0 %v3085
        %3146 = vmatprep.subr.mxu0 0.0
        %3147 = vmatpush1.msra.mxu0 %v3086
        %3148 = vmatprep.subr.mxu0 0.0
        %3149 = vmatpush1.msra.mxu0 %v3087
        %3150 = vmatprep.subr.mxu0 0.0
        %3151 = vmatpush1.msra.mxu0 %v3088
        %3152 = vmatprep.subr.mxu0 0.0
        %3153 = vmatpush1.msra.mxu0 %v3089
        %3154 = vmatprep.subr.mxu0 0.0
        %3155 = vmatpush1.msra.mxu0 %v3090
        %3156 = vmatprep.subr.mxu0 0.0
        %3157 = vmatpush1.msra.mxu0 %v3091
        %3158 = vmatprep.mubr.f32.mxu0 %v3058
        %3159 = vmatmul.mubr.f32.gmra.mrb[0].mxu0 %v3057
        %v3160 = vpop.f32.mrb[0].mxu0
        %v3161 = vadd.f32 %v3093, %v3160
        %v3162 = vpop.f32.mrb[0].mxu0
        %3163 = vdwg.mxu0
        %v3164 = vmax.f32 %v3161, 0.0
        %s3165 = scalar_lea.vmem [#allocation7], 8
        %v3166 = vld [vmem:[%s3165] sm:$0xff]
        %s3167 = scalar_lea.vmem [#allocation9], 2
        %v3168 = vld [vmem:[%s3167] sm:$0x3]
        %v3170 = vcombine.high %v3166, %v3166
        %v3172 = vlaneseq
        %v3173 = vshrl.u32 %v3172, 7
        %v3174 = vsub.s32 0, %v3173
        %v3175 = vrot.slane %v3168, %v3174
        %v3176 = vlaneseq
        %v3177 = vshrl.u32 %v3176, 7
        %v3178 = vsub.s32 1, %v3177
        %v3179 = vrot.slane %v3168, %v3178
        %v3183 = vsel %vm1729, %v3164, 0
        %v3185 = vsel %vm1733, %v3166, 0
        %v3187 = vsel %vm1733, %v3170, 0
        %3189 = vmatprep.subr.mxu0 %v3187
        %3190 = vmatpush1.msra.mxu0 %v3185
        %3191 = vmatprep.subr.mxu0 0.0
        %3192 = vmatpush1.msra.mxu0 0.0
        %3193 = vmatprep.subr.mxu0 0.0
        %3194 = vmatpush1.msra.mxu0 0.0
        %3195 = vmatprep.subr.mxu0 0.0
        %3196 = vmatpush1.msra.mxu0 0.0
        %3197 = vmatprep.subr.mxu0 0.0
        %3198 = vmatpush1.msra.mxu0 0.0
        %3199 = vmatprep.subr.mxu0 0.0
        %3200 = vmatpush1.msra.mxu0 0.0
        %3201 = vmatprep.subr.mxu0 0.0
        %3202 = vmatpush1.msra.mxu0 0.0
        %3203 = vmatprep.subr.mxu0 0.0
        %3204 = vmatpush1.msra.mxu0 0.0
        %3205 = vmatprep.subr.mxu0 0.0
        %3206 = vmatpush1.msra.mxu0 0.0
        %3207 = vmatprep.subr.mxu0 0.0
        %3208 = vmatpush1.msra.mxu0 0.0
        %3209 = vmatprep.subr.mxu0 0.0
        %3210 = vmatpush1.msra.mxu0 0.0
        %3211 = vmatprep.subr.mxu0 0.0
        %3212 = vmatpush1.msra.mxu0 0.0
        %3213 = vmatprep.subr.mxu0 0.0
        %3214 = vmatpush1.msra.mxu0 0.0
        %3215 = vmatprep.subr.mxu0 0.0
        %3216 = vmatpush1.msra.mxu0 0.0
        %3217 = vmatprep.subr.mxu0 0.0
        %3218 = vmatpush1.msra.mxu0 0.0
        %3219 = vmatprep.subr.mxu0 0.0
        %3220 = vmatpush1.msra.mxu0 0.0
        %3221 = vmatprep.subr.mxu0 0.0
        %3222 = vmatpush1.msra.mxu0 0.0
        %3223 = vmatprep.subr.mxu0 0.0
        %3224 = vmatpush1.msra.mxu0 0.0
        %3225 = vmatprep.subr.mxu0 0.0
        %3226 = vmatpush1.msra.mxu0 0.0
        %3227 = vmatprep.subr.mxu0 0.0
        %3228 = vmatpush1.msra.mxu0 0.0
        %3229 = vmatprep.subr.mxu0 0.0
        %3230 = vmatpush1.msra.mxu0 0.0
        %3231 = vmatprep.subr.mxu0 0.0
        %3232 = vmatpush1.msra.mxu0 0.0
        %3233 = vmatprep.subr.mxu0 0.0
        %3234 = vmatpush1.msra.mxu0 0.0
        %3235 = vmatprep.subr.mxu0 0.0
        %3236 = vmatpush1.msra.mxu0 0.0
        %3237 = vmatprep.subr.mxu0 0.0
        %3238 = vmatpush1.msra.mxu0 0.0
        %3239 = vmatprep.subr.mxu0 0.0
        %3240 = vmatpush1.msra.mxu0 0.0
        %3241 = vmatprep.subr.mxu0 0.0
        %3242 = vmatpush1.msra.mxu0 0.0
        %3243 = vmatprep.subr.mxu0 0.0
        %3244 = vmatpush1.msra.mxu0 0.0
        %3245 = vmatprep.subr.mxu0 0.0
        %3246 = vmatpush1.msra.mxu0 0.0
        %3247 = vmatprep.subr.mxu0 0.0
        %3248 = vmatpush1.msra.mxu0 0.0
        %3249 = vmatprep.subr.mxu0 0.0
        %3250 = vmatpush1.msra.mxu0 0.0
        %3251 = vmatprep.subr.mxu0 0.0
        %3252 = vmatpush1.msra.mxu0 0.0
        %3253 = vmatprep.mubr.f32.mxu0 0.0
        %3254 = vmatmul.mubr.f32.gmra.mrb[0].mxu0 %v3183
        %v3255 = vpop.f32.mrb[0].mxu0
        %v3256 = vadd.f32 %v3175, %v3255
        %v3257 = vpop.f32.mrb[0].mxu0
        %v3258 = vadd.f32 %v3179, %v3257
        %3259 = vdwg.mxu0
        %v3260 = vxor.u32 %v3256, 2147483648
        %v3261 = vxor.u32 %v3258, 2147483648
        %v3262 = vmul.f32 %v3260, 1.442695
        %v3263 = vpow.pop %v3262
        %v3264 = vmul.f32 %v3261, 1.442695
        %v3265 = vpow.pop %v3264
        %v3266 = vadd.f32 %v3263, 1.0
        %v3267 = vadd.f32 %v3265, 1.0
        %v3268 = vrcp.pop %v3266
        %v3269 = vmul.f32 1.0, %v3268
        %v3270 = vrcp.pop %v3267
        %v3271 = vmul.f32 1.0, %v3270
        %v3272 = vlaneseq
        %v3273 = vshrl.u32 %v3272, 7
        %v3274 = vsub.s32 0, %v3273
        %v3275 = vrot.slane %v3269, %v3274
        %v3276 = vlaneseq
        %v3277 = vshrl.u32 %v3276, 7
        %v3278 = vsub.s32 0, %v3277
        %v3279 = vrot.slane %v3271, %v3278
        %v3280 = vmul.f32 %v3039, %v3275
        %v3281 = vmul.f32 %v3040, %v3279
        %v3282 = vmul.f32 %v3041, %v3275
        %v3283 = vmul.f32 %v3042, %v3279
        %v3284 = vadd.f32 %v3280, %v1833
        %v3285 = vadd.f32 %v3281, %v1834
        %v3286 = vadd.f32 %v3282, %v1835
        %v3287 = vadd.f32 %v3283, %v1836
        %3288 = vmatprep.subr.mxu0 %v3285
        %3289 = vmatpush1.msra.mxu0 %v3284
        %3290 = vmatprep.subr.mxu0 %v3287
        %3291 = vmatpush1.msra.mxu0 %v3286
        %3292 = vmatprep.subr.mxu0 0.0
        %3293 = vmatpush1.msra.mxu0 0.0
        %3294 = vmatprep.subr.mxu0 0.0
        %3295 = vmatpush1.msra.mxu0 0.0
        %3296 = vmatprep.subr.mxu0 0.0
        %3297 = vmatpush1.msra.mxu0 0.0
        %3298 = vmatprep.subr.mxu0 0.0
        %3299 = vmatpush1.msra.mxu0 0.0
        %3300 = vmatprep.subr.mxu0 0.0
        %3301 = vmatpush1.msra.mxu0 0.0
        %3302 = vmatprep.subr.mxu0 0.0
        %3303 = vmatpush1.msra.mxu0 0.0
        %3304 = vmatprep.subr.mxu0 0.0
        %3305 = vmatpush1.msra.mxu0 0.0
        %3306 = vmatprep.subr.mxu0 0.0
        %3307 = vmatpush1.msra.mxu0 0.0
        %3308 = vmatprep.subr.mxu0 0.0
        %3309 = vmatpush1.msra.mxu0 0.0
        %3310 = vmatprep.subr.mxu0 0.0
        %3311 = vmatpush1.msra.mxu0 0.0
        %3312 = vmatprep.subr.mxu0 0.0
        %3313 = vmatpush1.msra.mxu0 0.0
        %3314 = vmatprep.subr.mxu0 0.0
        %3315 = vmatpush1.msra.mxu0 0.0
        %3316 = vmatprep.subr.mxu0 0.0
        %3317 = vmatpush1.msra.mxu0 0.0
        %3318 = vmatprep.subr.mxu0 0.0
        %3319 = vmatpush1.msra.mxu0 0.0
        %3320 = vmatprep.subr.mxu0 0.0
        %3321 = vmatpush1.msra.mxu0 0.0
        %3322 = vmatprep.subr.mxu0 0.0
        %3323 = vmatpush1.msra.mxu0 0.0
        %3324 = vmatprep.subr.mxu0 0.0
        %3325 = vmatpush1.msra.mxu0 0.0
        %3326 = vmatprep.subr.mxu0 0.0
        %3327 = vmatpush1.msra.mxu0 0.0
        %3328 = vmatprep.subr.mxu0 0.0
        %3329 = vmatpush1.msra.mxu0 0.0
        %3330 = vmatprep.subr.mxu0 0.0
        %3331 = vmatpush1.msra.mxu0 0.0
        %3332 = vmatprep.subr.mxu0 0.0
        %3333 = vmatpush1.msra.mxu0 0.0
        %3334 = vmatprep.subr.mxu0 0.0
        %3335 = vmatpush1.msra.mxu0 0.0
        %3336 = vmatprep.subr.mxu0 0.0
        %3337 = vmatpush1.msra.mxu0 0.0
        %3338 = vmatprep.subr.mxu0 0.0
        %3339 = vmatpush1.msra.mxu0 0.0
        %3340 = vmatprep.subr.mxu0 0.0
        %3341 = vmatpush1.msra.mxu0 0.0
        %3342 = vmatprep.subr.mxu0 0.0
        %3343 = vmatpush1.msra.mxu0 0.0
        %3344 = vmatprep.subr.mxu0 0.0
        %3345 = vmatpush1.msra.mxu0 0.0
        %3346 = vmatprep.subr.mxu0 0.0
        %3347 = vmatpush1.msra.mxu0 0.0
        %3348 = vmatprep.subr.mxu0 0.0
        %3349 = vmatpush1.msra.mxu0 0.0
        %3350 = vmatprep.subr.mxu0 0.0
        %3351 = vmatpush1.msra.mxu0 0.0
        %3352 = vmatprep.mubr.f32.mxu0 0.0
        %3353 = vmatmul.mubr.f32.gmra.mrb[0].mxu0 %v379
        %v3354 = vpop.f32.mrb[0].mxu0
        %v3355 = vadd.f32 0.0, %v3354
        %v3356 = vpop.f32.mrb[0].mxu0
        %v3357 = vadd.f32 0.0, %v3356
        %3358 = vmatprep.mubr.f32.mxu0 0.0
        %3359 = vmatmul.mubr.f32.gmra.mrb[0].mxu0 %v382
        %v3360 = vpop.f32.mrb[0].mxu0
        %v3361 = vadd.f32 0.0, %v3360
        %v3362 = vpop.f32.mrb[0].mxu0
        %v3363 = vadd.f32 0.0, %v3362
        %3364 = vdwg.mxu0
        %3365 = vmatprep.subr.mxu0 %v3285
        %3366 = vmatpush1.msra.mxu0 %v3284
        %3367 = vmatprep.subr.mxu0 %v3287
        %3368 = vmatpush1.msra.mxu0 %v3286
        %3369 = vmatprep.subr.mxu0 0.0
        %3370 = vmatpush1.msra.mxu0 0.0
        %3371 = vmatprep.subr.mxu0 0.0
        %3372 = vmatpush1.msra.mxu0 0.0
        %3373 = vmatprep.subr.mxu0 0.0
        %3374 = vmatpush1.msra.mxu0 0.0
        %3375 = vmatprep.subr.mxu0 0.0
        %3376 = vmatpush1.msra.mxu0 0.0
        %3377 = vmatprep.subr.mxu0 0.0
        %3378 = vmatpush1.msra.mxu0 0.0
        %3379 = vmatprep.subr.mxu0 0.0
        %3380 = vmatpush1.msra.mxu0 0.0
        %3381 = vmatprep.subr.mxu0 0.0
        %3382 = vmatpush1.msra.mxu0 0.0
        %3383 = vmatprep.subr.mxu0 0.0
        %3384 = vmatpush1.msra.mxu0 0.0
        %3385 = vmatprep.subr.mxu0 0.0
        %3386 = vmatpush1.msra.mxu0 0.0
        %3387 = vmatprep.subr.mxu0 0.0
        %3388 = vmatpush1.msra.mxu0 0.0
        %3389 = vmatprep.subr.mxu0 0.0
        %3390 = vmatpush1.msra.mxu0 0.0
        %3391 = vmatprep.subr.mxu0 0.0
        %3392 = vmatpush1.msra.mxu0 0.0
        %3393 = vmatprep.subr.mxu0 0.0
        %3394 = vmatpush1.msra.mxu0 0.0
        %3395 = vmatprep.subr.mxu0 0.0
        %3396 = vmatpush1.msra.mxu0 0.0
        %3397 = vmatprep.subr.mxu0 0.0
        %3398 = vmatpush1.msra.mxu0 0.0
        %3399 = vmatprep.subr.mxu0 0.0
        %3400 = vmatpush1.msra.mxu0 0.0
        %3401 = vmatprep.subr.mxu0 0.0
        %3402 = vmatpush1.msra.mxu0 0.0
        %3403 = vmatprep.subr.mxu0 0.0
        %3404 = vmatpush1.msra.mxu0 0.0
        %3405 = vmatprep.subr.mxu0 0.0
        %3406 = vmatpush1.msra.mxu0 0.0
        %3407 = vmatprep.subr.mxu0 0.0
        %3408 = vmatpush1.msra.mxu0 0.0
        %3409 = vmatprep.subr.mxu0 0.0
        %3410 = vmatpush1.msra.mxu0 0.0
        %3411 = vmatprep.subr.mxu0 0.0
        %3412 = vmatpush1.msra.mxu0 0.0
        %3413 = vmatprep.subr.mxu0 0.0
        %3414 = vmatpush1.msra.mxu0 0.0
        %3415 = vmatprep.subr.mxu0 0.0
        %3416 = vmatpush1.msra.mxu0 0.0
        %3417 = vmatprep.subr.mxu0 0.0
        %3418 = vmatpush1.msra.mxu0 0.0
        %3419 = vmatprep.subr.mxu0 0.0
        %3420 = vmatpush1.msra.mxu0 0.0
        %3421 = vmatprep.subr.mxu0 0.0
        %3422 = vmatpush1.msra.mxu0 0.0
        %3423 = vmatprep.subr.mxu0 0.0
        %3424 = vmatpush1.msra.mxu0 0.0
        %3425 = vmatprep.subr.mxu0 0.0
        %3426 = vmatpush1.msra.mxu0 0.0
        %3427 = vmatprep.subr.mxu0 0.0
        %3428 = vmatpush1.msra.mxu0 0.0
        %3429 = vmatprep.mubr.f32.mxu0 0.0
        %3430 = vmatmul.mubr.f32.gmra.mrb[0].mxu0 %v462
        %v3431 = vpop.f32.mrb[0].mxu0
        %v3432 = vadd.f32 0.0, %v3431
        %v3433 = vpop.f32.mrb[0].mxu0
        %v3434 = vadd.f32 0.0, %v3433
        %3435 = vmatprep.mubr.f32.mxu0 0.0
        %3436 = vmatmul.mubr.f32.gmra.mrb[0].mxu0 %v465
        %v3437 = vpop.f32.mrb[0].mxu0
        %v3438 = vadd.f32 0.0, %v3437
        %v3439 = vpop.f32.mrb[0].mxu0
        %v3440 = vadd.f32 0.0, %v3439
        %3441 = vdwg.mxu0
        %s3442 = scalar_lea.vmem [#allocation2], 6144
        %v3443 = vld [vmem:[%s3442] sm:$0xff]
        %v3444 = vld [vmem:[%s3442 + $0x8] sm:$0xff]
        %v3445 = vld [vmem:[%s3442 + $0x10] sm:$0xff]
        %v3446 = vld [vmem:[%s3442 + $0x18] sm:$0xff]
        %v3447 = vld [vmem:[%s3442 + $0x20] sm:$0xff]
        %v3448 = vld [vmem:[%s3442 + $0x28] sm:$0xff]
        %v3449 = vld [vmem:[%s3442 + $0x30] sm:$0xff]
        %v3450 = vld [vmem:[%s3442 + $0x38] sm:$0xff]
        %v3451 = vld [vmem:[%s3442 + $0x40] sm:$0xff]
        %v3452 = vld [vmem:[%s3442 + $0x48] sm:$0xff]
        %v3453 = vld [vmem:[%s3442 + $0x50] sm:$0xff]
        %v3454 = vld [vmem:[%s3442 + $0x58] sm:$0xff]
        %v3455 = vld [vmem:[%s3442 + $0x60] sm:$0xff]
        %v3456 = vld [vmem:[%s3442 + $0x68] sm:$0xff]
        %v3457 = vld [vmem:[%s3442 + $0x70] sm:$0xff]
        %v3458 = vld [vmem:[%s3442 + $0x78] sm:$0xff]
        %v3459 = vld [vmem:[%s3442 + $0x80] sm:$0xff]
        %v3460 = vld [vmem:[%s3442 + $0x88] sm:$0xff]
        %v3461 = vld [vmem:[%s3442 + $0x90] sm:$0xff]
        %v3462 = vld [vmem:[%s3442 + $0x98] sm:$0xff]
        %v3463 = vld [vmem:[%s3442 + $0xa0] sm:$0xff]
        %v3464 = vld [vmem:[%s3442 + $0xa8] sm:$0xff]
        %v3465 = vld [vmem:[%s3442 + $0xb0] sm:$0xff]
        %v3466 = vld [vmem:[%s3442 + $0xb8] sm:$0xff]
        %v3467 = vld [vmem:[%s3442 + $0xc0] sm:$0xff]
        %v3468 = vld [vmem:[%s3442 + $0xc8] sm:$0xff]
        %v3469 = vld [vmem:[%s3442 + $0xd0] sm:$0xff]
        %v3470 = vld [vmem:[%s3442 + $0xd8] sm:$0xff]
        %v3471 = vld [vmem:[%s3442 + $0xe0] sm:$0xff]
        %v3472 = vld [vmem:[%s3442 + $0xe8] sm:$0xff]
        %v3473 = vld [vmem:[%s3442 + $0xf0] sm:$0xff]
        %v3474 = vld [vmem:[%s3442 + $0xf8] sm:$0xff]
        %v3475 = vld [vmem:[%s3442 + $0x100] sm:$0xff]
        %v3476 = vld [vmem:[%s3442 + $0x108] sm:$0xff]
        %v3477 = vld [vmem:[%s3442 + $0x110] sm:$0xff]
        %v3478 = vld [vmem:[%s3442 + $0x118] sm:$0xff]
        %v3479 = vld [vmem:[%s3442 + $0x120] sm:$0xff]
        %v3480 = vld [vmem:[%s3442 + $0x128] sm:$0xff]
        %v3481 = vld [vmem:[%s3442 + $0x130] sm:$0xff]
        %v3482 = vld [vmem:[%s3442 + $0x138] sm:$0xff]
        %v3483 = vld [vmem:[%s3442 + $0x140] sm:$0xff]
        %v3484 = vld [vmem:[%s3442 + $0x148] sm:$0xff]
        %v3485 = vld [vmem:[%s3442 + $0x150] sm:$0xff]
        %v3486 = vld [vmem:[%s3442 + $0x158] sm:$0xff]
        %v3487 = vld [vmem:[%s3442 + $0x160] sm:$0xff]
        %v3488 = vld [vmem:[%s3442 + $0x168] sm:$0xff]
        %v3489 = vld [vmem:[%s3442 + $0x170] sm:$0xff]
        %v3490 = vld [vmem:[%s3442 + $0x178] sm:$0xff]
        %v3491 = vld [vmem:[%s3442 + $0x180] sm:$0xff]
        %v3492 = vld [vmem:[%s3442 + $0x188] sm:$0xff]
        %v3493 = vld [vmem:[%s3442 + $0x190] sm:$0xff]
        %v3494 = vld [vmem:[%s3442 + $0x198] sm:$0xff]
        %v3495 = vld [vmem:[%s3442 + $0x1a0] sm:$0xff]
        %v3496 = vld [vmem:[%s3442 + $0x1a8] sm:$0xff]
        %v3497 = vld [vmem:[%s3442 + $0x1b0] sm:$0xff]
        %v3498 = vld [vmem:[%s3442 + $0x1b8] sm:$0xff]
        %v3499 = vld [vmem:[%s3442 + $0x1c0] sm:$0xff]
        %v3500 = vld [vmem:[%s3442 + $0x1c8] sm:$0xff]
        %v3501 = vld [vmem:[%s3442 + $0x1d0] sm:$0xff]
        %v3502 = vld [vmem:[%s3442 + $0x1d8] sm:$0xff]
        %v3503 = vld [vmem:[%s3442 + $0x1e0] sm:$0xff]
        %v3504 = vld [vmem:[%s3442 + $0x1e8] sm:$0xff]
        %v3505 = vld [vmem:[%s3442 + $0x1f0] sm:$0xff]
        %v3506 = vld [vmem:[%s3442 + $0x1f8] sm:$0xff]
        %s3507 = scalar_lea.vmem [#allocation2], 6656
        %v3508 = vld [vmem:[%s3507] sm:$0xff]
        %v3509 = vld [vmem:[%s3507 + $0x8] sm:$0xff]
        %v3510 = vld [vmem:[%s3507 + $0x10] sm:$0xff]
        %v3511 = vld [vmem:[%s3507 + $0x18] sm:$0xff]
        %v3512 = vld [vmem:[%s3507 + $0x20] sm:$0xff]
        %v3513 = vld [vmem:[%s3507 + $0x28] sm:$0xff]
        %v3514 = vld [vmem:[%s3507 + $0x30] sm:$0xff]
        %v3515 = vld [vmem:[%s3507 + $0x38] sm:$0xff]
        %v3516 = vld [vmem:[%s3507 + $0x40] sm:$0xff]
        %v3517 = vld [vmem:[%s3507 + $0x48] sm:$0xff]
        %v3518 = vld [vmem:[%s3507 + $0x50] sm:$0xff]
        %v3519 = vld [vmem:[%s3507 + $0x58] sm:$0xff]
        %v3520 = vld [vmem:[%s3507 + $0x60] sm:$0xff]
        %v3521 = vld [vmem:[%s3507 + $0x68] sm:$0xff]
        %v3522 = vld [vmem:[%s3507 + $0x70] sm:$0xff]
        %v3523 = vld [vmem:[%s3507 + $0x78] sm:$0xff]
        %v3524 = vld [vmem:[%s3507 + $0x80] sm:$0xff]
        %v3525 = vld [vmem:[%s3507 + $0x88] sm:$0xff]
        %v3526 = vld [vmem:[%s3507 + $0x90] sm:$0xff]
        %v3527 = vld [vmem:[%s3507 + $0x98] sm:$0xff]
        %v3528 = vld [vmem:[%s3507 + $0xa0] sm:$0xff]
        %v3529 = vld [vmem:[%s3507 + $0xa8] sm:$0xff]
        %v3530 = vld [vmem:[%s3507 + $0xb0] sm:$0xff]
        %v3531 = vld [vmem:[%s3507 + $0xb8] sm:$0xff]
        %v3532 = vld [vmem:[%s3507 + $0xc0] sm:$0xff]
        %v3533 = vld [vmem:[%s3507 + $0xc8] sm:$0xff]
        %v3534 = vld [vmem:[%s3507 + $0xd0] sm:$0xff]
        %v3535 = vld [vmem:[%s3507 + $0xd8] sm:$0xff]
        %v3536 = vld [vmem:[%s3507 + $0xe0] sm:$0xff]
        %v3537 = vld [vmem:[%s3507 + $0xe8] sm:$0xff]
        %v3538 = vld [vmem:[%s3507 + $0xf0] sm:$0xff]
        %v3539 = vld [vmem:[%s3507 + $0xf8] sm:$0xff]
        %v3540 = vld [vmem:[%s3507 + $0x100] sm:$0xff]
        %v3541 = vld [vmem:[%s3507 + $0x108] sm:$0xff]
        %v3542 = vld [vmem:[%s3507 + $0x110] sm:$0xff]
        %v3543 = vld [vmem:[%s3507 + $0x118] sm:$0xff]
        %v3544 = vld [vmem:[%s3507 + $0x120] sm:$0xff]
        %v3545 = vld [vmem:[%s3507 + $0x128] sm:$0xff]
        %v3546 = vld [vmem:[%s3507 + $0x130] sm:$0xff]
        %v3547 = vld [vmem:[%s3507 + $0x138] sm:$0xff]
        %v3548 = vld [vmem:[%s3507 + $0x140] sm:$0xff]
        %v3549 = vld [vmem:[%s3507 + $0x148] sm:$0xff]
        %v3550 = vld [vmem:[%s3507 + $0x150] sm:$0xff]
        %v3551 = vld [vmem:[%s3507 + $0x158] sm:$0xff]
        %v3552 = vld [vmem:[%s3507 + $0x160] sm:$0xff]
        %v3553 = vld [vmem:[%s3507 + $0x168] sm:$0xff]
        %v3554 = vld [vmem:[%s3507 + $0x170] sm:$0xff]
        %v3555 = vld [vmem:[%s3507 + $0x178] sm:$0xff]
        %v3556 = vld [vmem:[%s3507 + $0x180] sm:$0xff]
        %v3557 = vld [vmem:[%s3507 + $0x188] sm:$0xff]
        %v3558 = vld [vmem:[%s3507 + $0x190] sm:$0xff]
        %v3559 = vld [vmem:[%s3507 + $0x198] sm:$0xff]
        %v3560 = vld [vmem:[%s3507 + $0x1a0] sm:$0xff]
        %v3561 = vld [vmem:[%s3507 + $0x1a8] sm:$0xff]
        %v3562 = vld [vmem:[%s3507 + $0x1b0] sm:$0xff]
        %v3563 = vld [vmem:[%s3507 + $0x1b8] sm:$0xff]
        %v3564 = vld [vmem:[%s3507 + $0x1c0] sm:$0xff]
        %v3565 = vld [vmem:[%s3507 + $0x1c8] sm:$0xff]
        %v3566 = vld [vmem:[%s3507 + $0x1d0] sm:$0xff]
        %v3567 = vld [vmem:[%s3507 + $0x1d8] sm:$0xff]
        %v3568 = vld [vmem:[%s3507 + $0x1e0] sm:$0xff]
        %v3569 = vld [vmem:[%s3507 + $0x1e8] sm:$0xff]
        %v3570 = vld [vmem:[%s3507 + $0x1f0] sm:$0xff]
        %v3571 = vld [vmem:[%s3507 + $0x1f8] sm:$0xff]
        %3572 = vmatprep.subr.mxu0 %v3509
        %3573 = vmatpush1.msra.mxu0 %v3508
        %3574 = vmatprep.subr.mxu0 %v3511
        %3575 = vmatpush1.msra.mxu0 %v3510
        %3576 = vmatprep.subr.mxu0 %v3513
        %3577 = vmatpush1.msra.mxu0 %v3512
        %3578 = vmatprep.subr.mxu0 %v3515
        %3579 = vmatpush1.msra.mxu0 %v3514
        %3580 = vmatprep.subr.mxu0 %v3517
        %3581 = vmatpush1.msra.mxu0 %v3516
        %3582 = vmatprep.subr.mxu0 %v3519
        %3583 = vmatpush1.msra.mxu0 %v3518
        %3584 = vmatprep.subr.mxu0 %v3521
        %3585 = vmatpush1.msra.mxu0 %v3520
        %3586 = vmatprep.subr.mxu0 %v3523
        %3587 = vmatpush1.msra.mxu0 %v3522
        %3588 = vmatprep.subr.mxu0 %v3525
        %3589 = vmatpush1.msra.mxu0 %v3524
        %3590 = vmatprep.subr.mxu0 %v3527
        %3591 = vmatpush1.msra.mxu0 %v3526
        %3592 = vmatprep.subr.mxu0 %v3529
        %3593 = vmatpush1.msra.mxu0 %v3528
        %3594 = vmatprep.subr.mxu0 %v3531
        %3595 = vmatpush1.msra.mxu0 %v3530
        %3596 = vmatprep.subr.mxu0 %v3533
        %3597 = vmatpush1.msra.mxu0 %v3532
        %3598 = vmatprep.subr.mxu0 %v3535
        %3599 = vmatpush1.msra.mxu0 %v3534
        %3600 = vmatprep.subr.mxu0 %v3537
        %3601 = vmatpush1.msra.mxu0 %v3536
        %3602 = vmatprep.subr.mxu0 %v3539
        %3603 = vmatpush1.msra.mxu0 %v3538
        %3604 = vmatprep.subr.mxu0 %v3541
        %3605 = vmatpush1.msra.mxu0 %v3540
        %3606 = vmatprep.subr.mxu0 %v3543
        %3607 = vmatpush1.msra.mxu0 %v3542
        %3608 = vmatprep.subr.mxu0 %v3545
        %3609 = vmatpush1.msra.mxu0 %v3544
        %3610 = vmatprep.subr.mxu0 %v3547
        %3611 = vmatpush1.msra.mxu0 %v3546
        %3612 = vmatprep.subr.mxu0 %v3549
        %3613 = vmatpush1.msra.mxu0 %v3548
        %3614 = vmatprep.subr.mxu0 %v3551
        %3615 = vmatpush1.msra.mxu0 %v3550
        %3616 = vmatprep.subr.mxu0 %v3553
        %3617 = vmatpush1.msra.mxu0 %v3552
        %3618 = vmatprep.subr.mxu0 %v3555
        %3619 = vmatpush1.msra.mxu0 %v3554
        %3620 = vmatprep.subr.mxu0 %v3557
        %3621 = vmatpush1.msra.mxu0 %v3556
        %3622 = vmatprep.subr.mxu0 %v3559
        %3623 = vmatpush1.msra.mxu0 %v3558
        %3624 = vmatprep.subr.mxu0 %v3561
        %3625 = vmatpush1.msra.mxu0 %v3560
        %3626 = vmatprep.subr.mxu0 %v3563
        %3627 = vmatpush1.msra.mxu0 %v3562
        %3628 = vmatprep.subr.mxu0 %v3565
        %3629 = vmatpush1.msra.mxu0 %v3564
        %3630 = vmatprep.subr.mxu0 %v3567
        %3631 = vmatpush1.msra.mxu0 %v3566
        %3632 = vmatprep.subr.mxu0 %v3569
        %3633 = vmatpush1.msra.mxu0 %v3568
        %3634 = vmatprep.subr.mxu0 %v3571
        %3635 = vmatpush1.msra.mxu0 %v3570
        %3636 = vmatprep.mubr.f32.mxu0 %v3285
        %3637 = vmatmul.mubr.f32.gmra.mrb[0].mxu0 %v3284
        %v3638 = vpop.f32.mrb[0].mxu0
        %v3639 = vadd.f32 0.0, %v3638
        %v3640 = vpop.f32.mrb[0].mxu0
        %v3641 = vadd.f32 0.0, %v3640
        %3642 = vmatprep.mubr.f32.mxu0 %v3287
        %3643 = vmatmul.mubr.f32.gmra.mrb[0].mxu0 %v3286
        %v3644 = vpop.f32.mrb[0].mxu0
        %v3645 = vadd.f32 0.0, %v3644
        %v3646 = vpop.f32.mrb[0].mxu0
        %v3647 = vadd.f32 0.0, %v3646
        %3648 = vdwg.mxu0
        %3649 = vmatprep.subr.mxu0 %v3444
        %3650 = vmatpush1.msra.mxu0 %v3443
        %3651 = vmatprep.subr.mxu0 %v3446
        %3652 = vmatpush1.msra.mxu0 %v3445
        %3653 = vmatprep.subr.mxu0 %v3448
        %3654 = vmatpush1.msra.mxu0 %v3447
        %3655 = vmatprep.subr.mxu0 %v3450
        %3656 = vmatpush1.msra.mxu0 %v3449
        %3657 = vmatprep.subr.mxu0 %v3452
        %3658 = vmatpush1.msra.mxu0 %v3451
        %3659 = vmatprep.subr.mxu0 %v3454
        %3660 = vmatpush1.msra.mxu0 %v3453
        %3661 = vmatprep.subr.mxu0 %v3456
        %3662 = vmatpush1.msra.mxu0 %v3455
        %3663 = vmatprep.subr.mxu0 %v3458
        %3664 = vmatpush1.msra.mxu0 %v3457
        %3665 = vmatprep.subr.mxu0 %v3460
        %3666 = vmatpush1.msra.mxu0 %v3459
        %3667 = vmatprep.subr.mxu0 %v3462
        %3668 = vmatpush1.msra.mxu0 %v3461
        %3669 = vmatprep.subr.mxu0 %v3464
        %3670 = vmatpush1.msra.mxu0 %v3463
        %3671 = vmatprep.subr.mxu0 %v3466
        %3672 = vmatpush1.msra.mxu0 %v3465
        %3673 = vmatprep.subr.mxu0 %v3468
        %3674 = vmatpush1.msra.mxu0 %v3467
        %3675 = vmatprep.subr.mxu0 %v3470
        %3676 = vmatpush1.msra.mxu0 %v3469
        %3677 = vmatprep.subr.mxu0 %v3472
        %3678 = vmatpush1.msra.mxu0 %v3471
        %3679 = vmatprep.subr.mxu0 %v3474
        %3680 = vmatpush1.msra.mxu0 %v3473
        %3681 = vmatprep.subr.mxu0 %v3476
        %3682 = vmatpush1.msra.mxu0 %v3475
        %3683 = vmatprep.subr.mxu0 %v3478
        %3684 = vmatpush1.msra.mxu0 %v3477
        %3685 = vmatprep.subr.mxu0 %v3480
        %3686 = vmatpush1.msra.mxu0 %v3479
        %3687 = vmatprep.subr.mxu0 %v3482
        %3688 = vmatpush1.msra.mxu0 %v3481
        %3689 = vmatprep.subr.mxu0 %v3484
        %3690 = vmatpush1.msra.mxu0 %v3483
        %3691 = vmatprep.subr.mxu0 %v3486
        %3692 = vmatpush1.msra.mxu0 %v3485
        %3693 = vmatprep.subr.mxu0 %v3488
        %3694 = vmatpush1.msra.mxu0 %v3487
        %3695 = vmatprep.subr.mxu0 %v3490
        %3696 = vmatpush1.msra.mxu0 %v3489
        %3697 = vmatprep.subr.mxu0 %v3492
        %3698 = vmatpush1.msra.mxu0 %v3491
        %3699 = vmatprep.subr.mxu0 %v3494
        %3700 = vmatpush1.msra.mxu0 %v3493
        %3701 = vmatprep.subr.mxu0 %v3496
        %3702 = vmatpush1.msra.mxu0 %v3495
        %3703 = vmatprep.subr.mxu0 %v3498
        %3704 = vmatpush1.msra.mxu0 %v3497
        %3705 = vmatprep.subr.mxu0 %v3500
        %3706 = vmatpush1.msra.mxu0 %v3499
        %3707 = vmatprep.subr.mxu0 %v3502
        %3708 = vmatpush1.msra.mxu0 %v3501
        %3709 = vmatprep.subr.mxu0 %v3504
        %3710 = vmatpush1.msra.mxu0 %v3503
        %3711 = vmatprep.subr.mxu0 %v3506
        %3712 = vmatpush1.msra.mxu0 %v3505
        %3713 = vmatprep.mubr.f32.mxu0 %v3357
        %3714 = vmatmul.mubr.f32.gmra.mrb[0].mxu0 %v3355
        %v3715 = vpop.f32.mrb[0].mxu0
        %v3716 = vadd.f32 %v3639, %v3715
        %v3717 = vpop.f32.mrb[0].mxu0
        %v3718 = vadd.f32 %v3641, %v3717
        %3719 = vmatprep.mubr.f32.mxu0 %v3363
        %3720 = vmatmul.mubr.f32.gmra.mrb[0].mxu0 %v3361
        %v3721 = vpop.f32.mrb[0].mxu0
        %v3722 = vadd.f32 %v3645, %v3721
        %v3723 = vpop.f32.mrb[0].mxu0
        %v3724 = vadd.f32 %v3647, %v3723
        %3725 = vdwg.mxu0
        %s3726 = scalar_lea.vmem [#allocation2], 7168
        %v3727 = vld [vmem:[%s3726] sm:$0xff]
        %v3728 = vld [vmem:[%s3726 + $0x8] sm:$0xff]
        %v3729 = vld [vmem:[%s3726 + $0x10] sm:$0xff]
        %v3730 = vld [vmem:[%s3726 + $0x18] sm:$0xff]
        %v3731 = vld [vmem:[%s3726 + $0x20] sm:$0xff]
        %v3732 = vld [vmem:[%s3726 + $0x28] sm:$0xff]
        %v3733 = vld [vmem:[%s3726 + $0x30] sm:$0xff]
        %v3734 = vld [vmem:[%s3726 + $0x38] sm:$0xff]
        %v3735 = vld [vmem:[%s3726 + $0x40] sm:$0xff]
        %v3736 = vld [vmem:[%s3726 + $0x48] sm:$0xff]
        %v3737 = vld [vmem:[%s3726 + $0x50] sm:$0xff]
        %v3738 = vld [vmem:[%s3726 + $0x58] sm:$0xff]
        %v3739 = vld [vmem:[%s3726 + $0x60] sm:$0xff]
        %v3740 = vld [vmem:[%s3726 + $0x68] sm:$0xff]
        %v3741 = vld [vmem:[%s3726 + $0x70] sm:$0xff]
        %v3742 = vld [vmem:[%s3726 + $0x78] sm:$0xff]
        %v3743 = vld [vmem:[%s3726 + $0x80] sm:$0xff]
        %v3744 = vld [vmem:[%s3726 + $0x88] sm:$0xff]
        %v3745 = vld [vmem:[%s3726 + $0x90] sm:$0xff]
        %v3746 = vld [vmem:[%s3726 + $0x98] sm:$0xff]
        %v3747 = vld [vmem:[%s3726 + $0xa0] sm:$0xff]
        %v3748 = vld [vmem:[%s3726 + $0xa8] sm:$0xff]
        %v3749 = vld [vmem:[%s3726 + $0xb0] sm:$0xff]
        %v3750 = vld [vmem:[%s3726 + $0xb8] sm:$0xff]
        %v3751 = vld [vmem:[%s3726 + $0xc0] sm:$0xff]
        %v3752 = vld [vmem:[%s3726 + $0xc8] sm:$0xff]
        %v3753 = vld [vmem:[%s3726 + $0xd0] sm:$0xff]
        %v3754 = vld [vmem:[%s3726 + $0xd8] sm:$0xff]
        %v3755 = vld [vmem:[%s3726 + $0xe0] sm:$0xff]
        %v3756 = vld [vmem:[%s3726 + $0xe8] sm:$0xff]
        %v3757 = vld [vmem:[%s3726 + $0xf0] sm:$0xff]
        %v3758 = vld [vmem:[%s3726 + $0xf8] sm:$0xff]
        %v3759 = vld [vmem:[%s3726 + $0x100] sm:$0xff]
        %v3760 = vld [vmem:[%s3726 + $0x108] sm:$0xff]
        %v3761 = vld [vmem:[%s3726 + $0x110] sm:$0xff]
        %v3762 = vld [vmem:[%s3726 + $0x118] sm:$0xff]
        %v3763 = vld [vmem:[%s3726 + $0x120] sm:$0xff]
        %v3764 = vld [vmem:[%s3726 + $0x128] sm:$0xff]
        %v3765 = vld [vmem:[%s3726 + $0x130] sm:$0xff]
        %v3766 = vld [vmem:[%s3726 + $0x138] sm:$0xff]
        %v3767 = vld [vmem:[%s3726 + $0x140] sm:$0xff]
        %v3768 = vld [vmem:[%s3726 + $0x148] sm:$0xff]
        %v3769 = vld [vmem:[%s3726 + $0x150] sm:$0xff]
        %v3770 = vld [vmem:[%s3726 + $0x158] sm:$0xff]
        %v3771 = vld [vmem:[%s3726 + $0x160] sm:$0xff]
        %v3772 = vld [vmem:[%s3726 + $0x168] sm:$0xff]
        %v3773 = vld [vmem:[%s3726 + $0x170] sm:$0xff]
        %v3774 = vld [vmem:[%s3726 + $0x178] sm:$0xff]
        %v3775 = vld [vmem:[%s3726 + $0x180] sm:$0xff]
        %v3776 = vld [vmem:[%s3726 + $0x188] sm:$0xff]
        %v3777 = vld [vmem:[%s3726 + $0x190] sm:$0xff]
        %v3778 = vld [vmem:[%s3726 + $0x198] sm:$0xff]
        %v3779 = vld [vmem:[%s3726 + $0x1a0] sm:$0xff]
        %v3780 = vld [vmem:[%s3726 + $0x1a8] sm:$0xff]
        %v3781 = vld [vmem:[%s3726 + $0x1b0] sm:$0xff]
        %v3782 = vld [vmem:[%s3726 + $0x1b8] sm:$0xff]
        %v3783 = vld [vmem:[%s3726 + $0x1c0] sm:$0xff]
        %v3784 = vld [vmem:[%s3726 + $0x1c8] sm:$0xff]
        %v3785 = vld [vmem:[%s3726 + $0x1d0] sm:$0xff]
        %v3786 = vld [vmem:[%s3726 + $0x1d8] sm:$0xff]
        %v3787 = vld [vmem:[%s3726 + $0x1e0] sm:$0xff]
        %v3788 = vld [vmem:[%s3726 + $0x1e8] sm:$0xff]
        %v3789 = vld [vmem:[%s3726 + $0x1f0] sm:$0xff]
        %v3790 = vld [vmem:[%s3726 + $0x1f8] sm:$0xff]
        %3791 = vmatprep.subr.mxu0 %v3728
        %3792 = vmatpush1.msra.mxu0 %v3727
        %3793 = vmatprep.subr.mxu0 %v3730
        %3794 = vmatpush1.msra.mxu0 %v3729
        %3795 = vmatprep.subr.mxu0 %v3732
        %3796 = vmatpush1.msra.mxu0 %v3731
        %3797 = vmatprep.subr.mxu0 %v3734
        %3798 = vmatpush1.msra.mxu0 %v3733
        %3799 = vmatprep.subr.mxu0 %v3736
        %3800 = vmatpush1.msra.mxu0 %v3735
        %3801 = vmatprep.subr.mxu0 %v3738
        %3802 = vmatpush1.msra.mxu0 %v3737
        %3803 = vmatprep.subr.mxu0 %v3740
        %3804 = vmatpush1.msra.mxu0 %v3739
        %3805 = vmatprep.subr.mxu0 %v3742
        %3806 = vmatpush1.msra.mxu0 %v3741
        %3807 = vmatprep.subr.mxu0 %v3744
        %3808 = vmatpush1.msra.mxu0 %v3743
        %3809 = vmatprep.subr.mxu0 %v3746
        %3810 = vmatpush1.msra.mxu0 %v3745
        %3811 = vmatprep.subr.mxu0 %v3748
        %3812 = vmatpush1.msra.mxu0 %v3747
        %3813 = vmatprep.subr.mxu0 %v3750
        %3814 = vmatpush1.msra.mxu0 %v3749
        %3815 = vmatprep.subr.mxu0 %v3752
        %3816 = vmatpush1.msra.mxu0 %v3751
        %3817 = vmatprep.subr.mxu0 %v3754
        %3818 = vmatpush1.msra.mxu0 %v3753
        %3819 = vmatprep.subr.mxu0 %v3756
        %3820 = vmatpush1.msra.mxu0 %v3755
        %3821 = vmatprep.subr.mxu0 %v3758
        %3822 = vmatpush1.msra.mxu0 %v3757
        %3823 = vmatprep.subr.mxu0 %v3760
        %3824 = vmatpush1.msra.mxu0 %v3759
        %3825 = vmatprep.subr.mxu0 %v3762
        %3826 = vmatpush1.msra.mxu0 %v3761
        %3827 = vmatprep.subr.mxu0 %v3764
        %3828 = vmatpush1.msra.mxu0 %v3763
        %3829 = vmatprep.subr.mxu0 %v3766
        %3830 = vmatpush1.msra.mxu0 %v3765
        %3831 = vmatprep.subr.mxu0 %v3768
        %3832 = vmatpush1.msra.mxu0 %v3767
        %3833 = vmatprep.subr.mxu0 %v3770
        %3834 = vmatpush1.msra.mxu0 %v3769
        %3835 = vmatprep.subr.mxu0 %v3772
        %3836 = vmatpush1.msra.mxu0 %v3771
        %3837 = vmatprep.subr.mxu0 %v3774
        %3838 = vmatpush1.msra.mxu0 %v3773
        %3839 = vmatprep.subr.mxu0 %v3776
        %3840 = vmatpush1.msra.mxu0 %v3775
        %3841 = vmatprep.subr.mxu0 %v3778
        %3842 = vmatpush1.msra.mxu0 %v3777
        %3843 = vmatprep.subr.mxu0 %v3780
        %3844 = vmatpush1.msra.mxu0 %v3779
        %3845 = vmatprep.subr.mxu0 %v3782
        %3846 = vmatpush1.msra.mxu0 %v3781
        %3847 = vmatprep.subr.mxu0 %v3784
        %3848 = vmatpush1.msra.mxu0 %v3783
        %3849 = vmatprep.subr.mxu0 %v3786
        %3850 = vmatpush1.msra.mxu0 %v3785
        %3851 = vmatprep.subr.mxu0 %v3788
        %3852 = vmatpush1.msra.mxu0 %v3787
        %3853 = vmatprep.subr.mxu0 %v3790
        %3854 = vmatpush1.msra.mxu0 %v3789
        %3855 = vmatprep.mubr.f32.mxu0 %v3434
        %3856 = vmatmul.mubr.f32.gmra.mrb[0].mxu0 %v3432
        %v3857 = vpop.f32.mrb[0].mxu0
        %v3858 = vadd.f32 0.0, %v3857
        %v3859 = vpop.f32.mrb[0].mxu0
        %v3860 = vadd.f32 0.0, %v3859
        %3861 = vmatprep.mubr.f32.mxu0 %v3440
        %3862 = vmatmul.mubr.f32.gmra.mrb[0].mxu0 %v3438
        %v3863 = vpop.f32.mrb[0].mxu0
        %v3864 = vadd.f32 0.0, %v3863
        %v3865 = vpop.f32.mrb[0].mxu0
        %v3866 = vadd.f32 0.0, %v3865
        %3867 = vdwg.mxu0
        %v3868 = vadd.f32 %v3716, %v3858
        %v3869 = vadd.f32 %v3718, %v3860
        %v3870 = vadd.f32 %v3722, %v3864
        %v3871 = vadd.f32 %v3724, %v3866
        %s3872 = scalar_lea.vmem [#allocation4], 8
        %v3873 = vld [vmem:[%s3872] sm:$0x3]
        %v3875 = vlaneseq
        %v3876 = vshrl.u32 %v3875, 7
        %v3877 = vsub.s32 0, %v3876
        %v3878 = vrot.slane %v3873, %v3877
        %v3879 = vlaneseq
        %v3880 = vshrl.u32 %v3879, 7
        %v3881 = vsub.s32 1, %v3880
        %v3882 = vrot.slane %v3873, %v3881
        %v3885 = vadd.f32 %v3868, %v3878
        %v3886 = vadd.f32 %v3869, %v3882
        %v3887 = vadd.f32 %v3870, %v3878
        %v3888 = vadd.f32 %v3871, %v3882
        %v3889 = vadd.f32 %v3885, %v352
        %v3890 = vadd.f32 %v3886, %v353
        %v3891 = vadd.f32 %v3887, %v354
        %v3892 = vadd.f32 %v3888, %v355
        %3893 = vst [vmem:[%s351] sm:$0xff] %v3889
        %3894 = vst [vmem:[%s351 + $0x8] sm:$0xff] %v3890
        %3895 = vst [vmem:[%s351 + $0x10] sm:$0xff] %v3891
        %3896 = vst [vmem:[%s351 + $0x18] sm:$0xff] %v3892
        %p3897 = scmp.lt.s32.totalorder %s21, 1
        %s3898 = scalar_select %p3897, %s21, 1
        %s3899 = smul.addr %s3898, 4
        %s3900 = smul.addr %s3899, 8
        %s3901 = scalar_lea.vmem %s7, %s3900
        // Predicated region
        $region69: #{residual_group_forward.1} parent=47 // pred_check
          %p3902 = pneg %p191
        $region70: #{residual_group_forward.1} parent=47 // pred_check_branch
          %3904 = sbr.rel (%p3902) target = $region72
        $region71: #{residual_group_forward.1} parent=47 // pred_region
          _
        $region72: #{residual_group_forward.1} parent=47 // pred_fallthru
          _
      $region48: #{residual_group_forward.1} parent=5 // pred_fallthru
        _
      %p3905 = scmp.le.s32.totalorder 2, %s16
      // Predicated region
      $region73: #{residual_group_forward.1} parent=5 // pred_check
        %p3906 = pneg %p3905
      $region74: #{residual_group_forward.1} parent=5 // pred_check_branch
        %3908 = sbr.rel (%p3906) target = $region76
      $region75: #{residual_group_forward.1} parent=5 // pred_region
        %s3909 = ssub.s32 %s16, 2
        // Predicated region
        $region77: #{residual_group_forward.1} parent=75 // pred_check
          %p3910 = pneg %p197
        $region78: #{residual_group_forward.1} parent=75 // pred_check_branch
          %3912 = sbr.rel (%p3910) target = $region80
        $region79: #{residual_group_forward.1} parent=75 // pred_region
          %p3913 = scmp.lt.s32.totalorder %s22, 1
          %s3914 = scalar_select %p3913, %s22, 1
          %s3915 = smul.addr %s3914, 4
          %s3916 = smul.addr %s3915, 8
          %s3917 = scalar_lea.vmem %s7, %s3916
        $region80: #{residual_group_forward.1} parent=75 // pred_fallthru
          _
      $region76: #{residual_group_forward.1} parent=5 // pred_fallthru
        _
    $region6: #{residual_group_forward.1} parent=1 // loop_footer
      %s20 = sadd.s32 1, %s16
    $region7: #{residual_group_forward.1} parent=1 // loop_footer_branch
      %15 = sbr.rel target = $region3
    $region8: #{residual_group_forward.1} parent=1 // loop_exit
      _
    %3918 = vsyncpa [#allocation3], 1
    %s3919 = scalar_lea.sflag [#allocation3], 1
    %3920 = vsyncpa %s3919, 1
    %3921 = vsyncpa [#allocation5], 1
    %3922 = vsyncpa [#allocation8], 1

</llo_original>
